<compile_context>
chip_gen: v5e
topology: v5e:2x2
jax: 0.10.0
libtpu: 0.0.40
codegen_flags: <defaults>
</compile_context>

<pallas_src>
import functools

import jax
import jax.numpy as jnp
from jax import lax
from jax.experimental import pallas as pl
from jax.experimental.pallas import tpu as pltpu


_WEIGHT_ORDER = ("m1", "smallops", "pyr_b", "mc1", "u2", "u1",
                 "wpack", "ww", "bup")


def _const_map(ndim):
    zeros = (0,) * ndim
    return lambda n: zeros


# ---------------------------------------------------------------------------
# Single fused kernel: APN pyramid + mid + branch1 + epilogue + 8x upscale.
# ---------------------------------------------------------------------------
def lednet_decoder_forward(x, ops):
    """x: (N, in_ch, H, W) NCHW -> (N, out_ch, 8H, 8W). One pallas_call."""
    N, C, H, W = x.shape
    HW = H * W
    H1W1 = (H // 2) * (W // 2)
    H2W2 = (H // 4) * (W // 4)
    H3W3 = (H // 8) * (W // 8)
    Ho, Wo = 8 * H, 8 * W
    out_ch = ops["wpack"].shape[0]

    xf = x.reshape(N, 1, C * HW)          # free reshapes of contiguous NCHW
    xc = x.reshape(N, C, HW)
    weights = [ops[k] for k in _WEIGHT_ORDER]

    def kernel(xf_ref, xc_ref, m1_ref, small_ref, pyrb_ref, mc1_ref, u2_ref,
               u1_ref, wpack_ref, ww_ref, bup_ref, o_ref):
        relu = lambda v: jnp.maximum(v, 0.0)
        dot = functools.partial(jnp.dot, preferred_element_type=jnp.float32)

        xf_v = xf_ref[0]                  # (1, C*HW)   flat, lane-dense
        xc_v = xc_ref[0]                  # (C, HW)     channels-first

        # Unpack packed small operators / biases (static slices, no extra DMA).
        m2 = small_ref[0, :H1W1, :H2W2]
        m3a = small_ref[1, :H2W2, :H3W3]
        m3b = small_ref[2, :H3W3, :H3W3]
        mc2 = small_ref[3, :H2W2, :H2W2]
        u3 = small_ref[4, :H3W3, :H2W2]
        bd1, bc1 = pyrb_ref[0:1, :H1W1], pyrb_ref[5:6, :H1W1]
        bd2, bc2 = pyrb_ref[1:2, :H2W2], pyrb_ref[4:5, :H2W2]
        b3a, b3b = pyrb_ref[2:3, :H3W3], pyrb_ref[3:4, :H3W3]
        wmid = wpack_ref[:, 0:C]
        wbr = wpack_ref[:, C:2 * C]
        bmid = wpack_ref[:, 2 * C:2 * C + 1]
        bbr = wpack_ref[:, 2 * C + 1:2 * C + 2]

        # --- attention pyramid: 1-channel maps as lane-dense row vectors ----
        a1 = relu(dot(xf_v, m1_ref[...]) + bd1)             # (1, H1*W1)
        a2 = relu(dot(a1, m2) + bd2)                        # (1, H2*W2)
        a3 = relu(dot(a2, m3a) + b3a)                       # (1, H3*W3)
        a3 = relu(dot(a3, m3b) + b3b)                       # (1, H3*W3)
        att = relu(dot(a2, mc2) + bc2) + dot(a3, u3)        # (1, H2*W2)
        att = dot(att, u2_ref[...]) + relu(dot(a1, mc1_ref[...]) + bc1)
        att = dot(att, u1_ref[...])                         # (1, H*W)

        # --- mid (1x1 conv, channels-first) + global-pool branch1 -----------
        mid = relu(dot(wmid, xc_v) + bmid)                  # (out_ch, H*W)
        pooled = jnp.mean(xc_v, axis=1, keepdims=True)      # (C, 1)
        br = relu(dot(wbr, pooled) + bbr)                   # (out_ch, 1)
        y = att * mid + br                                  # (out_ch, H*W)

        # --- fused 8x bilinear upscale (align_corners=True), separable ------
        yw = dot(y, ww_ref[...])                            # (out_ch, H*Wo)
        # Re-stack the lane-aligned (out_ch, Wo) column blocks so the height
        # pass is one MXU matmul: Z[h*out_ch + c, :] = yw[c, h*Wo:(h+1)*Wo].
        z = jnp.concatenate(
            [yw[:, h * Wo:(h + 1) * Wo] for h in range(H)], axis=0)
        o_ref[0] = dot(bup_ref[...], z)                     # (out_ch*Ho, Wo)

    # Explicit VMEM budget from the real footprint (weights may be kept
    # double-buffered by the pipeliner), with headroom, below v7x's 64 MiB.
    block_bytes = 4 * (2 * C * HW + out_ch * Ho * Wo)
    weight_bytes = sum(int(a.size) * a.dtype.itemsize for a in weights)
    vmem_limit = min(2 * (weight_bytes + block_bytes) + (16 << 20), 48 << 20)

    out = pl.pallas_call(
        kernel,
        out_shape=jax.ShapeDtypeStruct((N, out_ch * Ho, Wo), jnp.float32),
        grid=(N,),
        in_specs=[pl.BlockSpec((1, 1, C * HW), lambda n: (n, 0, 0)),
                  pl.BlockSpec((1, C, HW), lambda n: (n, 0, 0))]
                 + [pl.BlockSpec(a.shape, _const_map(a.ndim)) for a in weights],
        out_specs=pl.BlockSpec((1, out_ch * Ho, Wo), lambda n: (n, 0, 0)),
        compiler_params=pltpu.CompilerParams(
            dimension_semantics=("parallel",),
            vmem_limit_bytes=vmem_limit),
    )(xf, xc, *weights)
    return out.reshape(N, out_ch, Ho, Wo)    # contiguous: free reshape


# ---------------------------------------------------------------------------
# Parameter / operator preparation (runs once, plain JAX -- weight preproc).
# ---------------------------------------------------------------------------
def interp_matrix(out_size, in_size):
    """Bilinear (align_corners=True) 1-D interpolation matrix (out, in)."""
    if in_size == 1:
        return jnp.ones((out_size, 1), jnp.float32)
    if out_size == 1:
        return jnp.zeros((1, in_size), jnp.float32).at[0, 0].set(1.0)
    i = jnp.arange(out_size, dtype=jnp.float32)
    src = i * (in_size - 1) / (out_size - 1)
    i0 = jnp.clip(jnp.floor(src).astype(jnp.int32), 0, in_size - 1)
    i1 = jnp.minimum(i0 + 1, in_size - 1)
    w1 = src - i0.astype(jnp.float32)
    w0 = 1.0 - w1
    A = jnp.zeros((out_size, in_size), jnp.float32)
    rows = jnp.arange(out_size)
    A = A.at[rows, i0].add(w0)
    A = A.at[rows, i1].add(w1)
    return A


def upsample_matrix(hi, wi, ho, wo):
    """Dense operator for bilinear (align_corners=True) resize of a flattened
    (hi, wi) map: vec_out = vec_in @ U, with U of shape (hi*wi, ho*wo)."""
    return jnp.kron(interp_matrix(ho, hi), interp_matrix(wo, wi)).T


def conv_matrix(w_flat, cin, hi, wi, k, stride, pad):
    """Dense operator for a Conv(k, stride, pad) cin->1 (BN already folded).
    Input map flattened in (C, H, W) order, output in (Ho, Wo) order:
        vec_out = vec_in @ M,  M shape (cin*hi*wi, ho*wo)."""
    ho = (hi + 2 * pad - k) // stride + 1
    wo = (wi + 2 * pad - k) // stride + 1
    w = w_flat.reshape(cin, k, k).astype(jnp.float32)
    oh = jnp.arange(ho)
    ow = jnp.arange(wo)
    ih = jnp.arange(hi)
    iw = jnp.arange(wi)
    M = jnp.zeros((cin, hi, wi, ho, wo), jnp.float32)
    for kh in range(k):
        eh = (ih[:, None] == (oh[None, :] * stride - pad + kh)).astype(jnp.float32)
        for kw in range(k):
            ew = (iw[:, None] == (ow[None, :] * stride - pad + kw)).astype(jnp.float32)
            M = M + (w[:, kh, kw][:, None, None, None, None]
                     * eh[None, :, None, :, None]
                     * ew[None, None, :, None, :])
    return M.reshape(cin * hi * wi, ho * wo), ho, wo


def make_conv_bn_params(key, in_ch, out_ch, k, eps=1e-3):
    """Deterministic Conv+BN params, folded to an effective matmul weight."""
    kw, kb, kg, kbt, km, kv = jax.random.split(key, 6)
    w = jax.random.normal(kw, (out_ch, in_ch, k, k), jnp.float32) * 0.1
    b = jax.random.normal(kb, (out_ch,), jnp.float32) * 0.1
    gamma = 1.0 + 0.1 * jax.random.normal(kg, (out_ch,), jnp.float32)
    beta = 0.1 * jax.random.normal(kbt, (out_ch,), jnp.float32)
    mean = 0.1 * jax.random.normal(km, (out_ch,), jnp.float32)
    var = 1.0 + 0.1 * jax.random.uniform(kv, (out_ch,), jnp.float32)
    scale = gamma / jnp.sqrt(var + eps)
    w_eff = (w * scale[:, None, None, None]).reshape(out_ch, in_ch * k * k).T
    b_eff = (b - mean) * scale + beta
    return w_eff, b_eff                       # (in_ch*k*k, out_ch), (out_ch,)


def init_params(key, in_ch, out_ch):
    ks = jax.random.split(key, 8)
    return {
        "branch1": make_conv_bn_params(ks[0], in_ch, out_ch, 1),
        "mid":     make_conv_bn_params(ks[1], in_ch, out_ch, 1),
        "down1":   make_conv_bn_params(ks[2], in_ch, 1, 7),
        "down2":   make_conv_bn_params(ks[3], 1, 1, 5),
        "down3a":  make_conv_bn_params(ks[4], 1, 1, 3),
        "down3b":  make_conv_bn_params(ks[5], 1, 1, 3),
        "conv2":   make_conv_bn_params(ks[6], 1, 1, 5),
        "conv1":   make_conv_bn_params(ks[7], 1, 1, 7),
    }


def build_decoder_operators(params, in_ch, out_ch, H, W):
    """Pre-lower folded conv/BN params to packed operators for the fused kernel."""
    assert H % 8 == 0 and W % 8 == 0
    H1, W1 = H // 2, W // 2
    H2, W2 = H // 4, W // 4
    H3, W3 = H // 8, W // 8
    H1W1, H2W2, H3W3 = H1 * W1, H2 * W2, H3 * W3

    def conv_op(name, cin, hi, wi, k, s, p):
        w_eff, b_eff = params[name]                     # (cin*k*k, 1), (1,)
        M, _, _ = conv_matrix(w_eff[:, 0], cin, hi, wi, k, s, p)
        return M, b_eff[0]

    m1, bd1 = conv_op("down1", in_ch, H, W, 7, 2, 3)
    m2, bd2 = conv_op("down2", 1, H1, W1, 5, 2, 2)
    m3a, b3a = conv_op("down3a", 1, H2, W2, 3, 2, 1)
    m3b, b3b = conv_op("down3b", 1, H3, W3, 3, 1, 1)
    mc2, bc2 = conv_op("conv2", 1, H2, W2, 5, 1, 2)
    mc1, bc1 = conv_op("conv1", 1, H1, W1, 7, 1, 3)

    ops = {"m1": m1, "mc1": mc1,
           "u2": upsample_matrix(H2, W2, H1, W1),
           "u1": upsample_matrix(H1, W1, H, W)}

    # Pack the five small (<=128-lane) pyramid operators into one padded cube.
    small = jnp.zeros((5, H1W1, H2W2), jnp.float32)
    small = small.at[0, :H1W1, :H2W2].set(m2)
    small = small.at[1, :H2W2, :H3W3].set(m3a)
    small = small.at[2, :H3W3, :H3W3].set(m3b)
    small = small.at[3, :H2W2, :H2W2].set(mc2)
    small = small.at[4, :H3W3, :H2W2].set(upsample_matrix(H3, W3, H2, W2))
    ops["smallops"] = small

    # Pack the six scalar pyramid biases as lane-dense rows (one row each).
    pyr_b = jnp.zeros((6, H1W1), jnp.float32)
    for i, (b, width) in enumerate([(bd1, H1W1), (bd2, H2W2), (b3a, H3W3),
                                    (b3b, H3W3), (bc2, H2W2), (bc1, H1W1)]):
        pyr_b = pyr_b.at[i, :width].set(b)
    ops["pyr_b"] = pyr_b

    # Pack mid / branch1 1x1-conv weights and biases: (out_ch, 2*in_ch + 2).
    w_mid, b_mid = params["mid"]                        # (in_ch, out_ch), (out_ch,)
    w_br, b_br = params["branch1"]
    ops["wpack"] = jnp.concatenate(
        [w_mid.T, w_br.T, b_mid[:, None], b_br[:, None]], axis=1
    ).astype(jnp.float32)

    # Separable 8x bilinear upscale (align_corners=True), fused in the kernel:
    #   width pass : y (out_ch, H*W) @ ww,  ww = kron(I_H, Aw^T)   (H*W, H*8W)
    #   height pass: bup @ Z,  bup[(c,ho), (h,c')] = Ah[ho,h]*delta(c,c')
    awT = interp_matrix(8 * W, W).T                     # (W, 8W)
    ops["ww"] = jnp.kron(jnp.eye(H, dtype=jnp.float32), awT)
    ah = interp_matrix(8 * H, H)                        # (8H, H)
    ops["bup"] = jnp.einsum(
        "oh,cd->cohd", ah, jnp.eye(out_ch, dtype=jnp.float32)
    ).reshape(out_ch * 8 * H, H * out_ch)
    return ops


# ---------------------------------------------------------------------------
# Plain-JAX (XLA) reference of the same math, for validation only.
# ---------------------------------------------------------------------------
def reference_forward(x, params):
    N, C, H, W = x.shape

    def conv(xin, p, k, s, pad):
        w_eff, b_eff = p
        cin = xin.shape[1]
        oc = w_eff.shape[1]
        wt = w_eff.T.reshape(oc, cin, k, k)
        y = lax.conv_general_dilated(
            xin, wt, (s, s), [(pad, pad), (pad, pad)],
            dimension_numbers=("NCHW", "OIHW", "NCHW"),
            precision=lax.Precision.HIGHEST)
        return jnp.maximum(y + b_eff.reshape(1, oc, 1, 1), 0.0)

    def up(xin, ho, wo):
        ah = interp_matrix(ho, xin.shape[2])
        aw = interp_matrix(wo, xin.shape[3])
        return jnp.einsum("oh,nchw,pw->ncop", ah, xin, aw,
                          precision=lax.Precision.HIGHEST)

    pooled = jnp.mean(x, axis=(2, 3))
    b1 = jnp.maximum(pooled @ params["branch1"][0] + params["branch1"][1], 0.0)
    mid = conv(x, params["mid"], 1, 1, 0)
    x1 = conv(x, params["down1"], 7, 2, 3)
    x2 = conv(x1, params["down2"], 5, 2, 2)
    x3 = conv(x2, params["down3a"], 3, 2, 1)
    x3 = conv(x3, params["down3b"], 3, 1, 1)
    att = conv(x2, params["conv2"], 5, 1, 2) + up(x3, H // 4, W // 4)
    att = up(att, H // 2, W // 2) + conv(x1, params["conv1"], 7, 1, 3)
    att = up(att, H, W)
    y = att * mid + b1[:, :, None, None]
    return up(y, 8 * H, 8 * W)


if __name__ == "__main__":
    key = jax.random.PRNGKey(0)
    k_x, k_p = jax.random.split(key)

    N, in_ch, out_ch, H, W = 2, 4, 8, 16, 16
    x = jax.random.normal(k_x, (N, in_ch, H, W), jnp.float32)
    params = init_params(k_p, in_ch, out_ch)
    ops = build_decoder_operators(params, in_ch, out_ch, H, W)

    fwd = jax.jit(lednet_decoder_forward)
    y = jax.block_until_ready(fwd(x, ops))

    assert y.shape == (N, out_ch, 8 * H, 8 * W), y.shape
    assert bool(jnp.all(jnp.isfinite(y)))

    # Validate against a plain-JAX reference of the same (BN-folded) math.
    # Layout / packing bugs give O(1) relative error; the tolerance below only
    # covers the MXU's default f32 matmul precision and the different
    # tap-summation order of the dense-operator formulation.
    y_ref = reference_forward(x, params)
    rel_err = float(jnp.linalg.norm(y - y_ref) / (jnp.linalg.norm(y_ref) + 1e-6))
    assert rel_err < 1e-2, rel_err

    print("KERNEL_OK")
</pallas_src>

<mosaic_0001>
module attributes {stable_mosaic.version = 11 : i64} {
  func.func @kernel(%arg0: i32, %arg1: memref<1x1x1024xf32, #tpu.memory_space<vmem>>, %arg2: memref<1x4x256xf32, #tpu.memory_space<vmem>>, %arg3: memref<1024x64xf32, #tpu.memory_space<vmem>>, %arg4: memref<5x64x16xf32, #tpu.memory_space<vmem>>, %arg5: memref<6x64xf32, #tpu.memory_space<vmem>>, %arg6: memref<64x64xf32, #tpu.memory_space<vmem>>, %arg7: memref<16x64xf32, #tpu.memory_space<vmem>>, %arg8: memref<64x256xf32, #tpu.memory_space<vmem>>, %arg9: memref<8x10xf32, #tpu.memory_space<vmem>>, %arg10: memref<256x2048xf32, #tpu.memory_space<vmem>>, %arg11: memref<1024x128xf32, #tpu.memory_space<vmem>>, %arg12: memref<1x1024x128xf32, #tpu.memory_space<vmem>>) attributes {dimension_semantics = [#tpu.dimension_semantics<parallel>], iteration_bounds = array<i64: 2>, scalar_prefetch = 0 : i64, scratch_operands = 0 : i64, tpu.core_type = #tpu.core_type<tc>, window_params = [{transform_indices = @transform_0, window_bounds = array<i64: 1, 1, 1024>}, {transform_indices = @transform_1, window_bounds = array<i64: 1, 4, 256>}, {pipeline_mode = #tpu.pipeline_mode<synchronous>, transform_indices = @transform_2, window_bounds = array<i64: 1024, 64>}, {pipeline_mode = #tpu.pipeline_mode<synchronous>, transform_indices = @transform_3, window_bounds = array<i64: 5, 64, 16>}, {pipeline_mode = #tpu.pipeline_mode<synchronous>, transform_indices = @transform_4, window_bounds = array<i64: 6, 64>}, {pipeline_mode = #tpu.pipeline_mode<synchronous>, transform_indices = @transform_5, window_bounds = array<i64: 64, 64>}, {pipeline_mode = #tpu.pipeline_mode<synchronous>, transform_indices = @transform_6, window_bounds = array<i64: 16, 64>}, {pipeline_mode = #tpu.pipeline_mode<synchronous>, transform_indices = @transform_7, window_bounds = array<i64: 64, 256>}, {pipeline_mode = #tpu.pipeline_mode<synchronous>, transform_indices = @transform_8, window_bounds = array<i64: 8, 10>}, {pipeline_mode = #tpu.pipeline_mode<synchronous>, transform_indices = @transform_9, window_bounds = array<i64: 256, 2048>}, {pipeline_mode = #tpu.pipeline_mode<synchronous>, transform_indices = @transform_10, window_bounds = array<i64: 1024, 128>}, {transform_indices = @transform_11, window_bounds = array<i64: 1, 1024, 128>}]} {
    %c0 = arith.constant 0 : index
    %c0_0 = arith.constant 0 : index
    %c0_1 = arith.constant 0 : index
    %0 = vector.load %arg1[%c0, %c0_0, %c0_1] : memref<1x1x1024xf32, #tpu.memory_space<vmem>>, vector<1x1x1024xf32>
    %1 = vector.shape_cast %0 : vector<1x1x1024xf32> to vector<1x1024xf32>
    %c0_2 = arith.constant 0 : index
    %c0_3 = arith.constant 0 : index
    %c0_4 = arith.constant 0 : index
    %2 = vector.load %arg2[%c0_2, %c0_3, %c0_4] : memref<1x4x256xf32, #tpu.memory_space<vmem>>, vector<1x4x256xf32>
    %3 = vector.shape_cast %2 : vector<1x4x256xf32> to vector<4x256xf32>
    %c0_5 = arith.constant 0 : index
    %c0_6 = arith.constant 0 : index
    %c0_7 = arith.constant 0 : index
    %4 = vector.load %arg4[%c0_5, %c0_6, %c0_7] : memref<5x64x16xf32, #tpu.memory_space<vmem>>, vector<1x64x16xf32>
    %5 = vector.shape_cast %4 : vector<1x64x16xf32> to vector<64x16xf32>
    %c1 = arith.constant 1 : index
    %c0_8 = arith.constant 0 : index
    %c0_9 = arith.constant 0 : index
    %6 = vector.load %arg4[%c1, %c0_8, %c0_9] : memref<5x64x16xf32, #tpu.memory_space<vmem>>, vector<1x16x4xf32>
    %7 = vector.shape_cast %6 : vector<1x16x4xf32> to vector<16x4xf32>
    %c2 = arith.constant 2 : index
    %c0_10 = arith.constant 0 : index
    %c0_11 = arith.constant 0 : index
    %8 = vector.load %arg4[%c2, %c0_10, %c0_11] : memref<5x64x16xf32, #tpu.memory_space<vmem>>, vector<1x4x4xf32>
    %9 = vector.shape_cast %8 : vector<1x4x4xf32> to vector<4x4xf32>
    %c3 = arith.constant 3 : index
    %c0_12 = arith.constant 0 : index
    %c0_13 = arith.constant 0 : index
    %10 = vector.load %arg4[%c3, %c0_12, %c0_13] : memref<5x64x16xf32, #tpu.memory_space<vmem>>, vector<1x16x16xf32>
    %11 = vector.shape_cast %10 : vector<1x16x16xf32> to vector<16x16xf32>
    %c4 = arith.constant 4 : index
    %c0_14 = arith.constant 0 : index
    %c0_15 = arith.constant 0 : index
    %12 = vector.load %arg4[%c4, %c0_14, %c0_15] : memref<5x64x16xf32, #tpu.memory_space<vmem>>, vector<1x4x16xf32>
    %13 = vector.shape_cast %12 : vector<1x4x16xf32> to vector<4x16xf32>
    %c0_16 = arith.constant 0 : index
    %c0_17 = arith.constant 0 : index
    %14 = vector.load %arg5[%c0_16, %c0_17] : memref<6x64xf32, #tpu.memory_space<vmem>>, vector<1x64xf32>
    %c5 = arith.constant 5 : index
    %c0_18 = arith.constant 0 : index
    %15 = vector.load %arg5[%c5, %c0_18] : memref<6x64xf32, #tpu.memory_space<vmem>>, vector<1x64xf32>
    %c1_19 = arith.constant 1 : index
    %c0_20 = arith.constant 0 : index
    %16 = vector.load %arg5[%c1_19, %c0_20] : memref<6x64xf32, #tpu.memory_space<vmem>>, vector<1x16xf32>
    %c4_21 = arith.constant 4 : index
    %c0_22 = arith.constant 0 : index
    %17 = vector.load %arg5[%c4_21, %c0_22] : memref<6x64xf32, #tpu.memory_space<vmem>>, vector<1x16xf32>
    %c2_23 = arith.constant 2 : index
    %c0_24 = arith.constant 0 : index
    %18 = vector.load %arg5[%c2_23, %c0_24] : memref<6x64xf32, #tpu.memory_space<vmem>>, vector<1x4xf32>
    %c3_25 = arith.constant 3 : index
    %c0_26 = arith.constant 0 : index
    %19 = vector.load %arg5[%c3_25, %c0_26] : memref<6x64xf32, #tpu.memory_space<vmem>>, vector<1x4xf32>
    %c0_27 = arith.constant 0 : index
    %c0_28 = arith.constant 0 : index
    %20 = vector.load %arg9[%c0_27, %c0_28] : memref<8x10xf32, #tpu.memory_space<vmem>>, vector<8x4xf32>
    %c0_29 = arith.constant 0 : index
    %c4_30 = arith.constant 4 : index
    %21 = vector.load %arg9[%c0_29, %c4_30] : memref<8x10xf32, #tpu.memory_space<vmem>>, vector<8x4xf32>
    %c0_31 = arith.constant 0 : index
    %c8 = arith.constant 8 : index
    %22 = vector.load %arg9[%c0_31, %c8] : memref<8x10xf32, #tpu.memory_space<vmem>>, vector<8x1xf32>
    %c0_32 = arith.constant 0 : index
    %c9 = arith.constant 9 : index
    %23 = vector.load %arg9[%c0_32, %c9] : memref<8x10xf32, #tpu.memory_space<vmem>>, vector<8x1xf32>
    %c0_33 = arith.constant 0 : index
    %c0_34 = arith.constant 0 : index
    %24 = vector.load %arg3[%c0_33, %c0_34] : memref<1024x64xf32, #tpu.memory_space<vmem>>, vector<1024x64xf32>
    %cst = arith.constant dense<0.000000e+00> : vector<1x64xf32>
    %25 = tpu.matmul %1, %24, %cst {dimension_numbers = #tpu.dot_dimension_numbers<[1], [0], [0], [1], [0, 0, 1, 1], [], []>} : vector<1x1024xf32>, vector<1024x64xf32>, vector<1x64xf32> -> vector<1x64xf32>
    %26 = arith.addf %25, %14 : vector<1x64xf32>
    %cst_35 = arith.constant 0.000000e+00 : f32
    %27 = vector.broadcast %cst_35 : f32 to vector<1x64xf32>
    %28 = arith.maximumf %26, %27 : vector<1x64xf32>
    %cst_36 = arith.constant dense<0.000000e+00> : vector<1x16xf32>
    %29 = tpu.matmul %28, %5, %cst_36 {dimension_numbers = #tpu.dot_dimension_numbers<[1], [0], [0], [1], [0, 0, 1, 1], [], []>} : vector<1x64xf32>, vector<64x16xf32>, vector<1x16xf32> -> vector<1x16xf32>
    %30 = arith.addf %29, %16 : vector<1x16xf32>
    %cst_37 = arith.constant 0.000000e+00 : f32
    %31 = vector.broadcast %cst_37 : f32 to vector<1x16xf32>
    %32 = arith.maximumf %30, %31 : vector<1x16xf32>
    %cst_38 = arith.constant dense<0.000000e+00> : vector<1x4xf32>
    %33 = tpu.matmul %32, %7, %cst_38 {dimension_numbers = #tpu.dot_dimension_numbers<[1], [0], [0], [1], [0, 0, 1, 1], [], []>} : vector<1x16xf32>, vector<16x4xf32>, vector<1x4xf32> -> vector<1x4xf32>
    %34 = arith.addf %33, %18 : vector<1x4xf32>
    %cst_39 = arith.constant 0.000000e+00 : f32
    %35 = vector.broadcast %cst_39 : f32 to vector<1x4xf32>
    %36 = arith.maximumf %34, %35 : vector<1x4xf32>
    %cst_40 = arith.constant dense<0.000000e+00> : vector<1x4xf32>
    %37 = tpu.matmul %36, %9, %cst_40 {dimension_numbers = #tpu.dot_dimension_numbers<[1], [0], [0], [1], [0, 0, 1, 1], [], []>} : vector<1x4xf32>, vector<4x4xf32>, vector<1x4xf32> -> vector<1x4xf32>
    %38 = arith.addf %37, %19 : vector<1x4xf32>
    %cst_41 = arith.constant 0.000000e+00 : f32
    %39 = vector.broadcast %cst_41 : f32 to vector<1x4xf32>
    %40 = arith.maximumf %38, %39 : vector<1x4xf32>
    %cst_42 = arith.constant dense<0.000000e+00> : vector<1x16xf32>
    %41 = tpu.matmul %32, %11, %cst_42 {dimension_numbers = #tpu.dot_dimension_numbers<[1], [0], [0], [1], [0, 0, 1, 1], [], []>} : vector<1x16xf32>, vector<16x16xf32>, vector<1x16xf32> -> vector<1x16xf32>
    %42 = arith.addf %41, %17 : vector<1x16xf32>
    %cst_43 = arith.constant 0.000000e+00 : f32
    %43 = vector.broadcast %cst_43 : f32 to vector<1x16xf32>
    %44 = arith.maximumf %42, %43 : vector<1x16xf32>
    %cst_44 = arith.constant dense<0.000000e+00> : vector<1x16xf32>
    %45 = tpu.matmul %40, %13, %cst_44 {dimension_numbers = #tpu.dot_dimension_numbers<[1], [0], [0], [1], [0, 0, 1, 1], [], []>} : vector<1x4xf32>, vector<4x16xf32>, vector<1x16xf32> -> vector<1x16xf32>
    %46 = arith.addf %44, %45 : vector<1x16xf32>
    %c0_45 = arith.constant 0 : index
    %c0_46 = arith.constant 0 : index
    %47 = vector.load %arg7[%c0_45, %c0_46] : memref<16x64xf32, #tpu.memory_space<vmem>>, vector<16x64xf32>
    %cst_47 = arith.constant dense<0.000000e+00> : vector<1x64xf32>
    %48 = tpu.matmul %46, %47, %cst_47 {dimension_numbers = #tpu.dot_dimension_numbers<[1], [0], [0], [1], [0, 0, 1, 1], [], []>} : vector<1x16xf32>, vector<16x64xf32>, vector<1x64xf32> -> vector<1x64xf32>
    %c0_48 = arith.constant 0 : index
    %c0_49 = arith.constant 0 : index
    %49 = vector.load %arg6[%c0_48, %c0_49] : memref<64x64xf32, #tpu.memory_space<vmem>>, vector<64x64xf32>
    %cst_50 = arith.constant dense<0.000000e+00> : vector<1x64xf32>
    %50 = tpu.matmul %28, %49, %cst_50 {dimension_numbers = #tpu.dot_dimension_numbers<[1], [0], [0], [1], [0, 0, 1, 1], [], []>} : vector<1x64xf32>, vector<64x64xf32>, vector<1x64xf32> -> vector<1x64xf32>
    %51 = arith.addf %50, %15 : vector<1x64xf32>
    %cst_51 = arith.constant 0.000000e+00 : f32
    %52 = vector.broadcast %cst_51 : f32 to vector<1x64xf32>
    %53 = arith.maximumf %51, %52 : vector<1x64xf32>
    %54 = arith.addf %48, %53 : vector<1x64xf32>
    %c0_52 = arith.constant 0 : index
    %c0_53 = arith.constant 0 : index
    %55 = vector.load %arg8[%c0_52, %c0_53] : memref<64x256xf32, #tpu.memory_space<vmem>>, vector<64x256xf32>
    %cst_54 = arith.constant dense<0.000000e+00> : vector<1x256xf32>
    %56 = tpu.matmul %54, %55, %cst_54 {dimension_numbers = #tpu.dot_dimension_numbers<[1], [0], [0], [1], [0, 0, 1, 1], [], []>} : vector<1x64xf32>, vector<64x256xf32>, vector<1x256xf32> -> vector<1x256xf32>
    %cst_55 = arith.constant dense<0.000000e+00> : vector<8x256xf32>
    %57 = tpu.matmul %20, %3, %cst_55 {dimension_numbers = #tpu.dot_dimension_numbers<[1], [0], [0], [1], [0, 0, 1, 1], [], []>} : vector<8x4xf32>, vector<4x256xf32>, vector<8x256xf32> -> vector<8x256xf32>
    %58 = vector.broadcast %22 : vector<8x1xf32> to vector<8x256xf32>
    %59 = arith.addf %57, %58 : vector<8x256xf32>
    %cst_56 = arith.constant 0.000000e+00 : f32
    %60 = vector.broadcast %cst_56 : f32 to vector<8x256xf32>
    %61 = arith.maximumf %59, %60 : vector<8x256xf32>
    %cst_57 = arith.constant dense<0.000000e+00> : vector<4xf32>
    %62 = vector.multi_reduction <add>, %3, %cst_57 [1] : vector<4x256xf32> to vector<4xf32>
    %63 = vector.shape_cast %62 : vector<4xf32> to vector<4x1xf32>
    %cst_58 = arith.constant 2.560000e+02 : f32
    %64 = vector.broadcast %cst_58 : f32 to vector<4x1xf32>
    %65 = arith.divf %63, %64 : vector<4x1xf32>
    %cst_59 = arith.constant dense<0.000000e+00> : vector<8x1xf32>
    %66 = tpu.matmul %21, %65, %cst_59 {dimension_numbers = #tpu.dot_dimension_numbers<[1], [0], [0], [1], [0, 0, 1, 1], [], []>} : vector<8x4xf32>, vector<4x1xf32>, vector<8x1xf32> -> vector<8x1xf32>
    %67 = arith.addf %66, %23 : vector<8x1xf32>
    %cst_60 = arith.constant 0.000000e+00 : f32
    %68 = vector.broadcast %cst_60 : f32 to vector<8x1xf32>
    %69 = arith.maximumf %67, %68 : vector<8x1xf32>
    %70 = vector.broadcast %56 : vector<1x256xf32> to vector<8x256xf32>
    %71 = arith.mulf %70, %61 : vector<8x256xf32>
    %72 = vector.broadcast %69 : vector<8x1xf32> to vector<8x256xf32>
    %73 = arith.addf %71, %72 : vector<8x256xf32>
    %c0_61 = arith.constant 0 : index
    %c0_62 = arith.constant 0 : index
    %74 = vector.load %arg10[%c0_61, %c0_62] : memref<256x2048xf32, #tpu.memory_space<vmem>>, vector<256x2048xf32>
    %cst_63 = arith.constant dense<0.000000e+00> : vector<8x2048xf32>
    %75 = tpu.matmul %73, %74, %cst_63 {dimension_numbers = #tpu.dot_dimension_numbers<[1], [0], [0], [1], [0, 0, 1, 1], [], []>} : vector<8x256xf32>, vector<256x2048xf32>, vector<8x2048xf32> -> vector<8x2048xf32>
    %76 = vector.extract_strided_slice %75 {offsets = [0, 0], sizes = [8, 128], strides = [1, 1]} : vector<8x2048xf32> to vector<8x128xf32>
    %77 = vector.extract_strided_slice %75 {offsets = [0, 128], sizes = [8, 128], strides = [1, 1]} : vector<8x2048xf32> to vector<8x128xf32>
    %78 = vector.extract_strided_slice %75 {offsets = [0, 256], sizes = [8, 128], strides = [1, 1]} : vector<8x2048xf32> to vector<8x128xf32>
    %79 = vector.extract_strided_slice %75 {offsets = [0, 384], sizes = [8, 128], strides = [1, 1]} : vector<8x2048xf32> to vector<8x128xf32>
    %80 = vector.extract_strided_slice %75 {offsets = [0, 512], sizes = [8, 128], strides = [1, 1]} : vector<8x2048xf32> to vector<8x128xf32>
    %81 = vector.extract_strided_slice %75 {offsets = [0, 640], sizes = [8, 128], strides = [1, 1]} : vector<8x2048xf32> to vector<8x128xf32>
    %82 = vector.extract_strided_slice %75 {offsets = [0, 768], sizes = [8, 128], strides = [1, 1]} : vector<8x2048xf32> to vector<8x128xf32>
    %83 = vector.extract_strided_slice %75 {offsets = [0, 896], sizes = [8, 128], strides = [1, 1]} : vector<8x2048xf32> to vector<8x128xf32>
    %84 = vector.extract_strided_slice %75 {offsets = [0, 1024], sizes = [8, 128], strides = [1, 1]} : vector<8x2048xf32> to vector<8x128xf32>
    %85 = vector.extract_strided_slice %75 {offsets = [0, 1152], sizes = [8, 128], strides = [1, 1]} : vector<8x2048xf32> to vector<8x128xf32>
    %86 = vector.extract_strided_slice %75 {offsets = [0, 1280], sizes = [8, 128], strides = [1, 1]} : vector<8x2048xf32> to vector<8x128xf32>
    %87 = vector.extract_strided_slice %75 {offsets = [0, 1408], sizes = [8, 128], strides = [1, 1]} : vector<8x2048xf32> to vector<8x128xf32>
    %88 = vector.extract_strided_slice %75 {offsets = [0, 1536], sizes = [8, 128], strides = [1, 1]} : vector<8x2048xf32> to vector<8x128xf32>
    %89 = vector.extract_strided_slice %75 {offsets = [0, 1664], sizes = [8, 128], strides = [1, 1]} : vector<8x2048xf32> to vector<8x128xf32>
    %90 = vector.extract_strided_slice %75 {offsets = [0, 1792], sizes = [8, 128], strides = [1, 1]} : vector<8x2048xf32> to vector<8x128xf32>
    %91 = vector.extract_strided_slice %75 {offsets = [0, 1920], sizes = [8, 128], strides = [1, 1]} : vector<8x2048xf32> to vector<8x128xf32>
    %92 = tpu.concatenate %76, %77, %78, %79, %80, %81, %82, %83, %84, %85, %86, %87, %88, %89, %90, %91 in 0 : vector<8x128xf32>, vector<8x128xf32>, vector<8x128xf32>, vector<8x128xf32>, vector<8x128xf32>, vector<8x128xf32>, vector<8x128xf32>, vector<8x128xf32>, vector<8x128xf32>, vector<8x128xf32>, vector<8x128xf32>, vector<8x128xf32>, vector<8x128xf32>, vector<8x128xf32>, vector<8x128xf32>, vector<8x128xf32> -> vector<128x128xf32>
    %c0_64 = arith.constant 0 : index
    %c0_65 = arith.constant 0 : index
    %93 = vector.load %arg11[%c0_64, %c0_65] : memref<1024x128xf32, #tpu.memory_space<vmem>>, vector<1024x128xf32>
    %cst_66 = arith.constant dense<0.000000e+00> : vector<1024x128xf32>
    %94 = tpu.matmul %93, %92, %cst_66 {dimension_numbers = #tpu.dot_dimension_numbers<[1], [0], [0], [1], [0, 0, 1, 1], [], []>} : vector<1024x128xf32>, vector<128x128xf32>, vector<1024x128xf32> -> vector<1024x128xf32>
    %c0_67 = arith.constant 0 : index
    %c0_68 = arith.constant 0 : index
    %c0_69 = arith.constant 0 : index
    %95 = vector.load %arg12[%c0_67, %c0_68, %c0_69] : memref<1x1024x128xf32, #tpu.memory_space<vmem>>, vector<1x1024x128xf32>
    %96 = vector.shape_cast %95 : vector<1x1024x128xf32> to vector<1024x128xf32>
    %97 = vector.shape_cast %94 : vector<1024x128xf32> to vector<1x1024x128xf32>
    tpu.vector_store %arg12[%c0_67, %c0_68, %c0_69], %97 {strides = array<i32>} : memref<1x1024x128xf32, #tpu.memory_space<vmem>>, vector<1x1024x128xf32>,
    return
  }
  func.func @transform_0(%arg0: i32) -> (i32, i32, i32) {
    %c0_i32 = arith.constant 0 : i32
    %c0_i32_0 = arith.constant 0 : i32
    %c0_i32_1 = arith.constant 0 : i32
    return %arg0, %c0_i32, %c0_i32_0 : i32, i32, i32
  }
  func.func @transform_1(%arg0: i32) -> (i32, i32, i32) {
    %c0_i32 = arith.constant 0 : i32
    %c0_i32_0 = arith.constant 0 : i32
    %c0_i32_1 = arith.constant 0 : i32
    return %arg0, %c0_i32, %c0_i32_0 : i32, i32, i32
  }
  func.func @transform_2(%arg0: i32) -> (i32, i32) {
    %c0_i32 = arith.constant 0 : i32
    %c0_i32_0 = arith.constant 0 : i32
    %c0_i32_1 = arith.constant 0 : i32
    return %c0_i32, %c0_i32_0 : i32, i32
  }
  func.func @transform_3(%arg0: i32) -> (i32, i32, i32) {
    %c0_i32 = arith.constant 0 : i32
    %c0_i32_0 = arith.constant 0 : i32
    %c0_i32_1 = arith.constant 0 : i32
    %c0_i32_2 = arith.constant 0 : i32
    return %c0_i32, %c0_i32_0, %c0_i32_1 : i32, i32, i32
  }
  func.func @transform_4(%arg0: i32) -> (i32, i32) {
    %c0_i32 = arith.constant 0 : i32
    %c0_i32_0 = arith.constant 0 : i32
    %c0_i32_1 = arith.constant 0 : i32
    return %c0_i32, %c0_i32_0 : i32, i32
  }
  func.func @transform_5(%arg0: i32) -> (i32, i32) {
    %c0_i32 = arith.constant 0 : i32
    %c0_i32_0 = arith.constant 0 : i32
    %c0_i32_1 = arith.constant 0 : i32
    return %c0_i32, %c0_i32_0 : i32, i32
  }
  func.func @transform_6(%arg0: i32) -> (i32, i32) {
    %c0_i32 = arith.constant 0 : i32
    %c0_i32_0 = arith.constant 0 : i32
    %c0_i32_1 = arith.constant 0 : i32
    return %c0_i32, %c0_i32_0 : i32, i32
  }
  func.func @transform_7(%arg0: i32) -> (i32, i32) {
    %c0_i32 = arith.constant 0 : i32
    %c0_i32_0 = arith.constant 0 : i32
    %c0_i32_1 = arith.constant 0 : i32
    return %c0_i32, %c0_i32_0 : i32, i32
  }
  func.func @transform_8(%arg0: i32) -> (i32, i32) {
    %c0_i32 = arith.constant 0 : i32
    %c0_i32_0 = arith.constant 0 : i32
    %c0_i32_1 = arith.constant 0 : i32
    return %c0_i32, %c0_i32_0 : i32, i32
  }
  func.func @transform_9(%arg0: i32) -> (i32, i32) {
    %c0_i32 = arith.constant 0 : i32
    %c0_i32_0 = arith.constant 0 : i32
    %c0_i32_1 = arith.constant 0 : i32
    return %c0_i32, %c0_i32_0 : i32, i32
  }
  func.func @transform_10(%arg0: i32) -> (i32, i32) {
    %c0_i32 = arith.constant 0 : i32
    %c0_i32_0 = arith.constant 0 : i32
    %c0_i32_1 = arith.constant 0 : i32
    return %c0_i32, %c0_i32_0 : i32, i32
  }
  func.func @transform_11(%arg0: i32) -> (i32, i32, i32) {
    %c0_i32 = arith.constant 0 : i32
    %c0_i32_0 = arith.constant 0 : i32
    %c0_i32_1 = arith.constant 0 : i32
    return %arg0, %c0_i32, %c0_i32_0 : i32, i32, i32
  }
}

</mosaic_0001>

<llo_original>
// kernel: lednet_decoder_forward.1
$region0: #{lednet_decoder_forward.1}
  #allocation0 [shape = 'u32[]', space=smem, size = 0x4, offset = 0x4, fixed_abs, tag = 'smem constant byte address 0x4 - core index']
  #allocation1 [shape = 'u32[72,128]{1,0:T(1,128)}', space=vmem, size = 0x9000, scoped, tag = 'internal scratch']
  %s0 = inlined_call_operand.vmem [shape: f32[2,1,1024], index: 0, kind: input, shape index: {}]
  %s1 = inlined_call_operand.vmem [shape: f32[2,4,256], index: 1, kind: input, shape index: {}]
  %s2 = inlined_call_operand.vmem [shape: f32[1024,64], index: 2, kind: input, shape index: {}]
  %s3 = inlined_call_operand.vmem [shape: f32[5,64,16], index: 3, kind: input, shape index: {}]
  %s4 = inlined_call_operand.hbm [shape: f32[6,64], index: 4, kind: input, shape index: {}]
  %s5 = inlined_call_operand.hbm [shape: f32[64,64], index: 5, kind: input, shape index: {}]
  %s6 = inlined_call_operand.hbm [shape: f32[16,64], index: 6, kind: input, shape index: {}]
  %s7 = inlined_call_operand.hbm [shape: f32[64,256], index: 7, kind: input, shape index: {}]
  %s8 = inlined_call_operand.hbm [shape: f32[8,10], index: 8, kind: input, shape index: {}]
  %s9 = inlined_call_operand.hbm [shape: f32[256,2048], index: 9, kind: input, shape index: {}]
  %s10 = inlined_call_operand.hbm [shape: f32[1024,128], index: 10, kind: input, shape index: {}]
  %s11 = inlined_call_operand.hbm [shape: f32[2,1024,128], index: 11, kind: output, shape index: {}]
  %s12 = sld [smem:[#allocation0]]
  $region105: #{lednet_decoder_forward.1} parent=0
    _
  %s14 = ssub.s32 1, %s12
  %s15 = scalar_select 0, %s14, %s12
  $region1: #{lednet_decoder_forward.1} parent=0
    #allocation2 [shape = 'u8[4096]{0}', space=vmem, size = 0x1000, scoped, tag = 'input window, operand 4, single buffered']
    #allocation3 [shape = 's32[2]{0}', space=sflag, size = 0x8, scoped, tag = 'scoped memory for lednet_decoder_forward.1']
    #allocation4 [shape = 's32[2]{0}', space=sflag, size = 0x8, scoped, tag = 'scoped memory for lednet_decoder_forward.1']
    #allocation5 [shape = 'u8[32768]{0}', space=vmem, size = 0x8000, scoped, tag = 'input window, operand 5, single buffered']
    #allocation6 [shape = 's32[1]{0}', space=sflag, size = 0x4, scoped, tag = 'scoped memory for lednet_decoder_forward.1']
    #allocation7 [shape = 'u8[8192]{0}', space=vmem, size = 0x2000, scoped, tag = 'input window, operand 6, single buffered']
    #allocation8 [shape = 'u8[65536]{0}', space=vmem, size = 0x10000, scoped, tag = 'input window, operand 7, single buffered']
    #allocation9 [shape = 's32[1]{0}', space=sflag, size = 0x4, scoped, tag = 'scoped memory for lednet_decoder_forward.1']
    #allocation10 [shape = 'u8[4096]{0}', space=vmem, size = 0x1000, scoped, tag = 'input window, operand 8, single buffered']
    #allocation11 [shape = 'u8[2097152]{0}', space=vmem, size = 0x200000, scoped, tag = 'input window, operand 9, single buffered']
    #allocation12 [shape = 's32[1]{0}', space=sflag, size = 0x4, scoped, tag = 'scoped memory for lednet_decoder_forward.1']
    #allocation13 [shape = 'u8[524288]{0}', space=vmem, size = 0x80000, scoped, tag = 'input window, operand 10, single buffered']
    #allocation14 [shape = 'u8[1048576]{0}', space=vmem, size = 0x100000, scoped, tag = 'output window, operand 0']
    %16 = vsyncpa [#allocation3], 0
    %17 = vsyncpa [#allocation6], 0
    %18 = vsyncpa [#allocation9], 0
    %19 = vsyncpa [#allocation12], 0
    %20 = vsyncpa [#allocation4], 0
    %s21 = scalar_lea.sflag [#allocation4], 1
    %22 = vsyncpa %s21, 0
    loop: start=0, step=1, limit=4
    $region2: #{lednet_decoder_forward.1} parent=1 // loop_pre_header
      _
    $region3: #{lednet_decoder_forward.1} parent=1 // loop_header
      %s24 = sphi 0, %s28
      %p25 = scmp.ge.s32.totalorder %s24, 4
      %s34 = sphi 0, %s36
      %s37 = sphi 0, %s34
      %s38 = sphi 0, %s37
      %s54 = sphi 0, %s38
      %s60 = sphi 0, %s62
      %s63 = sphi 0, %s60
      %s64 = sphi 0, %s63
      %s80 = sphi 0, %s64
      %s84 = sphi 0, %s84
      %s86 = sphi 0, %s84
      %s87 = sphi 0, %s86
      %s101 = sphi 0, %s87
      %s105 = sphi 0, %s105
      %s107 = sphi 0, %s105
      %s108 = sphi 0, %s107
      %s122 = sphi 0, %s108
      %s126 = sphi 0, %s126
      %s128 = sphi 0, %s126
      %s129 = sphi 0, %s128
      %s143 = sphi 0, %s129
      %s147 = sphi 0, %s147
      %s149 = sphi 0, %s147
      %s150 = sphi 0, %s149
      %s164 = sphi 0, %s150
      %s168 = sphi 0, %s168
      %s170 = sphi 0, %s168
      %s171 = sphi 0, %s170
      %s185 = sphi 0, %s171
      %s189 = sphi 0, %s189
      %s191 = sphi 0, %s189
      %s192 = sphi 0, %s191
      %s206 = sphi 0, %s192
      %s210 = sphi 0, %s210
      %s212 = sphi 0, %s210
      %s213 = sphi 0, %s212
      %s227 = sphi 0, %s213
      %s231 = sphi 0, %s231
      %s233 = sphi 0, %s231
      %s234 = sphi 0, %s233
      %s248 = sphi 0, %s234
      %s252 = sphi 0, %s252
      %s254 = sphi 0, %s252
      %s255 = sphi 0, %s254
      %s269 = sphi 0, %s255
      %s275 = sphi 0, %s277
      %s278 = sphi 0, %s275
      %s279 = sphi 0, %s278
      %s295 = sphi 0, %s279
    $region4: #{lednet_decoder_forward.1} parent=1 // loop_header_branch
      %27 = sbr.rel (%p25) target = $region8
    $region5: #{lednet_decoder_forward.1} parent=1 // loop_body
      %s29 = ssub.s32 %s24, 1
      %s30 = ssub.s32 %s24, 2
      %s31 = sadd.s32 %s24, 1
      %s32 = ssub.s32 %s24, %s31
      %p33 = scmp.eq.s32.totalorder %s32, 0
      %s35 = sadd.s32 %s34, 1
      %s36 = scalar_select %p33, %s34, %s35
      %p39 = pneg %p33
      %p40 = scmp.eq.s32.totalorder %s24, 1
      %p41 = por %p39, %p40
      %p42 = scmp.ne.s32.totalorder %s34, %s37
      %p43 = scmp.eq.s32.totalorder %s24, 0
      %p44 = por %p42, %p43
      %p45 = scmp.ne.s32.totalorder %s34, %s37
      %p46 = scmp.eq.s32.totalorder %s29, 1
      %p47 = por %p45, %p46
      %p48 = scmp.ne.s32.totalorder %s37, %s38
      %p49 = scmp.eq.s32.totalorder %s29, 0
      %p50 = por %p48, %p49
      %p51 = scmp.ne.s32.totalorder %s37, %s38
      %p52 = scmp.eq.s32.totalorder %s30, 1
      %p53 = por %p51, %p52
      %p55 = scmp.ne.s32.totalorder %s38, %s54
      %p56 = scmp.eq.s32.totalorder %s30, 0
      %p57 = por %p55, %p56
      %s58 = ssub.s32 %s24, %s31
      %p59 = scmp.eq.s32.totalorder %s58, 0
      %s61 = sadd.s32 %s60, 1
      %s62 = scalar_select %p59, %s60, %s61
      %p65 = pneg %p59
      %p66 = scmp.eq.s32.totalorder %s24, 1
      %p67 = por %p65, %p66
      %p68 = scmp.ne.s32.totalorder %s60, %s63
      %p69 = scmp.eq.s32.totalorder %s24, 0
      %p70 = por %p68, %p69
      %p71 = scmp.ne.s32.totalorder %s60, %s63
      %p72 = scmp.eq.s32.totalorder %s29, 1
      %p73 = por %p71, %p72
      %p74 = scmp.ne.s32.totalorder %s63, %s64
      %p75 = scmp.eq.s32.totalorder %s29, 0
      %p76 = por %p74, %p75
      %p77 = scmp.ne.s32.totalorder %s63, %s64
      %p78 = scmp.eq.s32.totalorder %s30, 1
      %p79 = por %p77, %p78
      %p81 = scmp.ne.s32.totalorder %s64, %s80
      %p82 = scmp.eq.s32.totalorder %s30, 0
      %p83 = por %p81, %p82
      %s85 = sadd.s32 %s84, 1
      %p88 = scmp.eq.s32.totalorder %s24, 1
      %p89 = scmp.ne.s32.totalorder %s84, %s86
      %p90 = scmp.eq.s32.totalorder %s24, 0
      %p91 = por %p89, %p90
      %p92 = scmp.ne.s32.totalorder %s84, %s86
      %p93 = scmp.eq.s32.totalorder %s29, 1
      %p94 = por %p92, %p93
      %p95 = scmp.ne.s32.totalorder %s86, %s87
      %p96 = scmp.eq.s32.totalorder %s29, 0
      %p97 = por %p95, %p96
      %p98 = scmp.ne.s32.totalorder %s86, %s87
      %p99 = scmp.eq.s32.totalorder %s30, 1
      %p100 = por %p98, %p99
      %p102 = scmp.ne.s32.totalorder %s87, %s101
      %p103 = scmp.eq.s32.totalorder %s30, 0
      %p104 = por %p102, %p103
      %s106 = sadd.s32 %s105, 1
      %p109 = scmp.eq.s32.totalorder %s24, 1
      %p110 = scmp.ne.s32.totalorder %s105, %s107
      %p111 = scmp.eq.s32.totalorder %s24, 0
      %p112 = por %p110, %p111
      %p113 = scmp.ne.s32.totalorder %s105, %s107
      %p114 = scmp.eq.s32.totalorder %s29, 1
      %p115 = por %p113, %p114
      %p116 = scmp.ne.s32.totalorder %s107, %s108
      %p117 = scmp.eq.s32.totalorder %s29, 0
      %p118 = por %p116, %p117
      %p119 = scmp.ne.s32.totalorder %s107, %s108
      %p120 = scmp.eq.s32.totalorder %s30, 1
      %p121 = por %p119, %p120
      %p123 = scmp.ne.s32.totalorder %s108, %s122
      %p124 = scmp.eq.s32.totalorder %s30, 0
      %p125 = por %p123, %p124
      %s127 = sadd.s32 %s126, 1
      %p130 = scmp.eq.s32.totalorder %s24, 1
      %p131 = scmp.ne.s32.totalorder %s126, %s128
      %p132 = scmp.eq.s32.totalorder %s24, 0
      %p133 = por %p131, %p132
      %p134 = scmp.ne.s32.totalorder %s126, %s128
      %p135 = scmp.eq.s32.totalorder %s29, 1
      %p136 = por %p134, %p135
      %p137 = scmp.ne.s32.totalorder %s128, %s129
      %p138 = scmp.eq.s32.totalorder %s29, 0
      %p139 = por %p137, %p138
      %p140 = scmp.ne.s32.totalorder %s128, %s129
      %p141 = scmp.eq.s32.totalorder %s30, 1
      %p142 = por %p140, %p141
      %p144 = scmp.ne.s32.totalorder %s129, %s143
      %p145 = scmp.eq.s32.totalorder %s30, 0
      %p146 = por %p144, %p145
      %s148 = sadd.s32 %s147, 1
      %p151 = scmp.eq.s32.totalorder %s24, 1
      %p152 = scmp.ne.s32.totalorder %s147, %s149
      %p153 = scmp.eq.s32.totalorder %s24, 0
      %p154 = por %p152, %p153
      %p155 = scmp.ne.s32.totalorder %s147, %s149
      %p156 = scmp.eq.s32.totalorder %s29, 1
      %p157 = por %p155, %p156
      %p158 = scmp.ne.s32.totalorder %s149, %s150
      %p159 = scmp.eq.s32.totalorder %s29, 0
      %p160 = por %p158, %p159
      %p161 = scmp.ne.s32.totalorder %s149, %s150
      %p162 = scmp.eq.s32.totalorder %s30, 1
      %p163 = por %p161, %p162
      %p165 = scmp.ne.s32.totalorder %s150, %s164
      %p166 = scmp.eq.s32.totalorder %s30, 0
      %p167 = por %p165, %p166
      %s169 = sadd.s32 %s168, 1
      %p172 = scmp.eq.s32.totalorder %s24, 1
      %p173 = scmp.ne.s32.totalorder %s168, %s170
      %p174 = scmp.eq.s32.totalorder %s24, 0
      %p175 = por %p173, %p174
      %p176 = scmp.ne.s32.totalorder %s168, %s170
      %p177 = scmp.eq.s32.totalorder %s29, 1
      %p178 = por %p176, %p177
      %p179 = scmp.ne.s32.totalorder %s170, %s171
      %p180 = scmp.eq.s32.totalorder %s29, 0
      %p181 = por %p179, %p180
      %p182 = scmp.ne.s32.totalorder %s170, %s171
      %p183 = scmp.eq.s32.totalorder %s30, 1
      %p184 = por %p182, %p183
      %p186 = scmp.ne.s32.totalorder %s171, %s185
      %p187 = scmp.eq.s32.totalorder %s30, 0
      %p188 = por %p186, %p187
      %s190 = sadd.s32 %s189, 1
      %p193 = scmp.eq.s32.totalorder %s24, 1
      %p194 = scmp.ne.s32.totalorder %s189, %s191
      %p195 = scmp.eq.s32.totalorder %s24, 0
      %p196 = por %p194, %p195
      %p197 = scmp.ne.s32.totalorder %s189, %s191
      %p198 = scmp.eq.s32.totalorder %s29, 1
      %p199 = por %p197, %p198
      %p200 = scmp.ne.s32.totalorder %s191, %s192
      %p201 = scmp.eq.s32.totalorder %s29, 0
      %p202 = por %p200, %p201
      %p203 = scmp.ne.s32.totalorder %s191, %s192
      %p204 = scmp.eq.s32.totalorder %s30, 1
      %p205 = por %p203, %p204
      %p207 = scmp.ne.s32.totalorder %s192, %s206
      %p208 = scmp.eq.s32.totalorder %s30, 0
      %p209 = por %p207, %p208
      %s211 = sadd.s32 %s210, 1
      %p214 = scmp.eq.s32.totalorder %s24, 1
      %p215 = scmp.ne.s32.totalorder %s210, %s212
      %p216 = scmp.eq.s32.totalorder %s24, 0
      %p217 = por %p215, %p216
      %p218 = scmp.ne.s32.totalorder %s210, %s212
      %p219 = scmp.eq.s32.totalorder %s29, 1
      %p220 = por %p218, %p219
      %p221 = scmp.ne.s32.totalorder %s212, %s213
      %p222 = scmp.eq.s32.totalorder %s29, 0
      %p223 = por %p221, %p222
      %p224 = scmp.ne.s32.totalorder %s212, %s213
      %p225 = scmp.eq.s32.totalorder %s30, 1
      %p226 = por %p224, %p225
      %p228 = scmp.ne.s32.totalorder %s213, %s227
      %p229 = scmp.eq.s32.totalorder %s30, 0
      %p230 = por %p228, %p229
      %s232 = sadd.s32 %s231, 1
      %p235 = scmp.eq.s32.totalorder %s24, 1
      %p236 = scmp.ne.s32.totalorder %s231, %s233
      %p237 = scmp.eq.s32.totalorder %s24, 0
      %p238 = por %p236, %p237
      %p239 = scmp.ne.s32.totalorder %s231, %s233
      %p240 = scmp.eq.s32.totalorder %s29, 1
      %p241 = por %p239, %p240
      %p242 = scmp.ne.s32.totalorder %s233, %s234
      %p243 = scmp.eq.s32.totalorder %s29, 0
      %p244 = por %p242, %p243
      %p245 = scmp.ne.s32.totalorder %s233, %s234
      %p246 = scmp.eq.s32.totalorder %s30, 1
      %p247 = por %p245, %p246
      %p249 = scmp.ne.s32.totalorder %s234, %s248
      %p250 = scmp.eq.s32.totalorder %s30, 0
      %p251 = por %p249, %p250
      %s253 = sadd.s32 %s252, 1
      %p256 = scmp.eq.s32.totalorder %s24, 1
      %p257 = scmp.ne.s32.totalorder %s252, %s254
      %p258 = scmp.eq.s32.totalorder %s24, 0
      %p259 = por %p257, %p258
      %p260 = scmp.ne.s32.totalorder %s252, %s254
      %p261 = scmp.eq.s32.totalorder %s29, 1
      %p262 = por %p260, %p261
      %p263 = scmp.ne.s32.totalorder %s254, %s255
      %p264 = scmp.eq.s32.totalorder %s29, 0
      %p265 = por %p263, %p264
      %p266 = scmp.ne.s32.totalorder %s254, %s255
      %p267 = scmp.eq.s32.totalorder %s30, 1
      %p268 = por %p266, %p267
      %p270 = scmp.ne.s32.totalorder %s255, %s269
      %p271 = scmp.eq.s32.totalorder %s30, 0
      %p272 = por %p270, %p271
      %s273 = ssub.s32 %s24, %s31
      %p274 = scmp.eq.s32.totalorder %s273, 0
      %s276 = sadd.s32 %s275, 1
      %s277 = scalar_select %p274, %s275, %s276
      %p280 = pneg %p274
      %p281 = scmp.eq.s32.totalorder %s24, 1
      %p282 = por %p280, %p281
      %p283 = scmp.ne.s32.totalorder %s275, %s278
      %p284 = scmp.eq.s32.totalorder %s24, 0
      %p285 = por %p283, %p284
      %p286 = scmp.ne.s32.totalorder %s275, %s278
      %p287 = scmp.eq.s32.totalorder %s29, 1
      %p288 = por %p286, %p287
      %p289 = scmp.ne.s32.totalorder %s278, %s279
      %p290 = scmp.eq.s32.totalorder %s29, 0
      %p291 = por %p289, %p290
      %p292 = scmp.ne.s32.totalorder %s278, %s279
      %p293 = scmp.eq.s32.totalorder %s30, 1
      %p294 = por %p292, %p293
      %p296 = scmp.ne.s32.totalorder %s279, %s295
      %p297 = scmp.eq.s32.totalorder %s30, 0
      %p298 = por %p296, %p297
      %p299 = scmp.le.s32.totalorder 1, %s24
      %p300 = scmp.lt.s32.totalorder %s24, 3
      %p301 = pnand %p299, %p300
      %p302 = pneg %p301
      // Predicated region
      $region9: #{lednet_decoder_forward.1} parent=5 // pred_check
        _
      $region10: #{lednet_decoder_forward.1} parent=5 // pred_check_branch
        %304 = sbr.rel (%p301) target = $region12
      $region11: #{lednet_decoder_forward.1} parent=5 // pred_region
        %s305 = ssub.s32 %s24, 1
        // Predicated region
        $region13: #{lednet_decoder_forward.1} parent=11 // pred_check
          %p306 = pneg %p97
        $region14: #{lednet_decoder_forward.1} parent=11 // pred_check_branch
          %308 = sbr.rel (%p306) target = $region16
        $region15: #{lednet_decoder_forward.1} parent=11 // pred_region
          _
        $region16: #{lednet_decoder_forward.1} parent=11 // pred_fallthru
          _
        // Predicated region
        $region17: #{lednet_decoder_forward.1} parent=11 // pred_check
          %p309 = pneg %p118
        $region18: #{lednet_decoder_forward.1} parent=11 // pred_check_branch
          %311 = sbr.rel (%p309) target = $region20
        $region19: #{lednet_decoder_forward.1} parent=11 // pred_region
          _
        $region20: #{lednet_decoder_forward.1} parent=11 // pred_fallthru
          _
        // Predicated region
        $region21: #{lednet_decoder_forward.1} parent=11 // pred_check
          %p312 = pneg %p139
        $region22: #{lednet_decoder_forward.1} parent=11 // pred_check_branch
          %314 = sbr.rel (%p312) target = $region24
        $region23: #{lednet_decoder_forward.1} parent=11 // pred_region
          %316 = vsyncadd [#allocation3], 0
          %s318 = sshll.u32 %s4, 4
          %s319 = int_to_ptr.hbm [resolvable:$true] %s318
          %s320 = sshll.u32 [#allocation2], 4
          %s321 = int_to_ptr.vmem [resolvable:$true] %s320
          %323 = dma.hbm_to_vmem [thread:$0]  %s319, 128, %s321, [#allocation3]
        $region24: #{lednet_decoder_forward.1} parent=11 // pred_fallthru
          _
        // Predicated region
        $region25: #{lednet_decoder_forward.1} parent=11 // pred_check
          %p324 = pneg %p160
        $region26: #{lednet_decoder_forward.1} parent=11 // pred_check_branch
          %326 = sbr.rel (%p324) target = $region28
        $region27: #{lednet_decoder_forward.1} parent=11 // pred_region
          %328 = vsyncadd [#allocation6], 0
          %s329 = sshll.u32 %s5, 4
          %s330 = int_to_ptr.hbm [resolvable:$true] %s329
          %s331 = sshll.u32 [#allocation5], 4
          %s332 = int_to_ptr.vmem [resolvable:$true] %s331
          %337 = dma.hbm_to_vmem [thread:$0]  %s330, 1024, %s332, [#allocation6], 128, 128, 8
        $region28: #{lednet_decoder_forward.1} parent=11 // pred_fallthru
          _
        // Predicated region
        $region29: #{lednet_decoder_forward.1} parent=11 // pred_check
          %p338 = pneg %p181
        $region30: #{lednet_decoder_forward.1} parent=11 // pred_check_branch
          %340 = sbr.rel (%p338) target = $region32
        $region31: #{lednet_decoder_forward.1} parent=11 // pred_region
          %342 = vsyncadd [#allocation6], 0
          %s343 = sshll.u32 %s6, 4
          %s344 = int_to_ptr.hbm [resolvable:$true] %s343
          %s345 = sshll.u32 [#allocation7], 4
          %s346 = int_to_ptr.vmem [resolvable:$true] %s345
          %351 = dma.hbm_to_vmem [thread:$0]  %s344, 256, %s346, [#allocation6], 128, 128, 8
        $region32: #{lednet_decoder_forward.1} parent=11 // pred_fallthru
          _
        // Predicated region
        $region33: #{lednet_decoder_forward.1} parent=11 // pred_check
          %p352 = pneg %p202
        $region34: #{lednet_decoder_forward.1} parent=11 // pred_check_branch
          %354 = sbr.rel (%p352) target = $region36
        $region35: #{lednet_decoder_forward.1} parent=11 // pred_region
          %356 = vsyncadd [#allocation9], 0
          %s357 = sshll.u32 %s7, 4
          %s358 = int_to_ptr.hbm [resolvable:$true] %s357
          %s359 = sshll.u32 [#allocation8], 4
          %s360 = int_to_ptr.vmem [resolvable:$true] %s359
          %365 = dma.hbm_to_vmem [thread:$0]  %s358, 2048, %s360, [#allocation9], 256, 256, 16
        $region36: #{lednet_decoder_forward.1} parent=11 // pred_fallthru
          _
        // Predicated region
        $region37: #{lednet_decoder_forward.1} parent=11 // pred_check
          %p366 = pneg %p223
        $region38: #{lednet_decoder_forward.1} parent=11 // pred_check_branch
          %368 = sbr.rel (%p366) target = $region40
        $region39: #{lednet_decoder_forward.1} parent=11 // pred_region
          %370 = vsyncadd [#allocation9], 0
          %s372 = sshll.u32 %s8, 4
          %s373 = int_to_ptr.hbm [resolvable:$true] %s372
          %s374 = sshll.u32 [#allocation10], 4
          %s375 = int_to_ptr.vmem [resolvable:$true] %s374
          %377 = dma.hbm_to_vmem [thread:$0]  %s373, 128, %s375, [#allocation9]
        $region40: #{lednet_decoder_forward.1} parent=11 // pred_fallthru
          _
        // Predicated region
        $region41: #{lednet_decoder_forward.1} parent=11 // pred_check
          %p378 = pneg %p244
        $region42: #{lednet_decoder_forward.1} parent=11 // pred_check_branch
          %380 = sbr.rel (%p378) target = $region44
        $region43: #{lednet_decoder_forward.1} parent=11 // pred_region
          %382 = vsyncadd [#allocation12], 0
          %s383 = sshll.u32 %s9, 4
          %s384 = int_to_ptr.hbm [resolvable:$true] %s383
          %s385 = sshll.u32 [#allocation11], 4
          %s386 = int_to_ptr.vmem [resolvable:$true] %s385
          %391 = dma.hbm_to_vmem [thread:$0]  %s384, 65536, %s386, [#allocation12], 2048, 2048, 128
        $region44: #{lednet_decoder_forward.1} parent=11 // pred_fallthru
          _
        // Predicated region
        $region45: #{lednet_decoder_forward.1} parent=11 // pred_check
          %p392 = pneg %p265
        $region46: #{lednet_decoder_forward.1} parent=11 // pred_check_branch
          %394 = sbr.rel (%p392) target = $region48
        $region47: #{lednet_decoder_forward.1} parent=11 // pred_region
          %396 = vsyncadd [#allocation12], 0
          %s397 = sshll.u32 %s10, 4
          %s398 = int_to_ptr.hbm [resolvable:$true] %s397
          %s399 = sshll.u32 [#allocation13], 4
          %s400 = int_to_ptr.vmem [resolvable:$true] %s399
          %405 = dma.hbm_to_vmem [thread:$0]  %s398, 16384, %s400, [#allocation12], 128, 128, 8
        $region48: #{lednet_decoder_forward.1} parent=11 // pred_fallthru
          _
      $region12: #{lednet_decoder_forward.1} parent=5 // pred_fallthru
        _
      %p406 = scmp.lt.s32.totalorder %s24, 2
      // Predicated region
      $region49: #{lednet_decoder_forward.1} parent=5 // pred_check
        %p407 = pneg %p406
      $region50: #{lednet_decoder_forward.1} parent=5 // pred_check_branch
        %409 = sbr.rel (%p407) target = $region52
      $region51: #{lednet_decoder_forward.1} parent=5 // pred_region
        // Predicated region
        $region53: #{lednet_decoder_forward.1} parent=51 // pred_check
          %p410 = pneg %p44
        $region54: #{lednet_decoder_forward.1} parent=51 // pred_check_branch
          %412 = sbr.rel (%p410) target = $region56
        $region55: #{lednet_decoder_forward.1} parent=51 // pred_region
          %p413 = scmp.lt.s32.totalorder %s24, 1
          %s414 = scalar_select %p413, %s24, 1
          %s415 = smul.addr %s414, 8
          %s416 = scalar_lea.vmem %s0, %s415
        $region56: #{lednet_decoder_forward.1} parent=51 // pred_fallthru
          _
        // Predicated region
        $region57: #{lednet_decoder_forward.1} parent=51 // pred_check
          %p417 = pneg %p70
        $region58: #{lednet_decoder_forward.1} parent=51 // pred_check_branch
          %419 = sbr.rel (%p417) target = $region60
        $region59: #{lednet_decoder_forward.1} parent=51 // pred_region
          %p420 = scmp.lt.s32.totalorder %s24, 1
          %s421 = scalar_select %p420, %s24, 1
          %s422 = smul.addr %s421, 2
          %s423 = smul.addr %s422, 4
          %s424 = scalar_lea.vmem %s1, %s423
        $region60: #{lednet_decoder_forward.1} parent=51 // pred_fallthru
          _
      $region52: #{lednet_decoder_forward.1} parent=5 // pred_fallthru
        _
      %p425 = scmp.le.s32.totalorder 1, %s24
      %p426 = scmp.lt.s32.totalorder %s24, 3
      %p427 = pnand %p425, %p426
      %p428 = pneg %p427
      // Predicated region
      $region61: #{lednet_decoder_forward.1} parent=5 // pred_check
        _
      $region62: #{lednet_decoder_forward.1} parent=5 // pred_check_branch
        %430 = sbr.rel (%p427) target = $region64
      $region63: #{lednet_decoder_forward.1} parent=5 // pred_region
        %s431 = ssub.s32 %s24, 1
        // Predicated region
        $region65: #{lednet_decoder_forward.1} parent=63 // pred_check
          %p432 = pneg %p139
        $region66: #{lednet_decoder_forward.1} parent=63 // pred_check_branch
          %434 = sbr.rel (%p432) target = $region68
        $region67: #{lednet_decoder_forward.1} parent=63 // pred_region
          %436 = dma.done [#allocation3], 128
        $region68: #{lednet_decoder_forward.1} parent=63 // pred_fallthru
          _
        // Predicated region
        $region69: #{lednet_decoder_forward.1} parent=63 // pred_check
          %p437 = pneg %p160
        $region70: #{lednet_decoder_forward.1} parent=63 // pred_check_branch
          %439 = sbr.rel (%p437) target = $region72
        $region71: #{lednet_decoder_forward.1} parent=63 // pred_region
          %441 = dma.done [#allocation6], 1024
        $region72: #{lednet_decoder_forward.1} parent=63 // pred_fallthru
          _
        // Predicated region
        $region73: #{lednet_decoder_forward.1} parent=63 // pred_check
          %p442 = pneg %p181
        $region74: #{lednet_decoder_forward.1} parent=63 // pred_check_branch
          %444 = sbr.rel (%p442) target = $region76
        $region75: #{lednet_decoder_forward.1} parent=63 // pred_region
          %446 = dma.done [#allocation6], 256
        $region76: #{lednet_decoder_forward.1} parent=63 // pred_fallthru
          _
        // Predicated region
        $region77: #{lednet_decoder_forward.1} parent=63 // pred_check
          %p447 = pneg %p202
        $region78: #{lednet_decoder_forward.1} parent=63 // pred_check_branch
          %449 = sbr.rel (%p447) target = $region80
        $region79: #{lednet_decoder_forward.1} parent=63 // pred_region
          %451 = dma.done [#allocation9], 2048
        $region80: #{lednet_decoder_forward.1} parent=63 // pred_fallthru
          _
        // Predicated region
        $region81: #{lednet_decoder_forward.1} parent=63 // pred_check
          %p452 = pneg %p223
        $region82: #{lednet_decoder_forward.1} parent=63 // pred_check_branch
          %454 = sbr.rel (%p452) target = $region84
        $region83: #{lednet_decoder_forward.1} parent=63 // pred_region
          %456 = dma.done [#allocation9], 128
        $region84: #{lednet_decoder_forward.1} parent=63 // pred_fallthru
          _
        // Predicated region
        $region85: #{lednet_decoder_forward.1} parent=63 // pred_check
          %p457 = pneg %p244
        $region86: #{lednet_decoder_forward.1} parent=63 // pred_check_branch
          %459 = sbr.rel (%p457) target = $region88
        $region87: #{lednet_decoder_forward.1} parent=63 // pred_region
          %461 = dma.done [#allocation12], 65536
        $region88: #{lednet_decoder_forward.1} parent=63 // pred_fallthru
          _
        // Predicated region
        $region89: #{lednet_decoder_forward.1} parent=63 // pred_check
          %p462 = pneg %p265
        $region90: #{lednet_decoder_forward.1} parent=63 // pred_check_branch
          %464 = sbr.rel (%p462) target = $region92
        $region91: #{lednet_decoder_forward.1} parent=63 // pred_region
          %466 = dma.done [#allocation12], 16384
        $region92: #{lednet_decoder_forward.1} parent=63 // pred_fallthru
          _
        %p467 = scmp.lt.s32.totalorder %s29, 1
        %s468 = scalar_select %p467, %s29, 1
        %s469 = smul.addr %s468, 8
        %s470 = scalar_lea.vmem %s0, %s469
        %p471 = pneg %p50
        %p472 = pneg %p47
        %p473 = scmp.lt.s32.totalorder %s29, 1
        %s474 = scalar_select %p473, %s29, 1
        %s475 = smul.addr %s474, 2
        %s476 = smul.addr %s475, 4
        %s477 = scalar_lea.vmem %s1, %s476
        %p478 = pneg %p76
        %p479 = pneg %p73
        %p480 = pneg %p97
        %p481 = pneg %p94
        %p482 = pneg %p118
        %p483 = pneg %p115
        %p484 = pneg %p139
        %p485 = pneg %p136
        %p486 = pneg %p160
        %p487 = pneg %p157
        %p488 = pneg %p181
        %p489 = pneg %p178
        %p490 = pneg %p202
        %p491 = pneg %p199
        %p492 = pneg %p223
        %p493 = pneg %p220
        %p494 = pneg %p244
        %p495 = pneg %p241
        %p496 = pneg %p265
        %p497 = pneg %p262
        %p498 = pneg %p291
        %p499 = pneg %p288
        %s500 = sand.u32 %s278, 1
        %s501 = scalar_lea.sflag [#allocation4], %s500
        %s502 = sand.u32 %s278, 1
        %s503 = smul.addr %s502, 1024
        %s504 = scalar_lea.vmem [#allocation14], %s503
        %p505 = scmp.lt.s32.totalorder %s29, 1
        %s506 = scalar_select %p505, %s29, 1
        %s507 = smul.addr %s506, 8
        %s508 = scalar_lea.vmem %s0, %s507
        %p509 = scmp.lt.s32.totalorder %s29, 1
        %s510 = scalar_select %p509, %s29, 1
        %s511 = smul.addr %s510, 2
        %s512 = smul.addr %s511, 4
        %s513 = scalar_lea.vmem %s1, %s512
        %v514 = vld [vmem:[%s508] sm:$0xff]
        %v515 = vld [vmem:[%s513] sm:$0xff]
        %v516 = vld [vmem:[%s3] sm:$0xff]
        %v517 = vld [vmem:[%s3 + $0x8] sm:$0xff]
        %v518 = vld [vmem:[%s3 + $0x10] sm:$0xff]
        %v519 = vld [vmem:[%s3 + $0x18] sm:$0xff]
        %v520 = vld [vmem:[%s3 + $0x20] sm:$0xff]
        %v521 = vld [vmem:[%s3 + $0x28] sm:$0xff]
        %v522 = vld [vmem:[%s3 + $0x30] sm:$0xff]
        %v523 = vld [vmem:[%s3 + $0x38] sm:$0xff]
        %s524 = scalar_lea.vmem %s3, 64
        %v525 = vld [vmem:[%s524] sm:$0xff]
        %v526 = vld [vmem:[%s524 + $0x8] sm:$0xff]
        %s527 = scalar_lea.vmem %s3, 128
        %v528 = vld [vmem:[%s527] sm:$0xf]
        %s529 = scalar_lea.vmem %s3, 192
        %v530 = vld [vmem:[%s529] sm:$0xff]
        %v531 = vld [vmem:[%s529 + $0x8] sm:$0xff]
        %s532 = scalar_lea.vmem %s3, 256
        %v533 = vld [vmem:[%s532] sm:$0xf]
        %v534 = vld [vmem:[#allocation2] sm:$0x1]
        %v535 = vld [vmem:[#allocation2 + $0x5] sm:$0x1]
        %v536 = vld [vmem:[#allocation2 + $0x1] sm:$0x1]
        %v537 = vld [vmem:[#allocation2 + $0x4] sm:$0x1]
        %v538 = vld [vmem:[#allocation2 + $0x2] sm:$0x1]
        %v539 = vld [vmem:[#allocation2 + $0x3] sm:$0x1]
        %v540 = vld [vmem:[#allocation10] sm:$0xff]
        %v541 = vld [vmem:[%s2] sm:$0xff]
        %v542 = vld [vmem:[%s2 + $0x8] sm:$0xff]
        %v543 = vld [vmem:[%s2 + $0x10] sm:$0xff]
        %v544 = vld [vmem:[%s2 + $0x18] sm:$0xff]
        %v545 = vld [vmem:[%s2 + $0x20] sm:$0xff]
        %v546 = vld [vmem:[%s2 + $0x28] sm:$0xff]
        %v547 = vld [vmem:[%s2 + $0x30] sm:$0xff]
        %v548 = vld [vmem:[%s2 + $0x38] sm:$0xff]
        %v549 = vld [vmem:[%s2 + $0x40] sm:$0xff]
        %v550 = vld [vmem:[%s2 + $0x48] sm:$0xff]
        %v551 = vld [vmem:[%s2 + $0x50] sm:$0xff]
        %v552 = vld [vmem:[%s2 + $0x58] sm:$0xff]
        %v553 = vld [vmem:[%s2 + $0x60] sm:$0xff]
        %v554 = vld [vmem:[%s2 + $0x68] sm:$0xff]
        %v555 = vld [vmem:[%s2 + $0x70] sm:$0xff]
        %v556 = vld [vmem:[%s2 + $0x78] sm:$0xff]
        %v557 = vld [vmem:[%s2 + $0x80] sm:$0xff]
        %v558 = vld [vmem:[%s2 + $0x88] sm:$0xff]
        %v559 = vld [vmem:[%s2 + $0x90] sm:$0xff]
        %v560 = vld [vmem:[%s2 + $0x98] sm:$0xff]
        %v561 = vld [vmem:[%s2 + $0xa0] sm:$0xff]
        %v562 = vld [vmem:[%s2 + $0xa8] sm:$0xff]
        %v563 = vld [vmem:[%s2 + $0xb0] sm:$0xff]
        %v564 = vld [vmem:[%s2 + $0xb8] sm:$0xff]
        %v565 = vld [vmem:[%s2 + $0xc0] sm:$0xff]
        %v566 = vld [vmem:[%s2 + $0xc8] sm:$0xff]
        %v567 = vld [vmem:[%s2 + $0xd0] sm:$0xff]
        %v568 = vld [vmem:[%s2 + $0xd8] sm:$0xff]
        %v569 = vld [vmem:[%s2 + $0xe0] sm:$0xff]
        %v570 = vld [vmem:[%s2 + $0xe8] sm:$0xff]
        %v571 = vld [vmem:[%s2 + $0xf0] sm:$0xff]
        %v572 = vld [vmem:[%s2 + $0xf8] sm:$0xff]
        %v573 = vld [vmem:[%s2 + $0x100] sm:$0xff]
        %v574 = vld [vmem:[%s2 + $0x108] sm:$0xff]
        %v575 = vld [vmem:[%s2 + $0x110] sm:$0xff]
        %v576 = vld [vmem:[%s2 + $0x118] sm:$0xff]
        %v577 = vld [vmem:[%s2 + $0x120] sm:$0xff]
        %v578 = vld [vmem:[%s2 + $0x128] sm:$0xff]
        %v579 = vld [vmem:[%s2 + $0x130] sm:$0xff]
        %v580 = vld [vmem:[%s2 + $0x138] sm:$0xff]
        %v581 = vld [vmem:[%s2 + $0x140] sm:$0xff]
        %v582 = vld [vmem:[%s2 + $0x148] sm:$0xff]
        %v583 = vld [vmem:[%s2 + $0x150] sm:$0xff]
        %v584 = vld [vmem:[%s2 + $0x158] sm:$0xff]
        %v585 = vld [vmem:[%s2 + $0x160] sm:$0xff]
        %v586 = vld [vmem:[%s2 + $0x168] sm:$0xff]
        %v587 = vld [vmem:[%s2 + $0x170] sm:$0xff]
        %v588 = vld [vmem:[%s2 + $0x178] sm:$0xff]
        %v589 = vld [vmem:[%s2 + $0x180] sm:$0xff]
        %v590 = vld [vmem:[%s2 + $0x188] sm:$0xff]
        %v591 = vld [vmem:[%s2 + $0x190] sm:$0xff]
        %v592 = vld [vmem:[%s2 + $0x198] sm:$0xff]
        %v593 = vld [vmem:[%s2 + $0x1a0] sm:$0xff]
        %v594 = vld [vmem:[%s2 + $0x1a8] sm:$0xff]
        %v595 = vld [vmem:[%s2 + $0x1b0] sm:$0xff]
        %v596 = vld [vmem:[%s2 + $0x1b8] sm:$0xff]
        %v597 = vld [vmem:[%s2 + $0x1c0] sm:$0xff]
        %v598 = vld [vmem:[%s2 + $0x1c8] sm:$0xff]
        %v599 = vld [vmem:[%s2 + $0x1d0] sm:$0xff]
        %v600 = vld [vmem:[%s2 + $0x1d8] sm:$0xff]
        %v601 = vld [vmem:[%s2 + $0x1e0] sm:$0xff]
        %v602 = vld [vmem:[%s2 + $0x1e8] sm:$0xff]
        %v603 = vld [vmem:[%s2 + $0x1f0] sm:$0xff]
        %v604 = vld [vmem:[%s2 + $0x1f8] sm:$0xff]
        %v605 = vld [vmem:[%s2 + $0x200] sm:$0xff]
        %v606 = vld [vmem:[%s2 + $0x208] sm:$0xff]
        %v607 = vld [vmem:[%s2 + $0x210] sm:$0xff]
        %v608 = vld [vmem:[%s2 + $0x218] sm:$0xff]
        %v609 = vld [vmem:[%s2 + $0x220] sm:$0xff]
        %v610 = vld [vmem:[%s2 + $0x228] sm:$0xff]
        %v611 = vld [vmem:[%s2 + $0x230] sm:$0xff]
        %v612 = vld [vmem:[%s2 + $0x238] sm:$0xff]
        %v613 = vld [vmem:[%s2 + $0x240] sm:$0xff]
        %v614 = vld [vmem:[%s2 + $0x248] sm:$0xff]
        %v615 = vld [vmem:[%s2 + $0x250] sm:$0xff]
        %v616 = vld [vmem:[%s2 + $0x258] sm:$0xff]
        %v617 = vld [vmem:[%s2 + $0x260] sm:$0xff]
        %v618 = vld [vmem:[%s2 + $0x268] sm:$0xff]
        %v619 = vld [vmem:[%s2 + $0x270] sm:$0xff]
        %v620 = vld [vmem:[%s2 + $0x278] sm:$0xff]
        %v621 = vld [vmem:[%s2 + $0x280] sm:$0xff]
        %v622 = vld [vmem:[%s2 + $0x288] sm:$0xff]
        %v623 = vld [vmem:[%s2 + $0x290] sm:$0xff]
        %v624 = vld [vmem:[%s2 + $0x298] sm:$0xff]
        %v625 = vld [vmem:[%s2 + $0x2a0] sm:$0xff]
        %v626 = vld [vmem:[%s2 + $0x2a8] sm:$0xff]
        %v627 = vld [vmem:[%s2 + $0x2b0] sm:$0xff]
        %v628 = vld [vmem:[%s2 + $0x2b8] sm:$0xff]
        %v629 = vld [vmem:[%s2 + $0x2c0] sm:$0xff]
        %v630 = vld [vmem:[%s2 + $0x2c8] sm:$0xff]
        %v631 = vld [vmem:[%s2 + $0x2d0] sm:$0xff]
        %v632 = vld [vmem:[%s2 + $0x2d8] sm:$0xff]
        %v633 = vld [vmem:[%s2 + $0x2e0] sm:$0xff]
        %v634 = vld [vmem:[%s2 + $0x2e8] sm:$0xff]
        %v635 = vld [vmem:[%s2 + $0x2f0] sm:$0xff]
        %v636 = vld [vmem:[%s2 + $0x2f8] sm:$0xff]
        %v637 = vld [vmem:[%s2 + $0x300] sm:$0xff]
        %v638 = vld [vmem:[%s2 + $0x308] sm:$0xff]
        %v639 = vld [vmem:[%s2 + $0x310] sm:$0xff]
        %v640 = vld [vmem:[%s2 + $0x318] sm:$0xff]
        %v641 = vld [vmem:[%s2 + $0x320] sm:$0xff]
        %v642 = vld [vmem:[%s2 + $0x328] sm:$0xff]
        %v643 = vld [vmem:[%s2 + $0x330] sm:$0xff]
        %v644 = vld [vmem:[%s2 + $0x338] sm:$0xff]
        %v645 = vld [vmem:[%s2 + $0x340] sm:$0xff]
        %v646 = vld [vmem:[%s2 + $0x348] sm:$0xff]
        %v647 = vld [vmem:[%s2 + $0x350] sm:$0xff]
        %v648 = vld [vmem:[%s2 + $0x358] sm:$0xff]
        %v649 = vld [vmem:[%s2 + $0x360] sm:$0xff]
        %v650 = vld [vmem:[%s2 + $0x368] sm:$0xff]
        %v651 = vld [vmem:[%s2 + $0x370] sm:$0xff]
        %v652 = vld [vmem:[%s2 + $0x378] sm:$0xff]
        %v653 = vld [vmem:[%s2 + $0x380] sm:$0xff]
        %v654 = vld [vmem:[%s2 + $0x388] sm:$0xff]
        %v655 = vld [vmem:[%s2 + $0x390] sm:$0xff]
        %v656 = vld [vmem:[%s2 + $0x398] sm:$0xff]
        %v657 = vld [vmem:[%s2 + $0x3a0] sm:$0xff]
        %v658 = vld [vmem:[%s2 + $0x3a8] sm:$0xff]
        %v659 = vld [vmem:[%s2 + $0x3b0] sm:$0xff]
        %v660 = vld [vmem:[%s2 + $0x3b8] sm:$0xff]
        %v661 = vld [vmem:[%s2 + $0x3c0] sm:$0xff]
        %v662 = vld [vmem:[%s2 + $0x3c8] sm:$0xff]
        %v663 = vld [vmem:[%s2 + $0x3d0] sm:$0xff]
        %v664 = vld [vmem:[%s2 + $0x3d8] sm:$0xff]
        %v665 = vld [vmem:[%s2 + $0x3e0] sm:$0xff]
        %v666 = vld [vmem:[%s2 + $0x3e8] sm:$0xff]
        %v667 = vld [vmem:[%s2 + $0x3f0] sm:$0xff]
        %v668 = vld [vmem:[%s2 + $0x3f8] sm:$0xff]
        %v670 = vperm.slane %v514, 0
        %v671 = vperm.slane %v514, 1
        %v672 = vperm.slane %v514, 2
        %v673 = vperm.slane %v514, 3
        %v674 = vperm.slane %v514, 4
        %v675 = vperm.slane %v514, 5
        %v676 = vperm.slane %v514, 6
        %v677 = vperm.slane %v514, 7
        %686 = vmatpush.msra.mxu0 %v556
        %687 = vmatpush.msra.mxu0 %v555
        %688 = vmatpush.msra.mxu0 %v554
        %689 = vmatpush.msra.mxu0 %v553
        %690 = vmatpush.msra.mxu0 %v552
        %691 = vmatpush.msra.mxu0 %v551
        %692 = vmatpush.msra.mxu0 %v550
        %693 = vmatpush.msra.mxu0 %v549
        %694 = vmatpush.msra.mxu0 %v548
        %695 = vmatpush.msra.mxu0 %v547
        %696 = vmatpush.msra.mxu0 %v546
        %697 = vmatpush.msra.mxu0 %v545
        %698 = vmatpush.msra.mxu0 %v544
        %699 = vmatpush.msra.mxu0 %v543
        %700 = vmatpush.msra.mxu0 %v542
        %701 = vmatpush.msra.mxu0 %v541
        %702 = vmatmul.f32.gmra.mxu0 %v670
        %v703 = vpop.f32.mrf.mxu0
        %v704 = vadd.f32 %v534, %v703
        %705 = vdwg.mxu0
        %706 = vmatpush.msra.mxu0 %v572
        %707 = vmatpush.msra.mxu0 %v571
        %708 = vmatpush.msra.mxu0 %v570
        %709 = vmatpush.msra.mxu0 %v569
        %710 = vmatpush.msra.mxu0 %v568
        %711 = vmatpush.msra.mxu0 %v567
        %712 = vmatpush.msra.mxu0 %v566
        %713 = vmatpush.msra.mxu0 %v565
        %714 = vmatpush.msra.mxu0 %v564
        %715 = vmatpush.msra.mxu0 %v563
        %716 = vmatpush.msra.mxu0 %v562
        %717 = vmatpush.msra.mxu0 %v561
        %718 = vmatpush.msra.mxu0 %v560
        %719 = vmatpush.msra.mxu0 %v559
        %720 = vmatpush.msra.mxu0 %v558
        %721 = vmatpush.msra.mxu0 %v557
        %722 = vmatmul.f32.gmra.mxu0 %v671
        %v723 = vpop.f32.mrf.mxu0
        %v724 = vadd.f32 %v704, %v723
        %725 = vdwg.mxu0
        %726 = vmatpush.msra.mxu0 %v588
        %727 = vmatpush.msra.mxu0 %v587
        %728 = vmatpush.msra.mxu0 %v586
        %729 = vmatpush.msra.mxu0 %v585
        %730 = vmatpush.msra.mxu0 %v584
        %731 = vmatpush.msra.mxu0 %v583
        %732 = vmatpush.msra.mxu0 %v582
        %733 = vmatpush.msra.mxu0 %v581
        %734 = vmatpush.msra.mxu0 %v580
        %735 = vmatpush.msra.mxu0 %v579
        %736 = vmatpush.msra.mxu0 %v578
        %737 = vmatpush.msra.mxu0 %v577
        %738 = vmatpush.msra.mxu0 %v576
        %739 = vmatpush.msra.mxu0 %v575
        %740 = vmatpush.msra.mxu0 %v574
        %741 = vmatpush.msra.mxu0 %v573
        %742 = vmatmul.f32.gmra.mxu0 %v672
        %v743 = vpop.f32.mrf.mxu0
        %v744 = vadd.f32 %v724, %v743
        %745 = vdwg.mxu0
        %746 = vmatpush.msra.mxu0 %v604
        %747 = vmatpush.msra.mxu0 %v603
        %748 = vmatpush.msra.mxu0 %v602
        %749 = vmatpush.msra.mxu0 %v601
        %750 = vmatpush.msra.mxu0 %v600
        %751 = vmatpush.msra.mxu0 %v599
        %752 = vmatpush.msra.mxu0 %v598
        %753 = vmatpush.msra.mxu0 %v597
        %754 = vmatpush.msra.mxu0 %v596
        %755 = vmatpush.msra.mxu0 %v595
        %756 = vmatpush.msra.mxu0 %v594
        %757 = vmatpush.msra.mxu0 %v593
        %758 = vmatpush.msra.mxu0 %v592
        %759 = vmatpush.msra.mxu0 %v591
        %760 = vmatpush.msra.mxu0 %v590
        %761 = vmatpush.msra.mxu0 %v589
        %762 = vmatmul.f32.gmra.mxu0 %v673
        %v763 = vpop.f32.mrf.mxu0
        %v764 = vadd.f32 %v744, %v763
        %765 = vdwg.mxu0
        %766 = vmatpush.msra.mxu0 %v620
        %767 = vmatpush.msra.mxu0 %v619
        %768 = vmatpush.msra.mxu0 %v618
        %769 = vmatpush.msra.mxu0 %v617
        %770 = vmatpush.msra.mxu0 %v616
        %771 = vmatpush.msra.mxu0 %v615
        %772 = vmatpush.msra.mxu0 %v614
        %773 = vmatpush.msra.mxu0 %v613
        %774 = vmatpush.msra.mxu0 %v612
        %775 = vmatpush.msra.mxu0 %v611
        %776 = vmatpush.msra.mxu0 %v610
        %777 = vmatpush.msra.mxu0 %v609
        %778 = vmatpush.msra.mxu0 %v608
        %779 = vmatpush.msra.mxu0 %v607
        %780 = vmatpush.msra.mxu0 %v606
        %781 = vmatpush.msra.mxu0 %v605
        %782 = vmatmul.f32.gmra.mxu0 %v674
        %v783 = vpop.f32.mrf.mxu0
        %v784 = vadd.f32 %v764, %v783
        %785 = vdwg.mxu0
        %786 = vmatpush.msra.mxu0 %v636
        %787 = vmatpush.msra.mxu0 %v635
        %788 = vmatpush.msra.mxu0 %v634
        %789 = vmatpush.msra.mxu0 %v633
        %790 = vmatpush.msra.mxu0 %v632
        %791 = vmatpush.msra.mxu0 %v631
        %792 = vmatpush.msra.mxu0 %v630
        %793 = vmatpush.msra.mxu0 %v629
        %794 = vmatpush.msra.mxu0 %v628
        %795 = vmatpush.msra.mxu0 %v627
        %796 = vmatpush.msra.mxu0 %v626
        %797 = vmatpush.msra.mxu0 %v625
        %798 = vmatpush.msra.mxu0 %v624
        %799 = vmatpush.msra.mxu0 %v623
        %800 = vmatpush.msra.mxu0 %v622
        %801 = vmatpush.msra.mxu0 %v621
        %802 = vmatmul.f32.gmra.mxu0 %v675
        %v803 = vpop.f32.mrf.mxu0
        %v804 = vadd.f32 %v784, %v803
        %805 = vdwg.mxu0
        %806 = vmatpush.msra.mxu0 %v652
        %807 = vmatpush.msra.mxu0 %v651
        %808 = vmatpush.msra.mxu0 %v650
        %809 = vmatpush.msra.mxu0 %v649
        %810 = vmatpush.msra.mxu0 %v648
        %811 = vmatpush.msra.mxu0 %v647
        %812 = vmatpush.msra.mxu0 %v646
        %813 = vmatpush.msra.mxu0 %v645
        %814 = vmatpush.msra.mxu0 %v644
        %815 = vmatpush.msra.mxu0 %v643
        %816 = vmatpush.msra.mxu0 %v642
        %817 = vmatpush.msra.mxu0 %v641
        %818 = vmatpush.msra.mxu0 %v640
        %819 = vmatpush.msra.mxu0 %v639
        %820 = vmatpush.msra.mxu0 %v638
        %821 = vmatpush.msra.mxu0 %v637
        %822 = vmatmul.f32.gmra.mxu0 %v676
        %v823 = vpop.f32.mrf.mxu0
        %v824 = vadd.f32 %v804, %v823
        %825 = vdwg.mxu0
        %826 = vmatpush.msra.mxu0 %v668
        %827 = vmatpush.msra.mxu0 %v667
        %828 = vmatpush.msra.mxu0 %v666
        %829 = vmatpush.msra.mxu0 %v665
        %830 = vmatpush.msra.mxu0 %v664
        %831 = vmatpush.msra.mxu0 %v663
        %832 = vmatpush.msra.mxu0 %v662
        %833 = vmatpush.msra.mxu0 %v661
        %834 = vmatpush.msra.mxu0 %v660
        %835 = vmatpush.msra.mxu0 %v659
        %836 = vmatpush.msra.mxu0 %v658
        %837 = vmatpush.msra.mxu0 %v657
        %838 = vmatpush.msra.mxu0 %v656
        %839 = vmatpush.msra.mxu0 %v655
        %840 = vmatpush.msra.mxu0 %v654
        %841 = vmatpush.msra.mxu0 %v653
        %842 = vmatmul.f32.gmra.mxu0 %v677
        %v843 = vpop.f32.mrf.mxu0
        %v844 = vadd.f32 %v824, %v843
        %845 = vdwg.mxu0
        %v846 = vmax.f32 %v844, 0.0
        %vm847 = vcmask 523264
        %v849 = vsel %vm847, %v846, 0
        %851 = vmatpush.msra.mxu0 0.0
        %852 = vmatpush.msra.mxu0 0.0
        %853 = vmatpush.msra.mxu0 0.0
        %854 = vmatpush.msra.mxu0 0.0
        %855 = vmatpush.msra.mxu0 0.0
        %856 = vmatpush.msra.mxu0 0.0
        %857 = vmatpush.msra.mxu0 0.0
        %858 = vmatpush.msra.mxu0 0.0
        %859 = vmatpush.msra.mxu0 %v523
        %860 = vmatpush.msra.mxu0 %v522
        %861 = vmatpush.msra.mxu0 %v521
        %862 = vmatpush.msra.mxu0 %v520
        %863 = vmatpush.msra.mxu0 %v519
        %864 = vmatpush.msra.mxu0 %v518
        %865 = vmatpush.msra.mxu0 %v517
        %866 = vmatpush.msra.mxu0 %v516
        %867 = vmatmul.f32.gmra.mxu0 %v849
        %v868 = vpop.f32.mrf.mxu0
        %v869 = vadd.f32 %v536, %v868
        %870 = vdwg.mxu0
        %v871 = vmax.f32 %v869, 0.0
        %vm872 = vcmask 130048
        %v874 = vsel %vm872, %v871, 0
        %876 = vmatpush.msra.mxu0 0.0
        %877 = vmatpush.msra.mxu0 0.0
        %878 = vmatpush.msra.mxu0 0.0
        %879 = vmatpush.msra.mxu0 0.0
        %880 = vmatpush.msra.mxu0 0.0
        %881 = vmatpush.msra.mxu0 0.0
        %882 = vmatpush.msra.mxu0 0.0
        %883 = vmatpush.msra.mxu0 0.0
        %884 = vmatpush.msra.mxu0 0.0
        %885 = vmatpush.msra.mxu0 0.0
        %886 = vmatpush.msra.mxu0 0.0
        %887 = vmatpush.msra.mxu0 0.0
        %888 = vmatpush.msra.mxu0 0.0
        %889 = vmatpush.msra.mxu0 0.0
        %890 = vmatpush.msra.mxu0 %v526
        %891 = vmatpush.msra.mxu0 %v525
        %892 = vmatmul.f32.gmra.mxu0 %v874
        %v893 = vpop.f32.mrf.mxu0
        %v894 = vadd.f32 %v538, %v893
        %895 = vdwg.mxu0
        %v896 = vmax.f32 %v894, 0.0
        %vm897 = vcmask 31744
        %v899 = vsel %vm897, %v896, 0
        %vm901 = vcmask 1043456
        %v903 = vsel %vm901, %v528, 0
        %905 = vmatpush.msra.mxu0 0.0
        %906 = vmatpush.msra.mxu0 0.0
        %907 = vmatpush.msra.mxu0 0.0
        %908 = vmatpush.msra.mxu0 0.0
        %909 = vmatpush.msra.mxu0 0.0
        %910 = vmatpush.msra.mxu0 0.0
        %911 = vmatpush.msra.mxu0 0.0
        %912 = vmatpush.msra.mxu0 0.0
        %913 = vmatpush.msra.mxu0 0.0
        %914 = vmatpush.msra.mxu0 0.0
        %915 = vmatpush.msra.mxu0 0.0
        %916 = vmatpush.msra.mxu0 0.0
        %917 = vmatpush.msra.mxu0 0.0
        %918 = vmatpush.msra.mxu0 0.0
        %919 = vmatpush.msra.mxu0 0.0
        %920 = vmatpush.msra.mxu0 %v903
        %921 = vmatmul.f32.gmra.mxu0 %v899
        %v922 = vpop.f32.mrf.mxu0
        %v923 = vadd.f32 %v539, %v922
        %924 = vdwg.mxu0
        %v925 = vmax.f32 %v923, 0.0
        %926 = vmatpush.msra.mxu0 0.0
        %927 = vmatpush.msra.mxu0 0.0
        %928 = vmatpush.msra.mxu0 0.0
        %929 = vmatpush.msra.mxu0 0.0
        %930 = vmatpush.msra.mxu0 0.0
        %931 = vmatpush.msra.mxu0 0.0
        %932 = vmatpush.msra.mxu0 0.0
        %933 = vmatpush.msra.mxu0 0.0
        %934 = vmatpush.msra.mxu0 0.0
        %935 = vmatpush.msra.mxu0 0.0
        %936 = vmatpush.msra.mxu0 0.0
        %937 = vmatpush.msra.mxu0 0.0
        %938 = vmatpush.msra.mxu0 0.0
        %939 = vmatpush.msra.mxu0 0.0
        %940 = vmatpush.msra.mxu0 %v531
        %941 = vmatpush.msra.mxu0 %v530
        %942 = vmatmul.f32.gmra.mxu0 %v874
        %v943 = vpop.f32.mrf.mxu0
        %v944 = vadd.f32 %v537, %v943
        %945 = vdwg.mxu0
        %v946 = vmax.f32 %v944, 0.0
        %v948 = vsel %vm897, %v925, 0
        %v951 = vsel %vm901, %v533, 0
        %953 = vmatpush.msra.mxu0 0.0
        %954 = vmatpush.msra.mxu0 0.0
        %955 = vmatpush.msra.mxu0 0.0
        %956 = vmatpush.msra.mxu0 0.0
        %957 = vmatpush.msra.mxu0 0.0
        %958 = vmatpush.msra.mxu0 0.0
        %959 = vmatpush.msra.mxu0 0.0
        %960 = vmatpush.msra.mxu0 0.0
        %961 = vmatpush.msra.mxu0 0.0
        %962 = vmatpush.msra.mxu0 0.0
        %963 = vmatpush.msra.mxu0 0.0
        %964 = vmatpush.msra.mxu0 0.0
        %965 = vmatpush.msra.mxu0 0.0
        %966 = vmatpush.msra.mxu0 0.0
        %967 = vmatpush.msra.mxu0 0.0
        %968 = vmatpush.msra.mxu0 %v951
        %969 = vmatmul.f32.gmra.mxu0 %v948
        %v970 = vpop.f32.mrf.mxu0
        %v971 = vadd.f32 0.0, %v970
        %972 = vdwg.mxu0
        %v973 = vadd.f32 %v946, %v971
        %v974 = vld [vmem:[#allocation7] sm:$0xff]
        %v975 = vld [vmem:[#allocation7 + $0x8] sm:$0xff]
        %v976 = vld [vmem:[#allocation5] sm:$0xff]
        %v977 = vld [vmem:[#allocation5 + $0x8] sm:$0xff]
        %v978 = vld [vmem:[#allocation5 + $0x10] sm:$0xff]
        %v979 = vld [vmem:[#allocation5 + $0x18] sm:$0xff]
        %v980 = vld [vmem:[#allocation5 + $0x20] sm:$0xff]
        %v981 = vld [vmem:[#allocation5 + $0x28] sm:$0xff]
        %v982 = vld [vmem:[#allocation5 + $0x30] sm:$0xff]
        %v983 = vld [vmem:[#allocation5 + $0x38] sm:$0xff]
        %984 = vmatpush.msra.mxu0 0.0
        %985 = vmatpush.msra.mxu0 0.0
        %986 = vmatpush.msra.mxu0 0.0
        %987 = vmatpush.msra.mxu0 0.0
        %988 = vmatpush.msra.mxu0 0.0
        %989 = vmatpush.msra.mxu0 0.0
        %990 = vmatpush.msra.mxu0 0.0
        %991 = vmatpush.msra.mxu0 0.0
        %992 = vmatpush.msra.mxu0 %v983
        %993 = vmatpush.msra.mxu0 %v982
        %994 = vmatpush.msra.mxu0 %v981
        %995 = vmatpush.msra.mxu0 %v980
        %996 = vmatpush.msra.mxu0 %v979
        %997 = vmatpush.msra.mxu0 %v978
        %998 = vmatpush.msra.mxu0 %v977
        %999 = vmatpush.msra.mxu0 %v976
        %1000 = vmatmul.f32.gmra.mxu0 %v849
        %v1001 = vpop.f32.mrf.mxu0
        %v1002 = vadd.f32 %v535, %v1001
        %1003 = vdwg.mxu0
        %v1004 = vmax.f32 %v1002, 0.0
        %v1006 = vsel %vm872, %v973, 0
        %1008 = vmatpush.msra.mxu0 0.0
        %1009 = vmatpush.msra.mxu0 0.0
        %1010 = vmatpush.msra.mxu0 0.0
        %1011 = vmatpush.msra.mxu0 0.0
        %1012 = vmatpush.msra.mxu0 0.0
        %1013 = vmatpush.msra.mxu0 0.0
        %1014 = vmatpush.msra.mxu0 0.0
        %1015 = vmatpush.msra.mxu0 0.0
        %1016 = vmatpush.msra.mxu0 0.0
        %1017 = vmatpush.msra.mxu0 0.0
        %1018 = vmatpush.msra.mxu0 0.0
        %1019 = vmatpush.msra.mxu0 0.0
        %1020 = vmatpush.msra.mxu0 0.0
        %1021 = vmatpush.msra.mxu0 0.0
        %1022 = vmatpush.msra.mxu0 %v975
        %1023 = vmatpush.msra.mxu0 %v974
        %1024 = vmatmul.f32.gmra.mxu0 %v1006
        %v1025 = vpop.f32.mrf.mxu0
        %v1026 = vadd.f32 %v1004, %v1025
        %1027 = vdwg.mxu0
        %v1028 = vld [vmem:[#allocation8] sm:$0xff]
        %v1029 = vld [vmem:[#allocation8 + $0x8] sm:$0xff]
        %v1030 = vld [vmem:[#allocation8 + $0x10] sm:$0xff]
        %v1031 = vld [vmem:[#allocation8 + $0x18] sm:$0xff]
        %v1032 = vld [vmem:[#allocation8 + $0x20] sm:$0xff]
        %v1033 = vld [vmem:[#allocation8 + $0x28] sm:$0xff]
        %v1034 = vld [vmem:[#allocation8 + $0x30] sm:$0xff]
        %v1035 = vld [vmem:[#allocation8 + $0x38] sm:$0xff]
        %v1036 = vld [vmem:[#allocation8 + $0x40] sm:$0xff]
        %v1037 = vld [vmem:[#allocation8 + $0x48] sm:$0xff]
        %v1038 = vld [vmem:[#allocation8 + $0x50] sm:$0xff]
        %v1039 = vld [vmem:[#allocation8 + $0x58] sm:$0xff]
        %v1040 = vld [vmem:[#allocation8 + $0x60] sm:$0xff]
        %v1041 = vld [vmem:[#allocation8 + $0x68] sm:$0xff]
        %v1042 = vld [vmem:[#allocation8 + $0x70] sm:$0xff]
        %v1043 = vld [vmem:[#allocation8 + $0x78] sm:$0xff]
        %v1045 = vsel %vm847, %v1026, 0
        %1047 = vmatpush.msra.mxu0 0.0
        %1048 = vmatpush.msra.mxu0 0.0
        %1049 = vmatpush.msra.mxu0 0.0
        %1050 = vmatpush.msra.mxu0 0.0
        %1051 = vmatpush.msra.mxu0 0.0
        %1052 = vmatpush.msra.mxu0 0.0
        %1053 = vmatpush.msra.mxu0 0.0
        %1054 = vmatpush.msra.mxu0 0.0
        %1055 = vmatpush.msra.mxu0 %v1042
        %1056 = vmatpush.msra.mxu0 %v1040
        %1057 = vmatpush.msra.mxu0 %v1038
        %1058 = vmatpush.msra.mxu0 %v1036
        %1059 = vmatpush.msra.mxu0 %v1034
        %1060 = vmatpush.msra.mxu0 %v1032
        %1061 = vmatpush.msra.mxu0 %v1030
        %1062 = vmatpush.msra.mxu0 %v1028
        %1063 = vmatmul.f32.gmra.mxu0 %v1045
        %v1064 = vpop.f32.mrf.mxu0
        %v1065 = vadd.f32 0.0, %v1064
        %1066 = vdwg.mxu0
        %1067 = vmatpush.msra.mxu0 0.0
        %1068 = vmatpush.msra.mxu0 0.0
        %1069 = vmatpush.msra.mxu0 0.0
        %1070 = vmatpush.msra.mxu0 0.0
        %1071 = vmatpush.msra.mxu0 0.0
        %1072 = vmatpush.msra.mxu0 0.0
        %1073 = vmatpush.msra.mxu0 0.0
        %1074 = vmatpush.msra.mxu0 0.0
        %1075 = vmatpush.msra.mxu0 %v1043
        %1076 = vmatpush.msra.mxu0 %v1041
        %1077 = vmatpush.msra.mxu0 %v1039
        %1078 = vmatpush.msra.mxu0 %v1037
        %1079 = vmatpush.msra.mxu0 %v1035
        %1080 = vmatpush.msra.mxu0 %v1033
        %1081 = vmatpush.msra.mxu0 %v1031
        %1082 = vmatpush.msra.mxu0 %v1029
        %1083 = vmatmul.f32.gmra.mxu0 %v1045
        %v1084 = vpop.f32.mrf.mxu0
        %v1085 = vadd.f32 0.0, %v1084
        %1086 = vdwg.mxu0
        %1088 = vset.pattern.permute.xlu0 8
        %1089 = vperm.xlu0 %1088, %v540
        %v1090 = vpop.permute.xlu0 %1089
        %1093 = vst [vmem:[#allocation1] ss:$2 sm:$0xff] %v515
        %v1094 = vld.sshfl [vmem:[#allocation1] sm:$0xff pattern:$0x75316420]
        %v1095 = vld.sshfl [vmem:[#allocation1 + $0x8] sm:$0xff pattern:$0x75316420]
        %v1096 = vsel %vm897, %v540, 0
        %v1098 = vsel %vm901, %v1094, 0
        %v1100 = vsel %vm901, %v1095, 0
        %1102 = vmatpush.msra.mxu0 0.0
        %1103 = vmatpush.msra.mxu0 0.0
        %1104 = vmatpush.msra.mxu0 0.0
        %1105 = vmatpush.msra.mxu0 0.0
        %1106 = vmatpush.msra.mxu0 0.0
        %1107 = vmatpush.msra.mxu0 0.0
        %1108 = vmatpush.msra.mxu0 0.0
        %1109 = vmatpush.msra.mxu0 0.0
        %1110 = vmatpush.msra.mxu0 0.0
        %1111 = vmatpush.msra.mxu0 0.0
        %1112 = vmatpush.msra.mxu0 0.0
        %1113 = vmatpush.msra.mxu0 0.0
        %1114 = vmatpush.msra.mxu0 0.0
        %1115 = vmatpush.msra.mxu0 0.0
        %1116 = vmatpush.msra.mxu0 0.0
        %1117 = vmatpush.msra.mxu0 %v1098
        %1118 = vmatmul.f32.gmra.mxu0 %v1096
        %v1119 = vpop.f32.mrf.mxu0
        %v1120 = vadd.f32 %v1090, %v1119
        %1121 = vdwg.mxu0
        %1122 = vmatpush.msra.mxu0 0.0
        %1123 = vmatpush.msra.mxu0 0.0
        %1124 = vmatpush.msra.mxu0 0.0
        %1125 = vmatpush.msra.mxu0 0.0
        %1126 = vmatpush.msra.mxu0 0.0
        %1127 = vmatpush.msra.mxu0 0.0
        %1128 = vmatpush.msra.mxu0 0.0
        %1129 = vmatpush.msra.mxu0 0.0
        %1130 = vmatpush.msra.mxu0 0.0
        %1131 = vmatpush.msra.mxu0 0.0
        %1132 = vmatpush.msra.mxu0 0.0
        %1133 = vmatpush.msra.mxu0 0.0
        %1134 = vmatpush.msra.mxu0 0.0
        %1135 = vmatpush.msra.mxu0 0.0
        %1136 = vmatpush.msra.mxu0 0.0
        %1137 = vmatpush.msra.mxu0 %v1100
        %1138 = vmatmul.f32.gmra.mxu0 %v1096
        %v1139 = vpop.f32.mrf.mxu0
        %v1140 = vadd.f32 %v1090, %v1139
        %1141 = vdwg.mxu0
        %v1142 = vmax.f32 %v1120, 0.0
        %v1143 = vmax.f32 %v1140, 0.0
        %1144 = vst [vmem:[#allocation1] ss:$2 sm:$0xff] %v515
        %v1145 = vld.sshfl [vmem:[#allocation1] sm:$0xff pattern:$0x75316420]
        %v1146 = vld.sshfl [vmem:[#allocation1 + $0x8] sm:$0xff pattern:$0x75316420]
        %v1149 = vsel %vm901, %v1145, 0.0
        %v1150 = vsel %vm901, %v1146, 0.0
        %v1151 = vadd.f32 %v1149, %v1150
        %1152 = vadd.xlane.f32.xlu0 %v1151
        %v1153 = vpop.xlane.xlu0 %1152
        %v1154 = vrcp.pop 256.0
        %v1155 = vmul.f32 256.0, %v1154
        %v1156 = vsub.f32 1.0, %v1155
        %v1157 = vmul.f32 %v1154, %v1156
        %v1158 = vadd.f32 %v1154, %v1157
        %vm1159 = vweird.f32 %v1154
        %v1160 = vsel %vm1159, %v1154, %v1158
        %v1161 = vmul.f32 %v1153, %v1160
        %1162 = vrot.lane.b32.xlu0 %v540, 124
        %v1163 = vpop.permute.xlu0 %1162
        %1164 = vrot.lane.b32.xlu0 %v540, 119
        %v1165 = vpop.permute.xlu0 %1164
        %v1167 = vsel %vm897, %v1163, 0
        %v1170 = vsel %vm901, %v1161, 0
        %1172 = vmatpush.msra.mxu0 0.0
        %1173 = vmatpush.msra.mxu0 0.0
        %1174 = vmatpush.msra.mxu0 0.0
        %1175 = vmatpush.msra.mxu0 0.0
        %1176 = vmatpush.msra.mxu0 0.0
        %1177 = vmatpush.msra.mxu0 0.0
        %1178 = vmatpush.msra.mxu0 0.0
        %1179 = vmatpush.msra.mxu0 0.0
        %1180 = vmatpush.msra.mxu0 0.0
        %1181 = vmatpush.msra.mxu0 0.0
        %1182 = vmatpush.msra.mxu0 0.0
        %1183 = vmatpush.msra.mxu0 0.0
        %1184 = vmatpush.msra.mxu0 0.0
        %1185 = vmatpush.msra.mxu0 0.0
        %1186 = vmatpush.msra.mxu0 0.0
        %1187 = vmatpush.msra.mxu0 %v1170
        %1188 = vmatmul.f32.gmra.mxu0 %v1167
        %v1189 = vpop.f32.mrf.mxu0
        %v1190 = vadd.f32 %v1165, %v1189
        %1191 = vdwg.mxu0
        %v1192 = vmax.f32 %v1190, 0.0
        %v1193 = vperm.slane %v1065, 0
        %v1194 = vperm.slane %v1085, 0
        %v1195 = vmul.f32 %v1193, %v1142
        %v1196 = vmul.f32 %v1194, %v1143
        %1198 = vset.pattern.permute.xlu0 0
        %1199 = vperm.xlu0 %1198, %v1192
        %v1200 = vpop.permute.xlu0 %1199
        %v1202 = vadd.f32 %v1195, %v1200
        %v1203 = vadd.f32 %v1196, %v1200
        %v1204 = vld [vmem:[#allocation11] sm:$0xff]
        %v1205 = vld [vmem:[#allocation11 + $0x8] sm:$0xff]
        %v1206 = vld [vmem:[#allocation11 + $0x10] sm:$0xff]
        %v1207 = vld [vmem:[#allocation11 + $0x18] sm:$0xff]
        %v1208 = vld [vmem:[#allocation11 + $0x20] sm:$0xff]
        %v1209 = vld [vmem:[#allocation11 + $0x28] sm:$0xff]
        %v1210 = vld [vmem:[#allocation11 + $0x30] sm:$0xff]
        %v1211 = vld [vmem:[#allocation11 + $0x38] sm:$0xff]
        %v1212 = vld [vmem:[#allocation11 + $0x40] sm:$0xff]
        %v1213 = vld [vmem:[#allocation11 + $0x48] sm:$0xff]
        %v1214 = vld [vmem:[#allocation11 + $0x50] sm:$0xff]
        %v1215 = vld [vmem:[#allocation11 + $0x58] sm:$0xff]
        %v1216 = vld [vmem:[#allocation11 + $0x60] sm:$0xff]
        %v1217 = vld [vmem:[#allocation11 + $0x68] sm:$0xff]
        %v1218 = vld [vmem:[#allocation11 + $0x70] sm:$0xff]
        %v1219 = vld [vmem:[#allocation11 + $0x78] sm:$0xff]
        %v1220 = vld [vmem:[#allocation11 + $0x80] sm:$0xff]
        %v1221 = vld [vmem:[#allocation11 + $0x88] sm:$0xff]
        %v1222 = vld [vmem:[#allocation11 + $0x90] sm:$0xff]
        %v1223 = vld [vmem:[#allocation11 + $0x98] sm:$0xff]
        %v1224 = vld [vmem:[#allocation11 + $0xa0] sm:$0xff]
        %v1225 = vld [vmem:[#allocation11 + $0xa8] sm:$0xff]
        %v1226 = vld [vmem:[#allocation11 + $0xb0] sm:$0xff]
        %v1227 = vld [vmem:[#allocation11 + $0xb8] sm:$0xff]
        %v1228 = vld [vmem:[#allocation11 + $0xc0] sm:$0xff]
        %v1229 = vld [vmem:[#allocation11 + $0xc8] sm:$0xff]
        %v1230 = vld [vmem:[#allocation11 + $0xd0] sm:$0xff]
        %v1231 = vld [vmem:[#allocation11 + $0xd8] sm:$0xff]
        %v1232 = vld [vmem:[#allocation11 + $0xe0] sm:$0xff]
        %v1233 = vld [vmem:[#allocation11 + $0xe8] sm:$0xff]
        %v1234 = vld [vmem:[#allocation11 + $0xf0] sm:$0xff]
        %v1235 = vld [vmem:[#allocation11 + $0xf8] sm:$0xff]
        %v1236 = vld [vmem:[#allocation11 + $0x100] sm:$0xff]
        %v1237 = vld [vmem:[#allocation11 + $0x108] sm:$0xff]
        %v1238 = vld [vmem:[#allocation11 + $0x110] sm:$0xff]
        %v1239 = vld [vmem:[#allocation11 + $0x118] sm:$0xff]
        %v1240 = vld [vmem:[#allocation11 + $0x120] sm:$0xff]
        %v1241 = vld [vmem:[#allocation11 + $0x128] sm:$0xff]
        %v1242 = vld [vmem:[#allocation11 + $0x130] sm:$0xff]
        %v1243 = vld [vmem:[#allocation11 + $0x138] sm:$0xff]
        %v1244 = vld [vmem:[#allocation11 + $0x140] sm:$0xff]
        %v1245 = vld [vmem:[#allocation11 + $0x148] sm:$0xff]
        %v1246 = vld [vmem:[#allocation11 + $0x150] sm:$0xff]
        %v1247 = vld [vmem:[#allocation11 + $0x158] sm:$0xff]
        %v1248 = vld [vmem:[#allocation11 + $0x160] sm:$0xff]
        %v1249 = vld [vmem:[#allocation11 + $0x168] sm:$0xff]
        %v1250 = vld [vmem:[#allocation11 + $0x170] sm:$0xff]
        %v1251 = vld [vmem:[#allocation11 + $0x178] sm:$0xff]
        %v1252 = vld [vmem:[#allocation11 + $0x180] sm:$0xff]
        %v1253 = vld [vmem:[#allocation11 + $0x188] sm:$0xff]
        %v1254 = vld [vmem:[#allocation11 + $0x190] sm:$0xff]
        %v1255 = vld [vmem:[#allocation11 + $0x198] sm:$0xff]
        %v1256 = vld [vmem:[#allocation11 + $0x1a0] sm:$0xff]
        %v1257 = vld [vmem:[#allocation11 + $0x1a8] sm:$0xff]
        %v1258 = vld [vmem:[#allocation11 + $0x1b0] sm:$0xff]
        %v1259 = vld [vmem:[#allocation11 + $0x1b8] sm:$0xff]
        %v1260 = vld [vmem:[#allocation11 + $0x1c0] sm:$0xff]
        %v1261 = vld [vmem:[#allocation11 + $0x1c8] sm:$0xff]
        %v1262 = vld [vmem:[#allocation11 + $0x1d0] sm:$0xff]
        %v1263 = vld [vmem:[#allocation11 + $0x1d8] sm:$0xff]
        %v1264 = vld [vmem:[#allocation11 + $0x1e0] sm:$0xff]
        %v1265 = vld [vmem:[#allocation11 + $0x1e8] sm:$0xff]
        %v1266 = vld [vmem:[#allocation11 + $0x1f0] sm:$0xff]
        %v1267 = vld [vmem:[#allocation11 + $0x1f8] sm:$0xff]
        %v1268 = vld [vmem:[#allocation11 + $0x200] sm:$0xff]
        %v1269 = vld [vmem:[#allocation11 + $0x208] sm:$0xff]
        %v1270 = vld [vmem:[#allocation11 + $0x210] sm:$0xff]
        %v1271 = vld [vmem:[#allocation11 + $0x218] sm:$0xff]
        %v1272 = vld [vmem:[#allocation11 + $0x220] sm:$0xff]
        %v1273 = vld [vmem:[#allocation11 + $0x228] sm:$0xff]
        %v1274 = vld [vmem:[#allocation11 + $0x230] sm:$0xff]
        %v1275 = vld [vmem:[#allocation11 + $0x238] sm:$0xff]
        %v1276 = vld [vmem:[#allocation11 + $0x240] sm:$0xff]
        %v1277 = vld [vmem:[#allocation11 + $0x248] sm:$0xff]
        %v1278 = vld [vmem:[#allocation11 + $0x250] sm:$0xff]
        %v1279 = vld [vmem:[#allocation11 + $0x258] sm:$0xff]
        %v1280 = vld [vmem:[#allocation11 + $0x260] sm:$0xff]
        %v1281 = vld [vmem:[#allocation11 + $0x268] sm:$0xff]
        %v1282 = vld [vmem:[#allocation11 + $0x270] sm:$0xff]
        %v1283 = vld [vmem:[#allocation11 + $0x278] sm:$0xff]
        %v1284 = vld [vmem:[#allocation11 + $0x280] sm:$0xff]
        %v1285 = vld [vmem:[#allocation11 + $0x288] sm:$0xff]
        %v1286 = vld [vmem:[#allocation11 + $0x290] sm:$0xff]
        %v1287 = vld [vmem:[#allocation11 + $0x298] sm:$0xff]
        %v1288 = vld [vmem:[#allocation11 + $0x2a0] sm:$0xff]
        %v1289 = vld [vmem:[#allocation11 + $0x2a8] sm:$0xff]
        %v1290 = vld [vmem:[#allocation11 + $0x2b0] sm:$0xff]
        %v1291 = vld [vmem:[#allocation11 + $0x2b8] sm:$0xff]
        %v1292 = vld [vmem:[#allocation11 + $0x2c0] sm:$0xff]
        %v1293 = vld [vmem:[#allocation11 + $0x2c8] sm:$0xff]
        %v1294 = vld [vmem:[#allocation11 + $0x2d0] sm:$0xff]
        %v1295 = vld [vmem:[#allocation11 + $0x2d8] sm:$0xff]
        %v1296 = vld [vmem:[#allocation11 + $0x2e0] sm:$0xff]
        %v1297 = vld [vmem:[#allocation11 + $0x2e8] sm:$0xff]
        %v1298 = vld [vmem:[#allocation11 + $0x2f0] sm:$0xff]
        %v1299 = vld [vmem:[#allocation11 + $0x2f8] sm:$0xff]
        %v1300 = vld [vmem:[#allocation11 + $0x300] sm:$0xff]
        %v1301 = vld [vmem:[#allocation11 + $0x308] sm:$0xff]
        %v1302 = vld [vmem:[#allocation11 + $0x310] sm:$0xff]
        %v1303 = vld [vmem:[#allocation11 + $0x318] sm:$0xff]
        %v1304 = vld [vmem:[#allocation11 + $0x320] sm:$0xff]
        %v1305 = vld [vmem:[#allocation11 + $0x328] sm:$0xff]
        %v1306 = vld [vmem:[#allocation11 + $0x330] sm:$0xff]
        %v1307 = vld [vmem:[#allocation11 + $0x338] sm:$0xff]
        %v1308 = vld [vmem:[#allocation11 + $0x340] sm:$0xff]
        %v1309 = vld [vmem:[#allocation11 + $0x348] sm:$0xff]
        %v1310 = vld [vmem:[#allocation11 + $0x350] sm:$0xff]
        %v1311 = vld [vmem:[#allocation11 + $0x358] sm:$0xff]
        %v1312 = vld [vmem:[#allocation11 + $0x360] sm:$0xff]
        %v1313 = vld [vmem:[#allocation11 + $0x368] sm:$0xff]
        %v1314 = vld [vmem:[#allocation11 + $0x370] sm:$0xff]
        %v1315 = vld [vmem:[#allocation11 + $0x378] sm:$0xff]
        %v1316 = vld [vmem:[#allocation11 + $0x380] sm:$0xff]
        %v1317 = vld [vmem:[#allocation11 + $0x388] sm:$0xff]
        %v1318 = vld [vmem:[#allocation11 + $0x390] sm:$0xff]
        %v1319 = vld [vmem:[#allocation11 + $0x398] sm:$0xff]
        %v1320 = vld [vmem:[#allocation11 + $0x3a0] sm:$0xff]
        %v1321 = vld [vmem:[#allocation11 + $0x3a8] sm:$0xff]
        %v1322 = vld [vmem:[#allocation11 + $0x3b0] sm:$0xff]
        %v1323 = vld [vmem:[#allocation11 + $0x3b8] sm:$0xff]
        %v1324 = vld [vmem:[#allocation11 + $0x3c0] sm:$0xff]
        %v1325 = vld [vmem:[#allocation11 + $0x3c8] sm:$0xff]
        %v1326 = vld [vmem:[#allocation11 + $0x3d0] sm:$0xff]
        %v1327 = vld [vmem:[#allocation11 + $0x3d8] sm:$0xff]
        %v1328 = vld [vmem:[#allocation11 + $0x3e0] sm:$0xff]
        %v1329 = vld [vmem:[#allocation11 + $0x3e8] sm:$0xff]
        %v1330 = vld [vmem:[#allocation11 + $0x3f0] sm:$0xff]
        %v1331 = vld [vmem:[#allocation11 + $0x3f8] sm:$0xff]
        %v1332 = vld [vmem:[#allocation11 + $0x400] sm:$0xff]
        %v1333 = vld [vmem:[#allocation11 + $0x408] sm:$0xff]
        %v1334 = vld [vmem:[#allocation11 + $0x410] sm:$0xff]
        %v1335 = vld [vmem:[#allocation11 + $0x418] sm:$0xff]
        %v1336 = vld [vmem:[#allocation11 + $0x420] sm:$0xff]
        %v1337 = vld [vmem:[#allocation11 + $0x428] sm:$0xff]
        %v1338 = vld [vmem:[#allocation11 + $0x430] sm:$0xff]
        %v1339 = vld [vmem:[#allocation11 + $0x438] sm:$0xff]
        %v1340 = vld [vmem:[#allocation11 + $0x440] sm:$0xff]
        %v1341 = vld [vmem:[#allocation11 + $0x448] sm:$0xff]
        %v1342 = vld [vmem:[#allocation11 + $0x450] sm:$0xff]
        %v1343 = vld [vmem:[#allocation11 + $0x458] sm:$0xff]
        %v1344 = vld [vmem:[#allocation11 + $0x460] sm:$0xff]
        %v1345 = vld [vmem:[#allocation11 + $0x468] sm:$0xff]
        %v1346 = vld [vmem:[#allocation11 + $0x470] sm:$0xff]
        %v1347 = vld [vmem:[#allocation11 + $0x478] sm:$0xff]
        %v1348 = vld [vmem:[#allocation11 + $0x480] sm:$0xff]
        %v1349 = vld [vmem:[#allocation11 + $0x488] sm:$0xff]
        %v1350 = vld [vmem:[#allocation11 + $0x490] sm:$0xff]
        %v1351 = vld [vmem:[#allocation11 + $0x498] sm:$0xff]
        %v1352 = vld [vmem:[#allocation11 + $0x4a0] sm:$0xff]
        %v1353 = vld [vmem:[#allocation11 + $0x4a8] sm:$0xff]
        %v1354 = vld [vmem:[#allocation11 + $0x4b0] sm:$0xff]
        %v1355 = vld [vmem:[#allocation11 + $0x4b8] sm:$0xff]
        %v1356 = vld [vmem:[#allocation11 + $0x4c0] sm:$0xff]
        %v1357 = vld [vmem:[#allocation11 + $0x4c8] sm:$0xff]
        %v1358 = vld [vmem:[#allocation11 + $0x4d0] sm:$0xff]
        %v1359 = vld [vmem:[#allocation11 + $0x4d8] sm:$0xff]
        %v1360 = vld [vmem:[#allocation11 + $0x4e0] sm:$0xff]
        %v1361 = vld [vmem:[#allocation11 + $0x4e8] sm:$0xff]
        %v1362 = vld [vmem:[#allocation11 + $0x4f0] sm:$0xff]
        %v1363 = vld [vmem:[#allocation11 + $0x4f8] sm:$0xff]
        %v1364 = vld [vmem:[#allocation11 + $0x500] sm:$0xff]
        %v1365 = vld [vmem:[#allocation11 + $0x508] sm:$0xff]
        %v1366 = vld [vmem:[#allocation11 + $0x510] sm:$0xff]
        %v1367 = vld [vmem:[#allocation11 + $0x518] sm:$0xff]
        %v1368 = vld [vmem:[#allocation11 + $0x520] sm:$0xff]
        %v1369 = vld [vmem:[#allocation11 + $0x528] sm:$0xff]
        %v1370 = vld [vmem:[#allocation11 + $0x530] sm:$0xff]
        %v1371 = vld [vmem:[#allocation11 + $0x538] sm:$0xff]
        %v1372 = vld [vmem:[#allocation11 + $0x540] sm:$0xff]
        %v1373 = vld [vmem:[#allocation11 + $0x548] sm:$0xff]
        %v1374 = vld [vmem:[#allocation11 + $0x550] sm:$0xff]
        %v1375 = vld [vmem:[#allocation11 + $0x558] sm:$0xff]
        %v1376 = vld [vmem:[#allocation11 + $0x560] sm:$0xff]
        %v1377 = vld [vmem:[#allocation11 + $0x568] sm:$0xff]
        %v1378 = vld [vmem:[#allocation11 + $0x570] sm:$0xff]
        %v1379 = vld [vmem:[#allocation11 + $0x578] sm:$0xff]
        %v1380 = vld [vmem:[#allocation11 + $0x580] sm:$0xff]
        %v1381 = vld [vmem:[#allocation11 + $0x588] sm:$0xff]
        %v1382 = vld [vmem:[#allocation11 + $0x590] sm:$0xff]
        %v1383 = vld [vmem:[#allocation11 + $0x598] sm:$0xff]
        %v1384 = vld [vmem:[#allocation11 + $0x5a0] sm:$0xff]
        %v1385 = vld [vmem:[#allocation11 + $0x5a8] sm:$0xff]
        %v1386 = vld [vmem:[#allocation11 + $0x5b0] sm:$0xff]
        %v1387 = vld [vmem:[#allocation11 + $0x5b8] sm:$0xff]
        %v1388 = vld [vmem:[#allocation11 + $0x5c0] sm:$0xff]
        %v1389 = vld [vmem:[#allocation11 + $0x5c8] sm:$0xff]
        %v1390 = vld [vmem:[#allocation11 + $0x5d0] sm:$0xff]
        %v1391 = vld [vmem:[#allocation11 + $0x5d8] sm:$0xff]
        %v1392 = vld [vmem:[#allocation11 + $0x5e0] sm:$0xff]
        %v1393 = vld [vmem:[#allocation11 + $0x5e8] sm:$0xff]
        %v1394 = vld [vmem:[#allocation11 + $0x5f0] sm:$0xff]
        %v1395 = vld [vmem:[#allocation11 + $0x5f8] sm:$0xff]
        %v1396 = vld [vmem:[#allocation11 + $0x600] sm:$0xff]
        %v1397 = vld [vmem:[#allocation11 + $0x608] sm:$0xff]
        %v1398 = vld [vmem:[#allocation11 + $0x610] sm:$0xff]
        %v1399 = vld [vmem:[#allocation11 + $0x618] sm:$0xff]
        %v1400 = vld [vmem:[#allocation11 + $0x620] sm:$0xff]
        %v1401 = vld [vmem:[#allocation11 + $0x628] sm:$0xff]
        %v1402 = vld [vmem:[#allocation11 + $0x630] sm:$0xff]
        %v1403 = vld [vmem:[#allocation11 + $0x638] sm:$0xff]
        %v1404 = vld [vmem:[#allocation11 + $0x640] sm:$0xff]
        %v1405 = vld [vmem:[#allocation11 + $0x648] sm:$0xff]
        %v1406 = vld [vmem:[#allocation11 + $0x650] sm:$0xff]
        %v1407 = vld [vmem:[#allocation11 + $0x658] sm:$0xff]
        %v1408 = vld [vmem:[#allocation11 + $0x660] sm:$0xff]
        %v1409 = vld [vmem:[#allocation11 + $0x668] sm:$0xff]
        %v1410 = vld [vmem:[#allocation11 + $0x670] sm:$0xff]
        %v1411 = vld [vmem:[#allocation11 + $0x678] sm:$0xff]
        %v1412 = vld [vmem:[#allocation11 + $0x680] sm:$0xff]
        %v1413 = vld [vmem:[#allocation11 + $0x688] sm:$0xff]
        %v1414 = vld [vmem:[#allocation11 + $0x690] sm:$0xff]
        %v1415 = vld [vmem:[#allocation11 + $0x698] sm:$0xff]
        %v1416 = vld [vmem:[#allocation11 + $0x6a0] sm:$0xff]
        %v1417 = vld [vmem:[#allocation11 + $0x6a8] sm:$0xff]
        %v1418 = vld [vmem:[#allocation11 + $0x6b0] sm:$0xff]
        %v1419 = vld [vmem:[#allocation11 + $0x6b8] sm:$0xff]
        %v1420 = vld [vmem:[#allocation11 + $0x6c0] sm:$0xff]
        %v1421 = vld [vmem:[#allocation11 + $0x6c8] sm:$0xff]
        %v1422 = vld [vmem:[#allocation11 + $0x6d0] sm:$0xff]
        %v1423 = vld [vmem:[#allocation11 + $0x6d8] sm:$0xff]
        %v1424 = vld [vmem:[#allocation11 + $0x6e0] sm:$0xff]
        %v1425 = vld [vmem:[#allocation11 + $0x6e8] sm:$0xff]
        %v1426 = vld [vmem:[#allocation11 + $0x6f0] sm:$0xff]
        %v1427 = vld [vmem:[#allocation11 + $0x6f8] sm:$0xff]
        %v1428 = vld [vmem:[#allocation11 + $0x700] sm:$0xff]
        %v1429 = vld [vmem:[#allocation11 + $0x708] sm:$0xff]
        %v1430 = vld [vmem:[#allocation11 + $0x710] sm:$0xff]
        %v1431 = vld [vmem:[#allocation11 + $0x718] sm:$0xff]
        %v1432 = vld [vmem:[#allocation11 + $0x720] sm:$0xff]
        %v1433 = vld [vmem:[#allocation11 + $0x728] sm:$0xff]
        %v1434 = vld [vmem:[#allocation11 + $0x730] sm:$0xff]
        %v1435 = vld [vmem:[#allocation11 + $0x738] sm:$0xff]
        %v1436 = vld [vmem:[#allocation11 + $0x740] sm:$0xff]
        %v1437 = vld [vmem:[#allocation11 + $0x748] sm:$0xff]
        %v1438 = vld [vmem:[#allocation11 + $0x750] sm:$0xff]
        %v1439 = vld [vmem:[#allocation11 + $0x758] sm:$0xff]
        %v1440 = vld [vmem:[#allocation11 + $0x760] sm:$0xff]
        %v1441 = vld [vmem:[#allocation11 + $0x768] sm:$0xff]
        %v1442 = vld [vmem:[#allocation11 + $0x770] sm:$0xff]
        %v1443 = vld [vmem:[#allocation11 + $0x778] sm:$0xff]
        %v1444 = vld [vmem:[#allocation11 + $0x780] sm:$0xff]
        %v1445 = vld [vmem:[#allocation11 + $0x788] sm:$0xff]
        %v1446 = vld [vmem:[#allocation11 + $0x790] sm:$0xff]
        %v1447 = vld [vmem:[#allocation11 + $0x798] sm:$0xff]
        %v1448 = vld [vmem:[#allocation11 + $0x7a0] sm:$0xff]
        %v1449 = vld [vmem:[#allocation11 + $0x7a8] sm:$0xff]
        %v1450 = vld [vmem:[#allocation11 + $0x7b0] sm:$0xff]
        %v1451 = vld [vmem:[#allocation11 + $0x7b8] sm:$0xff]
        %v1452 = vld [vmem:[#allocation11 + $0x7c0] sm:$0xff]
        %v1453 = vld [vmem:[#allocation11 + $0x7c8] sm:$0xff]
        %v1454 = vld [vmem:[#allocation11 + $0x7d0] sm:$0xff]
        %v1455 = vld [vmem:[#allocation11 + $0x7d8] sm:$0xff]
        %v1456 = vld [vmem:[#allocation11 + $0x7e0] sm:$0xff]
        %v1457 = vld [vmem:[#allocation11 + $0x7e8] sm:$0xff]
        %v1458 = vld [vmem:[#allocation11 + $0x7f0] sm:$0xff]
        %v1459 = vld [vmem:[#allocation11 + $0x7f8] sm:$0xff]
        %v1460 = vld [vmem:[#allocation11 + $0x800] sm:$0xff]
        %v1461 = vld [vmem:[#allocation11 + $0x808] sm:$0xff]
        %v1462 = vld [vmem:[#allocation11 + $0x810] sm:$0xff]
        %v1463 = vld [vmem:[#allocation11 + $0x818] sm:$0xff]
        %v1464 = vld [vmem:[#allocation11 + $0x820] sm:$0xff]
        %v1465 = vld [vmem:[#allocation11 + $0x828] sm:$0xff]
        %v1466 = vld [vmem:[#allocation11 + $0x830] sm:$0xff]
        %v1467 = vld [vmem:[#allocation11 + $0x838] sm:$0xff]
        %v1468 = vld [vmem:[#allocation11 + $0x840] sm:$0xff]
        %v1469 = vld [vmem:[#allocation11 + $0x848] sm:$0xff]
        %v1470 = vld [vmem:[#allocation11 + $0x850] sm:$0xff]
        %v1471 = vld [vmem:[#allocation11 + $0x858] sm:$0xff]
        %v1472 = vld [vmem:[#allocation11 + $0x860] sm:$0xff]
        %v1473 = vld [vmem:[#allocation11 + $0x868] sm:$0xff]
        %v1474 = vld [vmem:[#allocation11 + $0x870] sm:$0xff]
        %v1475 = vld [vmem:[#allocation11 + $0x878] sm:$0xff]
        %v1476 = vld [vmem:[#allocation11 + $0x880] sm:$0xff]
        %v1477 = vld [vmem:[#allocation11 + $0x888] sm:$0xff]
        %v1478 = vld [vmem:[#allocation11 + $0x890] sm:$0xff]
        %v1479 = vld [vmem:[#allocation11 + $0x898] sm:$0xff]
        %v1480 = vld [vmem:[#allocation11 + $0x8a0] sm:$0xff]
        %v1481 = vld [vmem:[#allocation11 + $0x8a8] sm:$0xff]
        %v1482 = vld [vmem:[#allocation11 + $0x8b0] sm:$0xff]
        %v1483 = vld [vmem:[#allocation11 + $0x8b8] sm:$0xff]
        %v1484 = vld [vmem:[#allocation11 + $0x8c0] sm:$0xff]
        %v1485 = vld [vmem:[#allocation11 + $0x8c8] sm:$0xff]
        %v1486 = vld [vmem:[#allocation11 + $0x8d0] sm:$0xff]
        %v1487 = vld [vmem:[#allocation11 + $0x8d8] sm:$0xff]
        %v1488 = vld [vmem:[#allocation11 + $0x8e0] sm:$0xff]
        %v1489 = vld [vmem:[#allocation11 + $0x8e8] sm:$0xff]
        %v1490 = vld [vmem:[#allocation11 + $0x8f0] sm:$0xff]
        %v1491 = vld [vmem:[#allocation11 + $0x8f8] sm:$0xff]
        %v1492 = vld [vmem:[#allocation11 + $0x900] sm:$0xff]
        %v1493 = vld [vmem:[#allocation11 + $0x908] sm:$0xff]
        %v1494 = vld [vmem:[#allocation11 + $0x910] sm:$0xff]
        %v1495 = vld [vmem:[#allocation11 + $0x918] sm:$0xff]
        %v1496 = vld [vmem:[#allocation11 + $0x920] sm:$0xff]
        %v1497 = vld [vmem:[#allocation11 + $0x928] sm:$0xff]
        %v1498 = vld [vmem:[#allocation11 + $0x930] sm:$0xff]
        %v1499 = vld [vmem:[#allocation11 + $0x938] sm:$0xff]
        %v1500 = vld [vmem:[#allocation11 + $0x940] sm:$0xff]
        %v1501 = vld [vmem:[#allocation11 + $0x948] sm:$0xff]
        %v1502 = vld [vmem:[#allocation11 + $0x950] sm:$0xff]
        %v1503 = vld [vmem:[#allocation11 + $0x958] sm:$0xff]
        %v1504 = vld [vmem:[#allocation11 + $0x960] sm:$0xff]
        %v1505 = vld [vmem:[#allocation11 + $0x968] sm:$0xff]
        %v1506 = vld [vmem:[#allocation11 + $0x970] sm:$0xff]
        %v1507 = vld [vmem:[#allocation11 + $0x978] sm:$0xff]
        %v1508 = vld [vmem:[#allocation11 + $0x980] sm:$0xff]
        %v1509 = vld [vmem:[#allocation11 + $0x988] sm:$0xff]
        %v1510 = vld [vmem:[#allocation11 + $0x990] sm:$0xff]
        %v1511 = vld [vmem:[#allocation11 + $0x998] sm:$0xff]
        %v1512 = vld [vmem:[#allocation11 + $0x9a0] sm:$0xff]
        %v1513 = vld [vmem:[#allocation11 + $0x9a8] sm:$0xff]
        %v1514 = vld [vmem:[#allocation11 + $0x9b0] sm:$0xff]
        %v1515 = vld [vmem:[#allocation11 + $0x9b8] sm:$0xff]
        %v1516 = vld [vmem:[#allocation11 + $0x9c0] sm:$0xff]
        %v1517 = vld [vmem:[#allocation11 + $0x9c8] sm:$0xff]
        %v1518 = vld [vmem:[#allocation11 + $0x9d0] sm:$0xff]
        %v1519 = vld [vmem:[#allocation11 + $0x9d8] sm:$0xff]
        %v1520 = vld [vmem:[#allocation11 + $0x9e0] sm:$0xff]
        %v1521 = vld [vmem:[#allocation11 + $0x9e8] sm:$0xff]
        %v1522 = vld [vmem:[#allocation11 + $0x9f0] sm:$0xff]
        %v1523 = vld [vmem:[#allocation11 + $0x9f8] sm:$0xff]
        %v1524 = vld [vmem:[#allocation11 + $0xa00] sm:$0xff]
        %v1525 = vld [vmem:[#allocation11 + $0xa08] sm:$0xff]
        %v1526 = vld [vmem:[#allocation11 + $0xa10] sm:$0xff]
        %v1527 = vld [vmem:[#allocation11 + $0xa18] sm:$0xff]
        %v1528 = vld [vmem:[#allocation11 + $0xa20] sm:$0xff]
        %v1529 = vld [vmem:[#allocation11 + $0xa28] sm:$0xff]
        %v1530 = vld [vmem:[#allocation11 + $0xa30] sm:$0xff]
        %v1531 = vld [vmem:[#allocation11 + $0xa38] sm:$0xff]
        %v1532 = vld [vmem:[#allocation11 + $0xa40] sm:$0xff]
        %v1533 = vld [vmem:[#allocation11 + $0xa48] sm:$0xff]
        %v1534 = vld [vmem:[#allocation11 + $0xa50] sm:$0xff]
        %v1535 = vld [vmem:[#allocation11 + $0xa58] sm:$0xff]
        %v1536 = vld [vmem:[#allocation11 + $0xa60] sm:$0xff]
        %v1537 = vld [vmem:[#allocation11 + $0xa68] sm:$0xff]
        %v1538 = vld [vmem:[#allocation11 + $0xa70] sm:$0xff]
        %v1539 = vld [vmem:[#allocation11 + $0xa78] sm:$0xff]
        %v1540 = vld [vmem:[#allocation11 + $0xa80] sm:$0xff]
        %v1541 = vld [vmem:[#allocation11 + $0xa88] sm:$0xff]
        %v1542 = vld [vmem:[#allocation11 + $0xa90] sm:$0xff]
        %v1543 = vld [vmem:[#allocation11 + $0xa98] sm:$0xff]
        %v1544 = vld [vmem:[#allocation11 + $0xaa0] sm:$0xff]
        %v1545 = vld [vmem:[#allocation11 + $0xaa8] sm:$0xff]
        %v1546 = vld [vmem:[#allocation11 + $0xab0] sm:$0xff]
        %v1547 = vld [vmem:[#allocation11 + $0xab8] sm:$0xff]
        %v1548 = vld [vmem:[#allocation11 + $0xac0] sm:$0xff]
        %v1549 = vld [vmem:[#allocation11 + $0xac8] sm:$0xff]
        %v1550 = vld [vmem:[#allocation11 + $0xad0] sm:$0xff]
        %v1551 = vld [vmem:[#allocation11 + $0xad8] sm:$0xff]
        %v1552 = vld [vmem:[#allocation11 + $0xae0] sm:$0xff]
        %v1553 = vld [vmem:[#allocation11 + $0xae8] sm:$0xff]
        %v1554 = vld [vmem:[#allocation11 + $0xaf0] sm:$0xff]
        %v1555 = vld [vmem:[#allocation11 + $0xaf8] sm:$0xff]
        %v1556 = vld [vmem:[#allocation11 + $0xb00] sm:$0xff]
        %v1557 = vld [vmem:[#allocation11 + $0xb08] sm:$0xff]
        %v1558 = vld [vmem:[#allocation11 + $0xb10] sm:$0xff]
        %v1559 = vld [vmem:[#allocation11 + $0xb18] sm:$0xff]
        %v1560 = vld [vmem:[#allocation11 + $0xb20] sm:$0xff]
        %v1561 = vld [vmem:[#allocation11 + $0xb28] sm:$0xff]
        %v1562 = vld [vmem:[#allocation11 + $0xb30] sm:$0xff]
        %v1563 = vld [vmem:[#allocation11 + $0xb38] sm:$0xff]
        %v1564 = vld [vmem:[#allocation11 + $0xb40] sm:$0xff]
        %v1565 = vld [vmem:[#allocation11 + $0xb48] sm:$0xff]
        %v1566 = vld [vmem:[#allocation11 + $0xb50] sm:$0xff]
        %v1567 = vld [vmem:[#allocation11 + $0xb58] sm:$0xff]
        %v1568 = vld [vmem:[#allocation11 + $0xb60] sm:$0xff]
        %v1569 = vld [vmem:[#allocation11 + $0xb68] sm:$0xff]
        %v1570 = vld [vmem:[#allocation11 + $0xb70] sm:$0xff]
        %v1571 = vld [vmem:[#allocation11 + $0xb78] sm:$0xff]
        %v1572 = vld [vmem:[#allocation11 + $0xb80] sm:$0xff]
        %v1573 = vld [vmem:[#allocation11 + $0xb88] sm:$0xff]
        %v1574 = vld [vmem:[#allocation11 + $0xb90] sm:$0xff]
        %v1575 = vld [vmem:[#allocation11 + $0xb98] sm:$0xff]
        %v1576 = vld [vmem:[#allocation11 + $0xba0] sm:$0xff]
        %v1577 = vld [vmem:[#allocation11 + $0xba8] sm:$0xff]
        %v1578 = vld [vmem:[#allocation11 + $0xbb0] sm:$0xff]
        %v1579 = vld [vmem:[#allocation11 + $0xbb8] sm:$0xff]
        %v1580 = vld [vmem:[#allocation11 + $0xbc0] sm:$0xff]
        %v1581 = vld [vmem:[#allocation11 + $0xbc8] sm:$0xff]
        %v1582 = vld [vmem:[#allocation11 + $0xbd0] sm:$0xff]
        %v1583 = vld [vmem:[#allocation11 + $0xbd8] sm:$0xff]
        %v1584 = vld [vmem:[#allocation11 + $0xbe0] sm:$0xff]
        %v1585 = vld [vmem:[#allocation11 + $0xbe8] sm:$0xff]
        %v1586 = vld [vmem:[#allocation11 + $0xbf0] sm:$0xff]
        %v1587 = vld [vmem:[#allocation11 + $0xbf8] sm:$0xff]
        %v1588 = vld [vmem:[#allocation11 + $0xc00] sm:$0xff]
        %v1589 = vld [vmem:[#allocation11 + $0xc08] sm:$0xff]
        %v1590 = vld [vmem:[#allocation11 + $0xc10] sm:$0xff]
        %v1591 = vld [vmem:[#allocation11 + $0xc18] sm:$0xff]
        %v1592 = vld [vmem:[#allocation11 + $0xc20] sm:$0xff]
        %v1593 = vld [vmem:[#allocation11 + $0xc28] sm:$0xff]
        %v1594 = vld [vmem:[#allocation11 + $0xc30] sm:$0xff]
        %v1595 = vld [vmem:[#allocation11 + $0xc38] sm:$0xff]
        %v1596 = vld [vmem:[#allocation11 + $0xc40] sm:$0xff]
        %v1597 = vld [vmem:[#allocation11 + $0xc48] sm:$0xff]
        %v1598 = vld [vmem:[#allocation11 + $0xc50] sm:$0xff]
        %v1599 = vld [vmem:[#allocation11 + $0xc58] sm:$0xff]
        %v1600 = vld [vmem:[#allocation11 + $0xc60] sm:$0xff]
        %v1601 = vld [vmem:[#allocation11 + $0xc68] sm:$0xff]
        %v1602 = vld [vmem:[#allocation11 + $0xc70] sm:$0xff]
        %v1603 = vld [vmem:[#allocation11 + $0xc78] sm:$0xff]
        %v1604 = vld [vmem:[#allocation11 + $0xc80] sm:$0xff]
        %v1605 = vld [vmem:[#allocation11 + $0xc88] sm:$0xff]
        %v1606 = vld [vmem:[#allocation11 + $0xc90] sm:$0xff]
        %v1607 = vld [vmem:[#allocation11 + $0xc98] sm:$0xff]
        %v1608 = vld [vmem:[#allocation11 + $0xca0] sm:$0xff]
        %v1609 = vld [vmem:[#allocation11 + $0xca8] sm:$0xff]
        %v1610 = vld [vmem:[#allocation11 + $0xcb0] sm:$0xff]
        %v1611 = vld [vmem:[#allocation11 + $0xcb8] sm:$0xff]
        %v1612 = vld [vmem:[#allocation11 + $0xcc0] sm:$0xff]
        %v1613 = vld [vmem:[#allocation11 + $0xcc8] sm:$0xff]
        %v1614 = vld [vmem:[#allocation11 + $0xcd0] sm:$0xff]
        %v1615 = vld [vmem:[#allocation11 + $0xcd8] sm:$0xff]
        %v1616 = vld [vmem:[#allocation11 + $0xce0] sm:$0xff]
        %v1617 = vld [vmem:[#allocation11 + $0xce8] sm:$0xff]
        %v1618 = vld [vmem:[#allocation11 + $0xcf0] sm:$0xff]
        %v1619 = vld [vmem:[#allocation11 + $0xcf8] sm:$0xff]
        %v1620 = vld [vmem:[#allocation11 + $0xd00] sm:$0xff]
        %v1621 = vld [vmem:[#allocation11 + $0xd08] sm:$0xff]
        %v1622 = vld [vmem:[#allocation11 + $0xd10] sm:$0xff]
        %v1623 = vld [vmem:[#allocation11 + $0xd18] sm:$0xff]
        %v1624 = vld [vmem:[#allocation11 + $0xd20] sm:$0xff]
        %v1625 = vld [vmem:[#allocation11 + $0xd28] sm:$0xff]
        %v1626 = vld [vmem:[#allocation11 + $0xd30] sm:$0xff]
        %v1627 = vld [vmem:[#allocation11 + $0xd38] sm:$0xff]
        %v1628 = vld [vmem:[#allocation11 + $0xd40] sm:$0xff]
        %v1629 = vld [vmem:[#allocation11 + $0xd48] sm:$0xff]
        %v1630 = vld [vmem:[#allocation11 + $0xd50] sm:$0xff]
        %v1631 = vld [vmem:[#allocation11 + $0xd58] sm:$0xff]
        %v1632 = vld [vmem:[#allocation11 + $0xd60] sm:$0xff]
        %v1633 = vld [vmem:[#allocation11 + $0xd68] sm:$0xff]
        %v1634 = vld [vmem:[#allocation11 + $0xd70] sm:$0xff]
        %v1635 = vld [vmem:[#allocation11 + $0xd78] sm:$0xff]
        %v1636 = vld [vmem:[#allocation11 + $0xd80] sm:$0xff]
        %v1637 = vld [vmem:[#allocation11 + $0xd88] sm:$0xff]
        %v1638 = vld [vmem:[#allocation11 + $0xd90] sm:$0xff]
        %v1639 = vld [vmem:[#allocation11 + $0xd98] sm:$0xff]
        %v1640 = vld [vmem:[#allocation11 + $0xda0] sm:$0xff]
        %v1641 = vld [vmem:[#allocation11 + $0xda8] sm:$0xff]
        %v1642 = vld [vmem:[#allocation11 + $0xdb0] sm:$0xff]
        %v1643 = vld [vmem:[#allocation11 + $0xdb8] sm:$0xff]
        %v1644 = vld [vmem:[#allocation11 + $0xdc0] sm:$0xff]
        %v1645 = vld [vmem:[#allocation11 + $0xdc8] sm:$0xff]
        %v1646 = vld [vmem:[#allocation11 + $0xdd0] sm:$0xff]
        %v1647 = vld [vmem:[#allocation11 + $0xdd8] sm:$0xff]
        %v1648 = vld [vmem:[#allocation11 + $0xde0] sm:$0xff]
        %v1649 = vld [vmem:[#allocation11 + $0xde8] sm:$0xff]
        %v1650 = vld [vmem:[#allocation11 + $0xdf0] sm:$0xff]
        %v1651 = vld [vmem:[#allocation11 + $0xdf8] sm:$0xff]
        %v1652 = vld [vmem:[#allocation11 + $0xe00] sm:$0xff]
        %v1653 = vld [vmem:[#allocation11 + $0xe08] sm:$0xff]
        %v1654 = vld [vmem:[#allocation11 + $0xe10] sm:$0xff]
        %v1655 = vld [vmem:[#allocation11 + $0xe18] sm:$0xff]
        %v1656 = vld [vmem:[#allocation11 + $0xe20] sm:$0xff]
        %v1657 = vld [vmem:[#allocation11 + $0xe28] sm:$0xff]
        %v1658 = vld [vmem:[#allocation11 + $0xe30] sm:$0xff]
        %v1659 = vld [vmem:[#allocation11 + $0xe38] sm:$0xff]
        %v1660 = vld [vmem:[#allocation11 + $0xe40] sm:$0xff]
        %v1661 = vld [vmem:[#allocation11 + $0xe48] sm:$0xff]
        %v1662 = vld [vmem:[#allocation11 + $0xe50] sm:$0xff]
        %v1663 = vld [vmem:[#allocation11 + $0xe58] sm:$0xff]
        %v1664 = vld [vmem:[#allocation11 + $0xe60] sm:$0xff]
        %v1665 = vld [vmem:[#allocation11 + $0xe68] sm:$0xff]
        %v1666 = vld [vmem:[#allocation11 + $0xe70] sm:$0xff]
        %v1667 = vld [vmem:[#allocation11 + $0xe78] sm:$0xff]
        %v1668 = vld [vmem:[#allocation11 + $0xe80] sm:$0xff]
        %v1669 = vld [vmem:[#allocation11 + $0xe88] sm:$0xff]
        %v1670 = vld [vmem:[#allocation11 + $0xe90] sm:$0xff]
        %v1671 = vld [vmem:[#allocation11 + $0xe98] sm:$0xff]
        %v1672 = vld [vmem:[#allocation11 + $0xea0] sm:$0xff]
        %v1673 = vld [vmem:[#allocation11 + $0xea8] sm:$0xff]
        %v1674 = vld [vmem:[#allocation11 + $0xeb0] sm:$0xff]
        %v1675 = vld [vmem:[#allocation11 + $0xeb8] sm:$0xff]
        %v1676 = vld [vmem:[#allocation11 + $0xec0] sm:$0xff]
        %v1677 = vld [vmem:[#allocation11 + $0xec8] sm:$0xff]
        %v1678 = vld [vmem:[#allocation11 + $0xed0] sm:$0xff]
        %v1679 = vld [vmem:[#allocation11 + $0xed8] sm:$0xff]
        %v1680 = vld [vmem:[#allocation11 + $0xee0] sm:$0xff]
        %v1681 = vld [vmem:[#allocation11 + $0xee8] sm:$0xff]
        %v1682 = vld [vmem:[#allocation11 + $0xef0] sm:$0xff]
        %v1683 = vld [vmem:[#allocation11 + $0xef8] sm:$0xff]
        %v1684 = vld [vmem:[#allocation11 + $0xf00] sm:$0xff]
        %v1685 = vld [vmem:[#allocation11 + $0xf08] sm:$0xff]
        %v1686 = vld [vmem:[#allocation11 + $0xf10] sm:$0xff]
        %v1687 = vld [vmem:[#allocation11 + $0xf18] sm:$0xff]
        %v1688 = vld [vmem:[#allocation11 + $0xf20] sm:$0xff]
        %v1689 = vld [vmem:[#allocation11 + $0xf28] sm:$0xff]
        %v1690 = vld [vmem:[#allocation11 + $0xf30] sm:$0xff]
        %v1691 = vld [vmem:[#allocation11 + $0xf38] sm:$0xff]
        %v1692 = vld [vmem:[#allocation11 + $0xf40] sm:$0xff]
        %v1693 = vld [vmem:[#allocation11 + $0xf48] sm:$0xff]
        %v1694 = vld [vmem:[#allocation11 + $0xf50] sm:$0xff]
        %v1695 = vld [vmem:[#allocation11 + $0xf58] sm:$0xff]
        %v1696 = vld [vmem:[#allocation11 + $0xf60] sm:$0xff]
        %v1697 = vld [vmem:[#allocation11 + $0xf68] sm:$0xff]
        %v1698 = vld [vmem:[#allocation11 + $0xf70] sm:$0xff]
        %v1699 = vld [vmem:[#allocation11 + $0xf78] sm:$0xff]
        %v1700 = vld [vmem:[#allocation11 + $0xf80] sm:$0xff]
        %v1701 = vld [vmem:[#allocation11 + $0xf88] sm:$0xff]
        %v1702 = vld [vmem:[#allocation11 + $0xf90] sm:$0xff]
        %v1703 = vld [vmem:[#allocation11 + $0xf98] sm:$0xff]
        %v1704 = vld [vmem:[#allocation11 + $0xfa0] sm:$0xff]
        %v1705 = vld [vmem:[#allocation11 + $0xfa8] sm:$0xff]
        %v1706 = vld [vmem:[#allocation11 + $0xfb0] sm:$0xff]
        %v1707 = vld [vmem:[#allocation11 + $0xfb8] sm:$0xff]
        %v1708 = vld [vmem:[#allocation11 + $0xfc0] sm:$0xff]
        %v1709 = vld [vmem:[#allocation11 + $0xfc8] sm:$0xff]
        %v1710 = vld [vmem:[#allocation11 + $0xfd0] sm:$0xff]
        %v1711 = vld [vmem:[#allocation11 + $0xfd8] sm:$0xff]
        %v1712 = vld [vmem:[#allocation11 + $0xfe0] sm:$0xff]
        %v1713 = vld [vmem:[#allocation11 + $0xfe8] sm:$0xff]
        %v1714 = vld [vmem:[#allocation11 + $0xff0] sm:$0xff]
        %v1715 = vld [vmem:[#allocation11 + $0xff8] sm:$0xff]
        %1716 = vmatpush.msra.mxu0 %v1444
        %1717 = vmatpush.msra.mxu0 %v1428
        %1718 = vmatpush.msra.mxu0 %v1412
        %1719 = vmatpush.msra.mxu0 %v1396
        %1720 = vmatpush.msra.mxu0 %v1380
        %1721 = vmatpush.msra.mxu0 %v1364
        %1722 = vmatpush.msra.mxu0 %v1348
        %1723 = vmatpush.msra.mxu0 %v1332
        %1724 = vmatpush.msra.mxu0 %v1316
        %1725 = vmatpush.msra.mxu0 %v1300
        %1726 = vmatpush.msra.mxu0 %v1284
        %1727 = vmatpush.msra.mxu0 %v1268
        %1728 = vmatpush.msra.mxu0 %v1252
        %1729 = vmatpush.msra.mxu0 %v1236
        %1730 = vmatpush.msra.mxu0 %v1220
        %1731 = vmatpush.msra.mxu0 %v1204
        %1732 = vmatmul.f32.gmra.mxu0 %v1202
        %v1733 = vpop.f32.mrf.mxu0
        %v1734 = vadd.f32 0.0, %v1733
        %1735 = vdwg.mxu0
        %1736 = vmatpush.msra.mxu0 %v1700
        %1737 = vmatpush.msra.mxu0 %v1684
        %1738 = vmatpush.msra.mxu0 %v1668
        %1739 = vmatpush.msra.mxu0 %v1652
        %1740 = vmatpush.msra.mxu0 %v1636
        %1741 = vmatpush.msra.mxu0 %v1620
        %1742 = vmatpush.msra.mxu0 %v1604
        %1743 = vmatpush.msra.mxu0 %v1588
        %1744 = vmatpush.msra.mxu0 %v1572
        %1745 = vmatpush.msra.mxu0 %v1556
        %1746 = vmatpush.msra.mxu0 %v1540
        %1747 = vmatpush.msra.mxu0 %v1524
        %1748 = vmatpush.msra.mxu0 %v1508
        %1749 = vmatpush.msra.mxu0 %v1492
        %1750 = vmatpush.msra.mxu0 %v1476
        %1751 = vmatpush.msra.mxu0 %v1460
        %1752 = vmatmul.f32.gmra.mxu0 %v1203
        %v1753 = vpop.f32.mrf.mxu0
        %v1754 = vadd.f32 %v1734, %v1753
        %1755 = vdwg.mxu0
        %1756 = vmatpush.msra.mxu0 %v1445
        %1757 = vmatpush.msra.mxu0 %v1429
        %1758 = vmatpush.msra.mxu0 %v1413
        %1759 = vmatpush.msra.mxu0 %v1397
        %1760 = vmatpush.msra.mxu0 %v1381
        %1761 = vmatpush.msra.mxu0 %v1365
        %1762 = vmatpush.msra.mxu0 %v1349
        %1763 = vmatpush.msra.mxu0 %v1333
        %1764 = vmatpush.msra.mxu0 %v1317
        %1765 = vmatpush.msra.mxu0 %v1301
        %1766 = vmatpush.msra.mxu0 %v1285
        %1767 = vmatpush.msra.mxu0 %v1269
        %1768 = vmatpush.msra.mxu0 %v1253
        %1769 = vmatpush.msra.mxu0 %v1237
        %1770 = vmatpush.msra.mxu0 %v1221
        %1771 = vmatpush.msra.mxu0 %v1205
        %1772 = vmatmul.f32.gmra.mxu0 %v1202
        %v1773 = vpop.f32.mrf.mxu0
        %v1774 = vadd.f32 0.0, %v1773
        %1775 = vdwg.mxu0
        %1776 = vmatpush.msra.mxu0 %v1701
        %1777 = vmatpush.msra.mxu0 %v1685
        %1778 = vmatpush.msra.mxu0 %v1669
        %1779 = vmatpush.msra.mxu0 %v1653
        %1780 = vmatpush.msra.mxu0 %v1637
        %1781 = vmatpush.msra.mxu0 %v1621
        %1782 = vmatpush.msra.mxu0 %v1605
        %1783 = vmatpush.msra.mxu0 %v1589
        %1784 = vmatpush.msra.mxu0 %v1573
        %1785 = vmatpush.msra.mxu0 %v1557
        %1786 = vmatpush.msra.mxu0 %v1541
        %1787 = vmatpush.msra.mxu0 %v1525
        %1788 = vmatpush.msra.mxu0 %v1509
        %1789 = vmatpush.msra.mxu0 %v1493
        %1790 = vmatpush.msra.mxu0 %v1477
        %1791 = vmatpush.msra.mxu0 %v1461
        %1792 = vmatmul.f32.gmra.mxu0 %v1203
        %v1793 = vpop.f32.mrf.mxu0
        %v1794 = vadd.f32 %v1774, %v1793
        %1795 = vdwg.mxu0
        %1796 = vmatpush.msra.mxu0 %v1446
        %1797 = vmatpush.msra.mxu0 %v1430
        %1798 = vmatpush.msra.mxu0 %v1414
        %1799 = vmatpush.msra.mxu0 %v1398
        %1800 = vmatpush.msra.mxu0 %v1382
        %1801 = vmatpush.msra.mxu0 %v1366
        %1802 = vmatpush.msra.mxu0 %v1350
        %1803 = vmatpush.msra.mxu0 %v1334
        %1804 = vmatpush.msra.mxu0 %v1318
        %1805 = vmatpush.msra.mxu0 %v1302
        %1806 = vmatpush.msra.mxu0 %v1286
        %1807 = vmatpush.msra.mxu0 %v1270
        %1808 = vmatpush.msra.mxu0 %v1254
        %1809 = vmatpush.msra.mxu0 %v1238
        %1810 = vmatpush.msra.mxu0 %v1222
        %1811 = vmatpush.msra.mxu0 %v1206
        %1812 = vmatmul.f32.gmra.mxu0 %v1202
        %v1813 = vpop.f32.mrf.mxu0
        %v1814 = vadd.f32 0.0, %v1813
        %1815 = vdwg.mxu0
        %1816 = vmatpush.msra.mxu0 %v1702
        %1817 = vmatpush.msra.mxu0 %v1686
        %1818 = vmatpush.msra.mxu0 %v1670
        %1819 = vmatpush.msra.mxu0 %v1654
        %1820 = vmatpush.msra.mxu0 %v1638
        %1821 = vmatpush.msra.mxu0 %v1622
        %1822 = vmatpush.msra.mxu0 %v1606
        %1823 = vmatpush.msra.mxu0 %v1590
        %1824 = vmatpush.msra.mxu0 %v1574
        %1825 = vmatpush.msra.mxu0 %v1558
        %1826 = vmatpush.msra.mxu0 %v1542
        %1827 = vmatpush.msra.mxu0 %v1526
        %1828 = vmatpush.msra.mxu0 %v1510
        %1829 = vmatpush.msra.mxu0 %v1494
        %1830 = vmatpush.msra.mxu0 %v1478
        %1831 = vmatpush.msra.mxu0 %v1462
        %1832 = vmatmul.f32.gmra.mxu0 %v1203
        %v1833 = vpop.f32.mrf.mxu0
        %v1834 = vadd.f32 %v1814, %v1833
        %1835 = vdwg.mxu0
        %1836 = vmatpush.msra.mxu0 %v1447
        %1837 = vmatpush.msra.mxu0 %v1431
        %1838 = vmatpush.msra.mxu0 %v1415
        %1839 = vmatpush.msra.mxu0 %v1399
        %1840 = vmatpush.msra.mxu0 %v1383
        %1841 = vmatpush.msra.mxu0 %v1367
        %1842 = vmatpush.msra.mxu0 %v1351
        %1843 = vmatpush.msra.mxu0 %v1335
        %1844 = vmatpush.msra.mxu0 %v1319
        %1845 = vmatpush.msra.mxu0 %v1303
        %1846 = vmatpush.msra.mxu0 %v1287
        %1847 = vmatpush.msra.mxu0 %v1271
        %1848 = vmatpush.msra.mxu0 %v1255
        %1849 = vmatpush.msra.mxu0 %v1239
        %1850 = vmatpush.msra.mxu0 %v1223
        %1851 = vmatpush.msra.mxu0 %v1207
        %1852 = vmatmul.f32.gmra.mxu0 %v1202
        %v1853 = vpop.f32.mrf.mxu0
        %v1854 = vadd.f32 0.0, %v1853
        %1855 = vdwg.mxu0
        %1856 = vmatpush.msra.mxu0 %v1703
        %1857 = vmatpush.msra.mxu0 %v1687
        %1858 = vmatpush.msra.mxu0 %v1671
        %1859 = vmatpush.msra.mxu0 %v1655
        %1860 = vmatpush.msra.mxu0 %v1639
        %1861 = vmatpush.msra.mxu0 %v1623
        %1862 = vmatpush.msra.mxu0 %v1607
        %1863 = vmatpush.msra.mxu0 %v1591
        %1864 = vmatpush.msra.mxu0 %v1575
        %1865 = vmatpush.msra.mxu0 %v1559
        %1866 = vmatpush.msra.mxu0 %v1543
        %1867 = vmatpush.msra.mxu0 %v1527
        %1868 = vmatpush.msra.mxu0 %v1511
        %1869 = vmatpush.msra.mxu0 %v1495
        %1870 = vmatpush.msra.mxu0 %v1479
        %1871 = vmatpush.msra.mxu0 %v1463
        %1872 = vmatmul.f32.gmra.mxu0 %v1203
        %v1873 = vpop.f32.mrf.mxu0
        %v1874 = vadd.f32 %v1854, %v1873
        %1875 = vdwg.mxu0
        %1876 = vmatpush.msra.mxu0 %v1448
        %1877 = vmatpush.msra.mxu0 %v1432
        %1878 = vmatpush.msra.mxu0 %v1416
        %1879 = vmatpush.msra.mxu0 %v1400
        %1880 = vmatpush.msra.mxu0 %v1384
        %1881 = vmatpush.msra.mxu0 %v1368
        %1882 = vmatpush.msra.mxu0 %v1352
        %1883 = vmatpush.msra.mxu0 %v1336
        %1884 = vmatpush.msra.mxu0 %v1320
        %1885 = vmatpush.msra.mxu0 %v1304
        %1886 = vmatpush.msra.mxu0 %v1288
        %1887 = vmatpush.msra.mxu0 %v1272
        %1888 = vmatpush.msra.mxu0 %v1256
        %1889 = vmatpush.msra.mxu0 %v1240
        %1890 = vmatpush.msra.mxu0 %v1224
        %1891 = vmatpush.msra.mxu0 %v1208
        %1892 = vmatmul.f32.gmra.mxu0 %v1202
        %v1893 = vpop.f32.mrf.mxu0
        %v1894 = vadd.f32 0.0, %v1893
        %1895 = vdwg.mxu0
        %1896 = vmatpush.msra.mxu0 %v1704
        %1897 = vmatpush.msra.mxu0 %v1688
        %1898 = vmatpush.msra.mxu0 %v1672
        %1899 = vmatpush.msra.mxu0 %v1656
        %1900 = vmatpush.msra.mxu0 %v1640
        %1901 = vmatpush.msra.mxu0 %v1624
        %1902 = vmatpush.msra.mxu0 %v1608
        %1903 = vmatpush.msra.mxu0 %v1592
        %1904 = vmatpush.msra.mxu0 %v1576
        %1905 = vmatpush.msra.mxu0 %v1560
        %1906 = vmatpush.msra.mxu0 %v1544
        %1907 = vmatpush.msra.mxu0 %v1528
        %1908 = vmatpush.msra.mxu0 %v1512
        %1909 = vmatpush.msra.mxu0 %v1496
        %1910 = vmatpush.msra.mxu0 %v1480
        %1911 = vmatpush.msra.mxu0 %v1464
        %1912 = vmatmul.f32.gmra.mxu0 %v1203
        %v1913 = vpop.f32.mrf.mxu0
        %v1914 = vadd.f32 %v1894, %v1913
        %1915 = vdwg.mxu0
        %1916 = vmatpush.msra.mxu0 %v1449
        %1917 = vmatpush.msra.mxu0 %v1433
        %1918 = vmatpush.msra.mxu0 %v1417
        %1919 = vmatpush.msra.mxu0 %v1401
        %1920 = vmatpush.msra.mxu0 %v1385
        %1921 = vmatpush.msra.mxu0 %v1369
        %1922 = vmatpush.msra.mxu0 %v1353
        %1923 = vmatpush.msra.mxu0 %v1337
        %1924 = vmatpush.msra.mxu0 %v1321
        %1925 = vmatpush.msra.mxu0 %v1305
        %1926 = vmatpush.msra.mxu0 %v1289
        %1927 = vmatpush.msra.mxu0 %v1273
        %1928 = vmatpush.msra.mxu0 %v1257
        %1929 = vmatpush.msra.mxu0 %v1241
        %1930 = vmatpush.msra.mxu0 %v1225
        %1931 = vmatpush.msra.mxu0 %v1209
        %1932 = vmatmul.f32.gmra.mxu0 %v1202
        %v1933 = vpop.f32.mrf.mxu0
        %v1934 = vadd.f32 0.0, %v1933
        %1935 = vdwg.mxu0
        %1936 = vmatpush.msra.mxu0 %v1705
        %1937 = vmatpush.msra.mxu0 %v1689
        %1938 = vmatpush.msra.mxu0 %v1673
        %1939 = vmatpush.msra.mxu0 %v1657
        %1940 = vmatpush.msra.mxu0 %v1641
        %1941 = vmatpush.msra.mxu0 %v1625
        %1942 = vmatpush.msra.mxu0 %v1609
        %1943 = vmatpush.msra.mxu0 %v1593
        %1944 = vmatpush.msra.mxu0 %v1577
        %1945 = vmatpush.msra.mxu0 %v1561
        %1946 = vmatpush.msra.mxu0 %v1545
        %1947 = vmatpush.msra.mxu0 %v1529
        %1948 = vmatpush.msra.mxu0 %v1513
        %1949 = vmatpush.msra.mxu0 %v1497
        %1950 = vmatpush.msra.mxu0 %v1481
        %1951 = vmatpush.msra.mxu0 %v1465
        %1952 = vmatmul.f32.gmra.mxu0 %v1203
        %v1953 = vpop.f32.mrf.mxu0
        %v1954 = vadd.f32 %v1934, %v1953
        %1955 = vdwg.mxu0
        %1956 = vmatpush.msra.mxu0 %v1450
        %1957 = vmatpush.msra.mxu0 %v1434
        %1958 = vmatpush.msra.mxu0 %v1418
        %1959 = vmatpush.msra.mxu0 %v1402
        %1960 = vmatpush.msra.mxu0 %v1386
        %1961 = vmatpush.msra.mxu0 %v1370
        %1962 = vmatpush.msra.mxu0 %v1354
        %1963 = vmatpush.msra.mxu0 %v1338
        %1964 = vmatpush.msra.mxu0 %v1322
        %1965 = vmatpush.msra.mxu0 %v1306
        %1966 = vmatpush.msra.mxu0 %v1290
        %1967 = vmatpush.msra.mxu0 %v1274
        %1968 = vmatpush.msra.mxu0 %v1258
        %1969 = vmatpush.msra.mxu0 %v1242
        %1970 = vmatpush.msra.mxu0 %v1226
        %1971 = vmatpush.msra.mxu0 %v1210
        %1972 = vmatmul.f32.gmra.mxu0 %v1202
        %v1973 = vpop.f32.mrf.mxu0
        %v1974 = vadd.f32 0.0, %v1973
        %1975 = vdwg.mxu0
        %1976 = vmatpush.msra.mxu0 %v1706
        %1977 = vmatpush.msra.mxu0 %v1690
        %1978 = vmatpush.msra.mxu0 %v1674
        %1979 = vmatpush.msra.mxu0 %v1658
        %1980 = vmatpush.msra.mxu0 %v1642
        %1981 = vmatpush.msra.mxu0 %v1626
        %1982 = vmatpush.msra.mxu0 %v1610
        %1983 = vmatpush.msra.mxu0 %v1594
        %1984 = vmatpush.msra.mxu0 %v1578
        %1985 = vmatpush.msra.mxu0 %v1562
        %1986 = vmatpush.msra.mxu0 %v1546
        %1987 = vmatpush.msra.mxu0 %v1530
        %1988 = vmatpush.msra.mxu0 %v1514
        %1989 = vmatpush.msra.mxu0 %v1498
        %1990 = vmatpush.msra.mxu0 %v1482
        %1991 = vmatpush.msra.mxu0 %v1466
        %1992 = vmatmul.f32.gmra.mxu0 %v1203
        %v1993 = vpop.f32.mrf.mxu0
        %v1994 = vadd.f32 %v1974, %v1993
        %1995 = vdwg.mxu0
        %1996 = vmatpush.msra.mxu0 %v1451
        %1997 = vmatpush.msra.mxu0 %v1435
        %1998 = vmatpush.msra.mxu0 %v1419
        %1999 = vmatpush.msra.mxu0 %v1403
        %2000 = vmatpush.msra.mxu0 %v1387
        %2001 = vmatpush.msra.mxu0 %v1371
        %2002 = vmatpush.msra.mxu0 %v1355
        %2003 = vmatpush.msra.mxu0 %v1339
        %2004 = vmatpush.msra.mxu0 %v1323
        %2005 = vmatpush.msra.mxu0 %v1307
        %2006 = vmatpush.msra.mxu0 %v1291
        %2007 = vmatpush.msra.mxu0 %v1275
        %2008 = vmatpush.msra.mxu0 %v1259
        %2009 = vmatpush.msra.mxu0 %v1243
        %2010 = vmatpush.msra.mxu0 %v1227
        %2011 = vmatpush.msra.mxu0 %v1211
        %2012 = vmatmul.f32.gmra.mxu0 %v1202
        %v2013 = vpop.f32.mrf.mxu0
        %v2014 = vadd.f32 0.0, %v2013
        %2015 = vdwg.mxu0
        %2016 = vmatpush.msra.mxu0 %v1707
        %2017 = vmatpush.msra.mxu0 %v1691
        %2018 = vmatpush.msra.mxu0 %v1675
        %2019 = vmatpush.msra.mxu0 %v1659
        %2020 = vmatpush.msra.mxu0 %v1643
        %2021 = vmatpush.msra.mxu0 %v1627
        %2022 = vmatpush.msra.mxu0 %v1611
        %2023 = vmatpush.msra.mxu0 %v1595
        %2024 = vmatpush.msra.mxu0 %v1579
        %2025 = vmatpush.msra.mxu0 %v1563
        %2026 = vmatpush.msra.mxu0 %v1547
        %2027 = vmatpush.msra.mxu0 %v1531
        %2028 = vmatpush.msra.mxu0 %v1515
        %2029 = vmatpush.msra.mxu0 %v1499
        %2030 = vmatpush.msra.mxu0 %v1483
        %2031 = vmatpush.msra.mxu0 %v1467
        %2032 = vmatmul.f32.gmra.mxu0 %v1203
        %v2033 = vpop.f32.mrf.mxu0
        %v2034 = vadd.f32 %v2014, %v2033
        %2035 = vdwg.mxu0
        %2036 = vmatpush.msra.mxu0 %v1452
        %2037 = vmatpush.msra.mxu0 %v1436
        %2038 = vmatpush.msra.mxu0 %v1420
        %2039 = vmatpush.msra.mxu0 %v1404
        %2040 = vmatpush.msra.mxu0 %v1388
        %2041 = vmatpush.msra.mxu0 %v1372
        %2042 = vmatpush.msra.mxu0 %v1356
        %2043 = vmatpush.msra.mxu0 %v1340
        %2044 = vmatpush.msra.mxu0 %v1324
        %2045 = vmatpush.msra.mxu0 %v1308
        %2046 = vmatpush.msra.mxu0 %v1292
        %2047 = vmatpush.msra.mxu0 %v1276
        %2048 = vmatpush.msra.mxu0 %v1260
        %2049 = vmatpush.msra.mxu0 %v1244
        %2050 = vmatpush.msra.mxu0 %v1228
        %2051 = vmatpush.msra.mxu0 %v1212
        %2052 = vmatmul.f32.gmra.mxu0 %v1202
        %v2053 = vpop.f32.mrf.mxu0
        %v2054 = vadd.f32 0.0, %v2053
        %2055 = vdwg.mxu0
        %2056 = vmatpush.msra.mxu0 %v1708
        %2057 = vmatpush.msra.mxu0 %v1692
        %2058 = vmatpush.msra.mxu0 %v1676
        %2059 = vmatpush.msra.mxu0 %v1660
        %2060 = vmatpush.msra.mxu0 %v1644
        %2061 = vmatpush.msra.mxu0 %v1628
        %2062 = vmatpush.msra.mxu0 %v1612
        %2063 = vmatpush.msra.mxu0 %v1596
        %2064 = vmatpush.msra.mxu0 %v1580
        %2065 = vmatpush.msra.mxu0 %v1564
        %2066 = vmatpush.msra.mxu0 %v1548
        %2067 = vmatpush.msra.mxu0 %v1532
        %2068 = vmatpush.msra.mxu0 %v1516
        %2069 = vmatpush.msra.mxu0 %v1500
        %2070 = vmatpush.msra.mxu0 %v1484
        %2071 = vmatpush.msra.mxu0 %v1468
        %2072 = vmatmul.f32.gmra.mxu0 %v1203
        %v2073 = vpop.f32.mrf.mxu0
        %v2074 = vadd.f32 %v2054, %v2073
        %2075 = vdwg.mxu0
        %2076 = vmatpush.msra.mxu0 %v1453
        %2077 = vmatpush.msra.mxu0 %v1437
        %2078 = vmatpush.msra.mxu0 %v1421
        %2079 = vmatpush.msra.mxu0 %v1405
        %2080 = vmatpush.msra.mxu0 %v1389
        %2081 = vmatpush.msra.mxu0 %v1373
        %2082 = vmatpush.msra.mxu0 %v1357
        %2083 = vmatpush.msra.mxu0 %v1341
        %2084 = vmatpush.msra.mxu0 %v1325
        %2085 = vmatpush.msra.mxu0 %v1309
        %2086 = vmatpush.msra.mxu0 %v1293
        %2087 = vmatpush.msra.mxu0 %v1277
        %2088 = vmatpush.msra.mxu0 %v1261
        %2089 = vmatpush.msra.mxu0 %v1245
        %2090 = vmatpush.msra.mxu0 %v1229
        %2091 = vmatpush.msra.mxu0 %v1213
        %2092 = vmatmul.f32.gmra.mxu0 %v1202
        %v2093 = vpop.f32.mrf.mxu0
        %v2094 = vadd.f32 0.0, %v2093
        %2095 = vdwg.mxu0
        %2096 = vmatpush.msra.mxu0 %v1709
        %2097 = vmatpush.msra.mxu0 %v1693
        %2098 = vmatpush.msra.mxu0 %v1677
        %2099 = vmatpush.msra.mxu0 %v1661
        %2100 = vmatpush.msra.mxu0 %v1645
        %2101 = vmatpush.msra.mxu0 %v1629
        %2102 = vmatpush.msra.mxu0 %v1613
        %2103 = vmatpush.msra.mxu0 %v1597
        %2104 = vmatpush.msra.mxu0 %v1581
        %2105 = vmatpush.msra.mxu0 %v1565
        %2106 = vmatpush.msra.mxu0 %v1549
        %2107 = vmatpush.msra.mxu0 %v1533
        %2108 = vmatpush.msra.mxu0 %v1517
        %2109 = vmatpush.msra.mxu0 %v1501
        %2110 = vmatpush.msra.mxu0 %v1485
        %2111 = vmatpush.msra.mxu0 %v1469
        %2112 = vmatmul.f32.gmra.mxu0 %v1203
        %v2113 = vpop.f32.mrf.mxu0
        %v2114 = vadd.f32 %v2094, %v2113
        %2115 = vdwg.mxu0
        %2116 = vmatpush.msra.mxu0 %v1454
        %2117 = vmatpush.msra.mxu0 %v1438
        %2118 = vmatpush.msra.mxu0 %v1422
        %2119 = vmatpush.msra.mxu0 %v1406
        %2120 = vmatpush.msra.mxu0 %v1390
        %2121 = vmatpush.msra.mxu0 %v1374
        %2122 = vmatpush.msra.mxu0 %v1358
        %2123 = vmatpush.msra.mxu0 %v1342
        %2124 = vmatpush.msra.mxu0 %v1326
        %2125 = vmatpush.msra.mxu0 %v1310
        %2126 = vmatpush.msra.mxu0 %v1294
        %2127 = vmatpush.msra.mxu0 %v1278
        %2128 = vmatpush.msra.mxu0 %v1262
        %2129 = vmatpush.msra.mxu0 %v1246
        %2130 = vmatpush.msra.mxu0 %v1230
        %2131 = vmatpush.msra.mxu0 %v1214
        %2132 = vmatmul.f32.gmra.mxu0 %v1202
        %v2133 = vpop.f32.mrf.mxu0
        %v2134 = vadd.f32 0.0, %v2133
        %2135 = vdwg.mxu0
        %2136 = vmatpush.msra.mxu0 %v1710
        %2137 = vmatpush.msra.mxu0 %v1694
        %2138 = vmatpush.msra.mxu0 %v1678
        %2139 = vmatpush.msra.mxu0 %v1662
        %2140 = vmatpush.msra.mxu0 %v1646
        %2141 = vmatpush.msra.mxu0 %v1630
        %2142 = vmatpush.msra.mxu0 %v1614
        %2143 = vmatpush.msra.mxu0 %v1598
        %2144 = vmatpush.msra.mxu0 %v1582
        %2145 = vmatpush.msra.mxu0 %v1566
        %2146 = vmatpush.msra.mxu0 %v1550
        %2147 = vmatpush.msra.mxu0 %v1534
        %2148 = vmatpush.msra.mxu0 %v1518
        %2149 = vmatpush.msra.mxu0 %v1502
        %2150 = vmatpush.msra.mxu0 %v1486
        %2151 = vmatpush.msra.mxu0 %v1470
        %2152 = vmatmul.f32.gmra.mxu0 %v1203
        %v2153 = vpop.f32.mrf.mxu0
        %v2154 = vadd.f32 %v2134, %v2153
        %2155 = vdwg.mxu0
        %2156 = vmatpush.msra.mxu0 %v1455
        %2157 = vmatpush.msra.mxu0 %v1439
        %2158 = vmatpush.msra.mxu0 %v1423
        %2159 = vmatpush.msra.mxu0 %v1407
        %2160 = vmatpush.msra.mxu0 %v1391
        %2161 = vmatpush.msra.mxu0 %v1375
        %2162 = vmatpush.msra.mxu0 %v1359
        %2163 = vmatpush.msra.mxu0 %v1343
        %2164 = vmatpush.msra.mxu0 %v1327
        %2165 = vmatpush.msra.mxu0 %v1311
        %2166 = vmatpush.msra.mxu0 %v1295
        %2167 = vmatpush.msra.mxu0 %v1279
        %2168 = vmatpush.msra.mxu0 %v1263
        %2169 = vmatpush.msra.mxu0 %v1247
        %2170 = vmatpush.msra.mxu0 %v1231
        %2171 = vmatpush.msra.mxu0 %v1215
        %2172 = vmatmul.f32.gmra.mxu0 %v1202
        %v2173 = vpop.f32.mrf.mxu0
        %v2174 = vadd.f32 0.0, %v2173
        %2175 = vdwg.mxu0
        %2176 = vmatpush.msra.mxu0 %v1711
        %2177 = vmatpush.msra.mxu0 %v1695
        %2178 = vmatpush.msra.mxu0 %v1679
        %2179 = vmatpush.msra.mxu0 %v1663
        %2180 = vmatpush.msra.mxu0 %v1647
        %2181 = vmatpush.msra.mxu0 %v1631
        %2182 = vmatpush.msra.mxu0 %v1615
        %2183 = vmatpush.msra.mxu0 %v1599
        %2184 = vmatpush.msra.mxu0 %v1583
        %2185 = vmatpush.msra.mxu0 %v1567
        %2186 = vmatpush.msra.mxu0 %v1551
        %2187 = vmatpush.msra.mxu0 %v1535
        %2188 = vmatpush.msra.mxu0 %v1519
        %2189 = vmatpush.msra.mxu0 %v1503
        %2190 = vmatpush.msra.mxu0 %v1487
        %2191 = vmatpush.msra.mxu0 %v1471
        %2192 = vmatmul.f32.gmra.mxu0 %v1203
        %v2193 = vpop.f32.mrf.mxu0
        %v2194 = vadd.f32 %v2174, %v2193
        %2195 = vdwg.mxu0
        %2196 = vmatpush.msra.mxu0 %v1456
        %2197 = vmatpush.msra.mxu0 %v1440
        %2198 = vmatpush.msra.mxu0 %v1424
        %2199 = vmatpush.msra.mxu0 %v1408
        %2200 = vmatpush.msra.mxu0 %v1392
        %2201 = vmatpush.msra.mxu0 %v1376
        %2202 = vmatpush.msra.mxu0 %v1360
        %2203 = vmatpush.msra.mxu0 %v1344
        %2204 = vmatpush.msra.mxu0 %v1328
        %2205 = vmatpush.msra.mxu0 %v1312
        %2206 = vmatpush.msra.mxu0 %v1296
        %2207 = vmatpush.msra.mxu0 %v1280
        %2208 = vmatpush.msra.mxu0 %v1264
        %2209 = vmatpush.msra.mxu0 %v1248
        %2210 = vmatpush.msra.mxu0 %v1232
        %2211 = vmatpush.msra.mxu0 %v1216
        %2212 = vmatmul.f32.gmra.mxu0 %v1202
        %v2213 = vpop.f32.mrf.mxu0
        %v2214 = vadd.f32 0.0, %v2213
        %2215 = vdwg.mxu0
        %2216 = vmatpush.msra.mxu0 %v1712
        %2217 = vmatpush.msra.mxu0 %v1696
        %2218 = vmatpush.msra.mxu0 %v1680
        %2219 = vmatpush.msra.mxu0 %v1664
        %2220 = vmatpush.msra.mxu0 %v1648
        %2221 = vmatpush.msra.mxu0 %v1632
        %2222 = vmatpush.msra.mxu0 %v1616
        %2223 = vmatpush.msra.mxu0 %v1600
        %2224 = vmatpush.msra.mxu0 %v1584
        %2225 = vmatpush.msra.mxu0 %v1568
        %2226 = vmatpush.msra.mxu0 %v1552
        %2227 = vmatpush.msra.mxu0 %v1536
        %2228 = vmatpush.msra.mxu0 %v1520
        %2229 = vmatpush.msra.mxu0 %v1504
        %2230 = vmatpush.msra.mxu0 %v1488
        %2231 = vmatpush.msra.mxu0 %v1472
        %2232 = vmatmul.f32.gmra.mxu0 %v1203
        %v2233 = vpop.f32.mrf.mxu0
        %v2234 = vadd.f32 %v2214, %v2233
        %2235 = vdwg.mxu0
        %2236 = vmatpush.msra.mxu0 %v1457
        %2237 = vmatpush.msra.mxu0 %v1441
        %2238 = vmatpush.msra.mxu0 %v1425
        %2239 = vmatpush.msra.mxu0 %v1409
        %2240 = vmatpush.msra.mxu0 %v1393
        %2241 = vmatpush.msra.mxu0 %v1377
        %2242 = vmatpush.msra.mxu0 %v1361
        %2243 = vmatpush.msra.mxu0 %v1345
        %2244 = vmatpush.msra.mxu0 %v1329
        %2245 = vmatpush.msra.mxu0 %v1313
        %2246 = vmatpush.msra.mxu0 %v1297
        %2247 = vmatpush.msra.mxu0 %v1281
        %2248 = vmatpush.msra.mxu0 %v1265
        %2249 = vmatpush.msra.mxu0 %v1249
        %2250 = vmatpush.msra.mxu0 %v1233
        %2251 = vmatpush.msra.mxu0 %v1217
        %2252 = vmatmul.f32.gmra.mxu0 %v1202
        %v2253 = vpop.f32.mrf.mxu0
        %v2254 = vadd.f32 0.0, %v2253
        %2255 = vdwg.mxu0
        %2256 = vmatpush.msra.mxu0 %v1713
        %2257 = vmatpush.msra.mxu0 %v1697
        %2258 = vmatpush.msra.mxu0 %v1681
        %2259 = vmatpush.msra.mxu0 %v1665
        %2260 = vmatpush.msra.mxu0 %v1649
        %2261 = vmatpush.msra.mxu0 %v1633
        %2262 = vmatpush.msra.mxu0 %v1617
        %2263 = vmatpush.msra.mxu0 %v1601
        %2264 = vmatpush.msra.mxu0 %v1585
        %2265 = vmatpush.msra.mxu0 %v1569
        %2266 = vmatpush.msra.mxu0 %v1553
        %2267 = vmatpush.msra.mxu0 %v1537
        %2268 = vmatpush.msra.mxu0 %v1521
        %2269 = vmatpush.msra.mxu0 %v1505
        %2270 = vmatpush.msra.mxu0 %v1489
        %2271 = vmatpush.msra.mxu0 %v1473
        %2272 = vmatmul.f32.gmra.mxu0 %v1203
        %v2273 = vpop.f32.mrf.mxu0
        %v2274 = vadd.f32 %v2254, %v2273
        %2275 = vdwg.mxu0
        %2276 = vmatpush.msra.mxu0 %v1458
        %2277 = vmatpush.msra.mxu0 %v1442
        %2278 = vmatpush.msra.mxu0 %v1426
        %2279 = vmatpush.msra.mxu0 %v1410
        %2280 = vmatpush.msra.mxu0 %v1394
        %2281 = vmatpush.msra.mxu0 %v1378
        %2282 = vmatpush.msra.mxu0 %v1362
        %2283 = vmatpush.msra.mxu0 %v1346
        %2284 = vmatpush.msra.mxu0 %v1330
        %2285 = vmatpush.msra.mxu0 %v1314
        %2286 = vmatpush.msra.mxu0 %v1298
        %2287 = vmatpush.msra.mxu0 %v1282
        %2288 = vmatpush.msra.mxu0 %v1266
        %2289 = vmatpush.msra.mxu0 %v1250
        %2290 = vmatpush.msra.mxu0 %v1234
        %2291 = vmatpush.msra.mxu0 %v1218
        %2292 = vmatmul.f32.gmra.mxu0 %v1202
        %v2293 = vpop.f32.mrf.mxu0
        %v2294 = vadd.f32 0.0, %v2293
        %2295 = vdwg.mxu0
        %2296 = vmatpush.msra.mxu0 %v1714
        %2297 = vmatpush.msra.mxu0 %v1698
        %2298 = vmatpush.msra.mxu0 %v1682
        %2299 = vmatpush.msra.mxu0 %v1666
        %2300 = vmatpush.msra.mxu0 %v1650
        %2301 = vmatpush.msra.mxu0 %v1634
        %2302 = vmatpush.msra.mxu0 %v1618
        %2303 = vmatpush.msra.mxu0 %v1602
        %2304 = vmatpush.msra.mxu0 %v1586
        %2305 = vmatpush.msra.mxu0 %v1570
        %2306 = vmatpush.msra.mxu0 %v1554
        %2307 = vmatpush.msra.mxu0 %v1538
        %2308 = vmatpush.msra.mxu0 %v1522
        %2309 = vmatpush.msra.mxu0 %v1506
        %2310 = vmatpush.msra.mxu0 %v1490
        %2311 = vmatpush.msra.mxu0 %v1474
        %2312 = vmatmul.f32.gmra.mxu0 %v1203
        %v2313 = vpop.f32.mrf.mxu0
        %v2314 = vadd.f32 %v2294, %v2313
        %2315 = vdwg.mxu0
        %2316 = vmatpush.msra.mxu0 %v1459
        %2317 = vmatpush.msra.mxu0 %v1443
        %2318 = vmatpush.msra.mxu0 %v1427
        %2319 = vmatpush.msra.mxu0 %v1411
        %2320 = vmatpush.msra.mxu0 %v1395
        %2321 = vmatpush.msra.mxu0 %v1379
        %2322 = vmatpush.msra.mxu0 %v1363
        %2323 = vmatpush.msra.mxu0 %v1347
        %2324 = vmatpush.msra.mxu0 %v1331
        %2325 = vmatpush.msra.mxu0 %v1315
        %2326 = vmatpush.msra.mxu0 %v1299
        %2327 = vmatpush.msra.mxu0 %v1283
        %2328 = vmatpush.msra.mxu0 %v1267
        %2329 = vmatpush.msra.mxu0 %v1251
        %2330 = vmatpush.msra.mxu0 %v1235
        %2331 = vmatpush.msra.mxu0 %v1219
        %2332 = vmatmul.f32.gmra.mxu0 %v1202
        %v2333 = vpop.f32.mrf.mxu0
        %v2334 = vadd.f32 0.0, %v2333
        %2335 = vdwg.mxu0
        %2336 = vmatpush.msra.mxu0 %v1715
        %2337 = vmatpush.msra.mxu0 %v1699
        %2338 = vmatpush.msra.mxu0 %v1683
        %2339 = vmatpush.msra.mxu0 %v1667
        %2340 = vmatpush.msra.mxu0 %v1651
        %2341 = vmatpush.msra.mxu0 %v1635
        %2342 = vmatpush.msra.mxu0 %v1619
        %2343 = vmatpush.msra.mxu0 %v1603
        %2344 = vmatpush.msra.mxu0 %v1587
        %2345 = vmatpush.msra.mxu0 %v1571
        %2346 = vmatpush.msra.mxu0 %v1555
        %2347 = vmatpush.msra.mxu0 %v1539
        %2348 = vmatpush.msra.mxu0 %v1523
        %2349 = vmatpush.msra.mxu0 %v1507
        %2350 = vmatpush.msra.mxu0 %v1491
        %2351 = vmatpush.msra.mxu0 %v1475
        %2352 = vmatmul.f32.gmra.mxu0 %v1203
        %v2353 = vpop.f32.mrf.mxu0
        %v2354 = vadd.f32 %v2334, %v2353
        %2355 = vdwg.mxu0
        %v2356 = vld [vmem:[#allocation13] sm:$0xff]
        %v2357 = vld [vmem:[#allocation13 + $0x8] sm:$0xff]
        %v2358 = vld [vmem:[#allocation13 + $0x10] sm:$0xff]
        %v2359 = vld [vmem:[#allocation13 + $0x18] sm:$0xff]
        %v2360 = vld [vmem:[#allocation13 + $0x20] sm:$0xff]
        %v2361 = vld [vmem:[#allocation13 + $0x28] sm:$0xff]
        %v2362 = vld [vmem:[#allocation13 + $0x30] sm:$0xff]
        %v2363 = vld [vmem:[#allocation13 + $0x38] sm:$0xff]
        %v2364 = vld [vmem:[#allocation13 + $0x40] sm:$0xff]
        %v2365 = vld [vmem:[#allocation13 + $0x48] sm:$0xff]
        %v2366 = vld [vmem:[#allocation13 + $0x50] sm:$0xff]
        %v2367 = vld [vmem:[#allocation13 + $0x58] sm:$0xff]
        %v2368 = vld [vmem:[#allocation13 + $0x60] sm:$0xff]
        %v2369 = vld [vmem:[#allocation13 + $0x68] sm:$0xff]
        %v2370 = vld [vmem:[#allocation13 + $0x70] sm:$0xff]
        %v2371 = vld [vmem:[#allocation13 + $0x78] sm:$0xff]
        %v2372 = vld [vmem:[#allocation13 + $0x80] sm:$0xff]
        %v2373 = vld [vmem:[#allocation13 + $0x88] sm:$0xff]
        %v2374 = vld [vmem:[#allocation13 + $0x90] sm:$0xff]
        %v2375 = vld [vmem:[#allocation13 + $0x98] sm:$0xff]
        %v2376 = vld [vmem:[#allocation13 + $0xa0] sm:$0xff]
        %v2377 = vld [vmem:[#allocation13 + $0xa8] sm:$0xff]
        %v2378 = vld [vmem:[#allocation13 + $0xb0] sm:$0xff]
        %v2379 = vld [vmem:[#allocation13 + $0xb8] sm:$0xff]
        %v2380 = vld [vmem:[#allocation13 + $0xc0] sm:$0xff]
        %v2381 = vld [vmem:[#allocation13 + $0xc8] sm:$0xff]
        %v2382 = vld [vmem:[#allocation13 + $0xd0] sm:$0xff]
        %v2383 = vld [vmem:[#allocation13 + $0xd8] sm:$0xff]
        %v2384 = vld [vmem:[#allocation13 + $0xe0] sm:$0xff]
        %v2385 = vld [vmem:[#allocation13 + $0xe8] sm:$0xff]
        %v2386 = vld [vmem:[#allocation13 + $0xf0] sm:$0xff]
        %v2387 = vld [vmem:[#allocation13 + $0xf8] sm:$0xff]
        %v2388 = vld [vmem:[#allocation13 + $0x100] sm:$0xff]
        %v2389 = vld [vmem:[#allocation13 + $0x108] sm:$0xff]
        %v2390 = vld [vmem:[#allocation13 + $0x110] sm:$0xff]
        %v2391 = vld [vmem:[#allocation13 + $0x118] sm:$0xff]
        %v2392 = vld [vmem:[#allocation13 + $0x120] sm:$0xff]
        %v2393 = vld [vmem:[#allocation13 + $0x128] sm:$0xff]
        %v2394 = vld [vmem:[#allocation13 + $0x130] sm:$0xff]
        %v2395 = vld [vmem:[#allocation13 + $0x138] sm:$0xff]
        %v2396 = vld [vmem:[#allocation13 + $0x140] sm:$0xff]
        %v2397 = vld [vmem:[#allocation13 + $0x148] sm:$0xff]
        %v2398 = vld [vmem:[#allocation13 + $0x150] sm:$0xff]
        %v2399 = vld [vmem:[#allocation13 + $0x158] sm:$0xff]
        %v2400 = vld [vmem:[#allocation13 + $0x160] sm:$0xff]
        %v2401 = vld [vmem:[#allocation13 + $0x168] sm:$0xff]
        %v2402 = vld [vmem:[#allocation13 + $0x170] sm:$0xff]
        %v2403 = vld [vmem:[#allocation13 + $0x178] sm:$0xff]
        %v2404 = vld [vmem:[#allocation13 + $0x180] sm:$0xff]
        %v2405 = vld [vmem:[#allocation13 + $0x188] sm:$0xff]
        %v2406 = vld [vmem:[#allocation13 + $0x190] sm:$0xff]
        %v2407 = vld [vmem:[#allocation13 + $0x198] sm:$0xff]
        %v2408 = vld [vmem:[#allocation13 + $0x1a0] sm:$0xff]
        %v2409 = vld [vmem:[#allocation13 + $0x1a8] sm:$0xff]
        %v2410 = vld [vmem:[#allocation13 + $0x1b0] sm:$0xff]
        %v2411 = vld [vmem:[#allocation13 + $0x1b8] sm:$0xff]
        %v2412 = vld [vmem:[#allocation13 + $0x1c0] sm:$0xff]
        %v2413 = vld [vmem:[#allocation13 + $0x1c8] sm:$0xff]
        %v2414 = vld [vmem:[#allocation13 + $0x1d0] sm:$0xff]
        %v2415 = vld [vmem:[#allocation13 + $0x1d8] sm:$0xff]
        %v2416 = vld [vmem:[#allocation13 + $0x1e0] sm:$0xff]
        %v2417 = vld [vmem:[#allocation13 + $0x1e8] sm:$0xff]
        %v2418 = vld [vmem:[#allocation13 + $0x1f0] sm:$0xff]
        %v2419 = vld [vmem:[#allocation13 + $0x1f8] sm:$0xff]
        %v2420 = vld [vmem:[#allocation13 + $0x200] sm:$0xff]
        %v2421 = vld [vmem:[#allocation13 + $0x208] sm:$0xff]
        %v2422 = vld [vmem:[#allocation13 + $0x210] sm:$0xff]
        %v2423 = vld [vmem:[#allocation13 + $0x218] sm:$0xff]
        %v2424 = vld [vmem:[#allocation13 + $0x220] sm:$0xff]
        %v2425 = vld [vmem:[#allocation13 + $0x228] sm:$0xff]
        %v2426 = vld [vmem:[#allocation13 + $0x230] sm:$0xff]
        %v2427 = vld [vmem:[#allocation13 + $0x238] sm:$0xff]
        %v2428 = vld [vmem:[#allocation13 + $0x240] sm:$0xff]
        %v2429 = vld [vmem:[#allocation13 + $0x248] sm:$0xff]
        %v2430 = vld [vmem:[#allocation13 + $0x250] sm:$0xff]
        %v2431 = vld [vmem:[#allocation13 + $0x258] sm:$0xff]
        %v2432 = vld [vmem:[#allocation13 + $0x260] sm:$0xff]
        %v2433 = vld [vmem:[#allocation13 + $0x268] sm:$0xff]
        %v2434 = vld [vmem:[#allocation13 + $0x270] sm:$0xff]
        %v2435 = vld [vmem:[#allocation13 + $0x278] sm:$0xff]
        %v2436 = vld [vmem:[#allocation13 + $0x280] sm:$0xff]
        %v2437 = vld [vmem:[#allocation13 + $0x288] sm:$0xff]
        %v2438 = vld [vmem:[#allocation13 + $0x290] sm:$0xff]
        %v2439 = vld [vmem:[#allocation13 + $0x298] sm:$0xff]
        %v2440 = vld [vmem:[#allocation13 + $0x2a0] sm:$0xff]
        %v2441 = vld [vmem:[#allocation13 + $0x2a8] sm:$0xff]
        %v2442 = vld [vmem:[#allocation13 + $0x2b0] sm:$0xff]
        %v2443 = vld [vmem:[#allocation13 + $0x2b8] sm:$0xff]
        %v2444 = vld [vmem:[#allocation13 + $0x2c0] sm:$0xff]
        %v2445 = vld [vmem:[#allocation13 + $0x2c8] sm:$0xff]
        %v2446 = vld [vmem:[#allocation13 + $0x2d0] sm:$0xff]
        %v2447 = vld [vmem:[#allocation13 + $0x2d8] sm:$0xff]
        %v2448 = vld [vmem:[#allocation13 + $0x2e0] sm:$0xff]
        %v2449 = vld [vmem:[#allocation13 + $0x2e8] sm:$0xff]
        %v2450 = vld [vmem:[#allocation13 + $0x2f0] sm:$0xff]
        %v2451 = vld [vmem:[#allocation13 + $0x2f8] sm:$0xff]
        %v2452 = vld [vmem:[#allocation13 + $0x300] sm:$0xff]
        %v2453 = vld [vmem:[#allocation13 + $0x308] sm:$0xff]
        %v2454 = vld [vmem:[#allocation13 + $0x310] sm:$0xff]
        %v2455 = vld [vmem:[#allocation13 + $0x318] sm:$0xff]
        %v2456 = vld [vmem:[#allocation13 + $0x320] sm:$0xff]
        %v2457 = vld [vmem:[#allocation13 + $0x328] sm:$0xff]
        %v2458 = vld [vmem:[#allocation13 + $0x330] sm:$0xff]
        %v2459 = vld [vmem:[#allocation13 + $0x338] sm:$0xff]
        %v2460 = vld [vmem:[#allocation13 + $0x340] sm:$0xff]
        %v2461 = vld [vmem:[#allocation13 + $0x348] sm:$0xff]
        %v2462 = vld [vmem:[#allocation13 + $0x350] sm:$0xff]
        %v2463 = vld [vmem:[#allocation13 + $0x358] sm:$0xff]
        %v2464 = vld [vmem:[#allocation13 + $0x360] sm:$0xff]
        %v2465 = vld [vmem:[#allocation13 + $0x368] sm:$0xff]
        %v2466 = vld [vmem:[#allocation13 + $0x370] sm:$0xff]
        %v2467 = vld [vmem:[#allocation13 + $0x378] sm:$0xff]
        %v2468 = vld [vmem:[#allocation13 + $0x380] sm:$0xff]
        %v2469 = vld [vmem:[#allocation13 + $0x388] sm:$0xff]
        %v2470 = vld [vmem:[#allocation13 + $0x390] sm:$0xff]
        %v2471 = vld [vmem:[#allocation13 + $0x398] sm:$0xff]
        %v2472 = vld [vmem:[#allocation13 + $0x3a0] sm:$0xff]
        %v2473 = vld [vmem:[#allocation13 + $0x3a8] sm:$0xff]
        %v2474 = vld [vmem:[#allocation13 + $0x3b0] sm:$0xff]
        %v2475 = vld [vmem:[#allocation13 + $0x3b8] sm:$0xff]
        %v2476 = vld [vmem:[#allocation13 + $0x3c0] sm:$0xff]
        %v2477 = vld [vmem:[#allocation13 + $0x3c8] sm:$0xff]
        %v2478 = vld [vmem:[#allocation13 + $0x3d0] sm:$0xff]
        %v2479 = vld [vmem:[#allocation13 + $0x3d8] sm:$0xff]
        %v2480 = vld [vmem:[#allocation13 + $0x3e0] sm:$0xff]
        %v2481 = vld [vmem:[#allocation13 + $0x3e8] sm:$0xff]
        %v2482 = vld [vmem:[#allocation13 + $0x3f0] sm:$0xff]
        %v2483 = vld [vmem:[#allocation13 + $0x3f8] sm:$0xff]
        %2484 = vmatpush.msra.mxu0 %v2354
        %2485 = vmatpush.msra.mxu0 %v2314
        %2486 = vmatpush.msra.mxu0 %v2274
        %2487 = vmatpush.msra.mxu0 %v2234
        %2488 = vmatpush.msra.mxu0 %v2194
        %2489 = vmatpush.msra.mxu0 %v2154
        %2490 = vmatpush.msra.mxu0 %v2114
        %2491 = vmatpush.msra.mxu0 %v2074
        %2492 = vmatpush.msra.mxu0 %v2034
        %2493 = vmatpush.msra.mxu0 %v1994
        %2494 = vmatpush.msra.mxu0 %v1954
        %2495 = vmatpush.msra.mxu0 %v1914
        %2496 = vmatpush.msra.mxu0 %v1874
        %2497 = vmatpush.msra.mxu0 %v1834
        %2498 = vmatpush.msra.mxu0 %v1794
        %2499 = vmatpush.msra.mxu0 %v1754
        %2500 = vmatmul.f32.gmra.mxu0 %v2356
        %v2501 = vpop.f32.mrf.mxu0
        %v2502 = vadd.f32 0.0, %v2501
        %2503 = vmatmul.f32.gmra.mxu0 %v2357
        %v2504 = vpop.f32.mrf.mxu0
        %v2505 = vadd.f32 0.0, %v2504
        %2506 = vmatmul.f32.gmra.mxu0 %v2358
        %v2507 = vpop.f32.mrf.mxu0
        %v2508 = vadd.f32 0.0, %v2507
        %2509 = vmatmul.f32.gmra.mxu0 %v2359
        %v2510 = vpop.f32.mrf.mxu0
        %v2511 = vadd.f32 0.0, %v2510
        %2512 = vmatmul.f32.gmra.mxu0 %v2360
        %v2513 = vpop.f32.mrf.mxu0
        %v2514 = vadd.f32 0.0, %v2513
        %2515 = vmatmul.f32.gmra.mxu0 %v2361
        %v2516 = vpop.f32.mrf.mxu0
        %v2517 = vadd.f32 0.0, %v2516
        %2518 = vmatmul.f32.gmra.mxu0 %v2362
        %v2519 = vpop.f32.mrf.mxu0
        %v2520 = vadd.f32 0.0, %v2519
        %2521 = vmatmul.f32.gmra.mxu0 %v2363
        %v2522 = vpop.f32.mrf.mxu0
        %v2523 = vadd.f32 0.0, %v2522
        %2524 = vmatmul.f32.gmra.mxu0 %v2364
        %v2525 = vpop.f32.mrf.mxu0
        %v2526 = vadd.f32 0.0, %v2525
        %2527 = vmatmul.f32.gmra.mxu0 %v2365
        %v2528 = vpop.f32.mrf.mxu0
        %v2529 = vadd.f32 0.0, %v2528
        %2530 = vmatmul.f32.gmra.mxu0 %v2366
        %v2531 = vpop.f32.mrf.mxu0
        %v2532 = vadd.f32 0.0, %v2531
        %2533 = vmatmul.f32.gmra.mxu0 %v2367
        %v2534 = vpop.f32.mrf.mxu0
        %v2535 = vadd.f32 0.0, %v2534
        %2536 = vmatmul.f32.gmra.mxu0 %v2368
        %v2537 = vpop.f32.mrf.mxu0
        %v2538 = vadd.f32 0.0, %v2537
        %2539 = vmatmul.f32.gmra.mxu0 %v2369
        %v2540 = vpop.f32.mrf.mxu0
        %v2541 = vadd.f32 0.0, %v2540
        %2542 = vmatmul.f32.gmra.mxu0 %v2370
        %v2543 = vpop.f32.mrf.mxu0
        %v2544 = vadd.f32 0.0, %v2543
        %2545 = vmatmul.f32.gmra.mxu0 %v2371
        %v2546 = vpop.f32.mrf.mxu0
        %v2547 = vadd.f32 0.0, %v2546
        %2548 = vmatmul.f32.gmra.mxu0 %v2372
        %v2549 = vpop.f32.mrf.mxu0
        %v2550 = vadd.f32 0.0, %v2549
        %2551 = vmatmul.f32.gmra.mxu0 %v2373
        %v2552 = vpop.f32.mrf.mxu0
        %v2553 = vadd.f32 0.0, %v2552
        %2554 = vmatmul.f32.gmra.mxu0 %v2374
        %v2555 = vpop.f32.mrf.mxu0
        %v2556 = vadd.f32 0.0, %v2555
        %2557 = vmatmul.f32.gmra.mxu0 %v2375
        %v2558 = vpop.f32.mrf.mxu0
        %v2559 = vadd.f32 0.0, %v2558
        %2560 = vmatmul.f32.gmra.mxu0 %v2376
        %v2561 = vpop.f32.mrf.mxu0
        %v2562 = vadd.f32 0.0, %v2561
        %2563 = vmatmul.f32.gmra.mxu0 %v2377
        %v2564 = vpop.f32.mrf.mxu0
        %v2565 = vadd.f32 0.0, %v2564
        %2566 = vmatmul.f32.gmra.mxu0 %v2378
        %v2567 = vpop.f32.mrf.mxu0
        %v2568 = vadd.f32 0.0, %v2567
        %2569 = vmatmul.f32.gmra.mxu0 %v2379
        %v2570 = vpop.f32.mrf.mxu0
        %v2571 = vadd.f32 0.0, %v2570
        %2572 = vmatmul.f32.gmra.mxu0 %v2380
        %v2573 = vpop.f32.mrf.mxu0
        %v2574 = vadd.f32 0.0, %v2573
        %2575 = vmatmul.f32.gmra.mxu0 %v2381
        %v2576 = vpop.f32.mrf.mxu0
        %v2577 = vadd.f32 0.0, %v2576
        %2578 = vmatmul.f32.gmra.mxu0 %v2382
        %v2579 = vpop.f32.mrf.mxu0
        %v2580 = vadd.f32 0.0, %v2579
        %2581 = vmatmul.f32.gmra.mxu0 %v2383
        %v2582 = vpop.f32.mrf.mxu0
        %v2583 = vadd.f32 0.0, %v2582
        %2584 = vmatmul.f32.gmra.mxu0 %v2384
        %v2585 = vpop.f32.mrf.mxu0
        %v2586 = vadd.f32 0.0, %v2585
        %2587 = vmatmul.f32.gmra.mxu0 %v2385
        %v2588 = vpop.f32.mrf.mxu0
        %v2589 = vadd.f32 0.0, %v2588
        %2590 = vmatmul.f32.gmra.mxu0 %v2386
        %v2591 = vpop.f32.mrf.mxu0
        %v2592 = vadd.f32 0.0, %v2591
        %2593 = vmatmul.f32.gmra.mxu0 %v2387
        %v2594 = vpop.f32.mrf.mxu0
        %v2595 = vadd.f32 0.0, %v2594
        %2596 = vmatmul.f32.gmra.mxu0 %v2388
        %v2597 = vpop.f32.mrf.mxu0
        %v2598 = vadd.f32 0.0, %v2597
        %2599 = vmatmul.f32.gmra.mxu0 %v2389
        %v2600 = vpop.f32.mrf.mxu0
        %v2601 = vadd.f32 0.0, %v2600
        %2602 = vmatmul.f32.gmra.mxu0 %v2390
        %v2603 = vpop.f32.mrf.mxu0
        %v2604 = vadd.f32 0.0, %v2603
        %2605 = vmatmul.f32.gmra.mxu0 %v2391
        %v2606 = vpop.f32.mrf.mxu0
        %v2607 = vadd.f32 0.0, %v2606
        %2608 = vmatmul.f32.gmra.mxu0 %v2392
        %v2609 = vpop.f32.mrf.mxu0
        %v2610 = vadd.f32 0.0, %v2609
        %2611 = vmatmul.f32.gmra.mxu0 %v2393
        %v2612 = vpop.f32.mrf.mxu0
        %v2613 = vadd.f32 0.0, %v2612
        %2614 = vmatmul.f32.gmra.mxu0 %v2394
        %v2615 = vpop.f32.mrf.mxu0
        %v2616 = vadd.f32 0.0, %v2615
        %2617 = vmatmul.f32.gmra.mxu0 %v2395
        %v2618 = vpop.f32.mrf.mxu0
        %v2619 = vadd.f32 0.0, %v2618
        %2620 = vmatmul.f32.gmra.mxu0 %v2396
        %v2621 = vpop.f32.mrf.mxu0
        %v2622 = vadd.f32 0.0, %v2621
        %2623 = vmatmul.f32.gmra.mxu0 %v2397
        %v2624 = vpop.f32.mrf.mxu0
        %v2625 = vadd.f32 0.0, %v2624
        %2626 = vmatmul.f32.gmra.mxu0 %v2398
        %v2627 = vpop.f32.mrf.mxu0
        %v2628 = vadd.f32 0.0, %v2627
        %2629 = vmatmul.f32.gmra.mxu0 %v2399
        %v2630 = vpop.f32.mrf.mxu0
        %v2631 = vadd.f32 0.0, %v2630
        %2632 = vmatmul.f32.gmra.mxu0 %v2400
        %v2633 = vpop.f32.mrf.mxu0
        %v2634 = vadd.f32 0.0, %v2633
        %2635 = vmatmul.f32.gmra.mxu0 %v2401
        %v2636 = vpop.f32.mrf.mxu0
        %v2637 = vadd.f32 0.0, %v2636
        %2638 = vmatmul.f32.gmra.mxu0 %v2402
        %v2639 = vpop.f32.mrf.mxu0
        %v2640 = vadd.f32 0.0, %v2639
        %2641 = vmatmul.f32.gmra.mxu0 %v2403
        %v2642 = vpop.f32.mrf.mxu0
        %v2643 = vadd.f32 0.0, %v2642
        %2644 = vmatmul.f32.gmra.mxu0 %v2404
        %v2645 = vpop.f32.mrf.mxu0
        %v2646 = vadd.f32 0.0, %v2645
        %2647 = vmatmul.f32.gmra.mxu0 %v2405
        %v2648 = vpop.f32.mrf.mxu0
        %v2649 = vadd.f32 0.0, %v2648
        %2650 = vmatmul.f32.gmra.mxu0 %v2406
        %v2651 = vpop.f32.mrf.mxu0
        %v2652 = vadd.f32 0.0, %v2651
        %2653 = vmatmul.f32.gmra.mxu0 %v2407
        %v2654 = vpop.f32.mrf.mxu0
        %v2655 = vadd.f32 0.0, %v2654
        %2656 = vmatmul.f32.gmra.mxu0 %v2408
        %v2657 = vpop.f32.mrf.mxu0
        %v2658 = vadd.f32 0.0, %v2657
        %2659 = vmatmul.f32.gmra.mxu0 %v2409
        %v2660 = vpop.f32.mrf.mxu0
        %v2661 = vadd.f32 0.0, %v2660
        %2662 = vmatmul.f32.gmra.mxu0 %v2410
        %v2663 = vpop.f32.mrf.mxu0
        %v2664 = vadd.f32 0.0, %v2663
        %2665 = vmatmul.f32.gmra.mxu0 %v2411
        %v2666 = vpop.f32.mrf.mxu0
        %v2667 = vadd.f32 0.0, %v2666
        %2668 = vmatmul.f32.gmra.mxu0 %v2412
        %v2669 = vpop.f32.mrf.mxu0
        %v2670 = vadd.f32 0.0, %v2669
        %2671 = vmatmul.f32.gmra.mxu0 %v2413
        %v2672 = vpop.f32.mrf.mxu0
        %v2673 = vadd.f32 0.0, %v2672
        %2674 = vmatmul.f32.gmra.mxu0 %v2414
        %v2675 = vpop.f32.mrf.mxu0
        %v2676 = vadd.f32 0.0, %v2675
        %2677 = vmatmul.f32.gmra.mxu0 %v2415
        %v2678 = vpop.f32.mrf.mxu0
        %v2679 = vadd.f32 0.0, %v2678
        %2680 = vmatmul.f32.gmra.mxu0 %v2416
        %v2681 = vpop.f32.mrf.mxu0
        %v2682 = vadd.f32 0.0, %v2681
        %2683 = vmatmul.f32.gmra.mxu0 %v2417
        %v2684 = vpop.f32.mrf.mxu0
        %v2685 = vadd.f32 0.0, %v2684
        %2686 = vmatmul.f32.gmra.mxu0 %v2418
        %v2687 = vpop.f32.mrf.mxu0
        %v2688 = vadd.f32 0.0, %v2687
        %2689 = vmatmul.f32.gmra.mxu0 %v2419
        %v2690 = vpop.f32.mrf.mxu0
        %v2691 = vadd.f32 0.0, %v2690
        %2692 = vmatmul.f32.gmra.mxu0 %v2420
        %v2693 = vpop.f32.mrf.mxu0
        %v2694 = vadd.f32 0.0, %v2693
        %2695 = vmatmul.f32.gmra.mxu0 %v2421
        %v2696 = vpop.f32.mrf.mxu0
        %v2697 = vadd.f32 0.0, %v2696
        %2698 = vmatmul.f32.gmra.mxu0 %v2422
        %v2699 = vpop.f32.mrf.mxu0
        %v2700 = vadd.f32 0.0, %v2699
        %2701 = vmatmul.f32.gmra.mxu0 %v2423
        %v2702 = vpop.f32.mrf.mxu0
        %v2703 = vadd.f32 0.0, %v2702
        %2704 = vmatmul.f32.gmra.mxu0 %v2424
        %v2705 = vpop.f32.mrf.mxu0
        %v2706 = vadd.f32 0.0, %v2705
        %2707 = vmatmul.f32.gmra.mxu0 %v2425
        %v2708 = vpop.f32.mrf.mxu0
        %v2709 = vadd.f32 0.0, %v2708
        %2710 = vmatmul.f32.gmra.mxu0 %v2426
        %v2711 = vpop.f32.mrf.mxu0
        %v2712 = vadd.f32 0.0, %v2711
        %2713 = vmatmul.f32.gmra.mxu0 %v2427
        %v2714 = vpop.f32.mrf.mxu0
        %v2715 = vadd.f32 0.0, %v2714
        %2716 = vmatmul.f32.gmra.mxu0 %v2428
        %v2717 = vpop.f32.mrf.mxu0
        %v2718 = vadd.f32 0.0, %v2717
        %2719 = vmatmul.f32.gmra.mxu0 %v2429
        %v2720 = vpop.f32.mrf.mxu0
        %v2721 = vadd.f32 0.0, %v2720
        %2722 = vmatmul.f32.gmra.mxu0 %v2430
        %v2723 = vpop.f32.mrf.mxu0
        %v2724 = vadd.f32 0.0, %v2723
        %2725 = vmatmul.f32.gmra.mxu0 %v2431
        %v2726 = vpop.f32.mrf.mxu0
        %v2727 = vadd.f32 0.0, %v2726
        %2728 = vmatmul.f32.gmra.mxu0 %v2432
        %v2729 = vpop.f32.mrf.mxu0
        %v2730 = vadd.f32 0.0, %v2729
        %2731 = vmatmul.f32.gmra.mxu0 %v2433
        %v2732 = vpop.f32.mrf.mxu0
        %v2733 = vadd.f32 0.0, %v2732
        %2734 = vmatmul.f32.gmra.mxu0 %v2434
        %v2735 = vpop.f32.mrf.mxu0
        %v2736 = vadd.f32 0.0, %v2735
        %2737 = vmatmul.f32.gmra.mxu0 %v2435
        %v2738 = vpop.f32.mrf.mxu0
        %v2739 = vadd.f32 0.0, %v2738
        %2740 = vmatmul.f32.gmra.mxu0 %v2436
        %v2741 = vpop.f32.mrf.mxu0
        %v2742 = vadd.f32 0.0, %v2741
        %2743 = vmatmul.f32.gmra.mxu0 %v2437
        %v2744 = vpop.f32.mrf.mxu0
        %v2745 = vadd.f32 0.0, %v2744
        %2746 = vmatmul.f32.gmra.mxu0 %v2438
        %v2747 = vpop.f32.mrf.mxu0
        %v2748 = vadd.f32 0.0, %v2747
        %2749 = vmatmul.f32.gmra.mxu0 %v2439
        %v2750 = vpop.f32.mrf.mxu0
        %v2751 = vadd.f32 0.0, %v2750
        %2752 = vmatmul.f32.gmra.mxu0 %v2440
        %v2753 = vpop.f32.mrf.mxu0
        %v2754 = vadd.f32 0.0, %v2753
        %2755 = vmatmul.f32.gmra.mxu0 %v2441
        %v2756 = vpop.f32.mrf.mxu0
        %v2757 = vadd.f32 0.0, %v2756
        %2758 = vmatmul.f32.gmra.mxu0 %v2442
        %v2759 = vpop.f32.mrf.mxu0
        %v2760 = vadd.f32 0.0, %v2759
        %2761 = vmatmul.f32.gmra.mxu0 %v2443
        %v2762 = vpop.f32.mrf.mxu0
        %v2763 = vadd.f32 0.0, %v2762
        %2764 = vmatmul.f32.gmra.mxu0 %v2444
        %v2765 = vpop.f32.mrf.mxu0
        %v2766 = vadd.f32 0.0, %v2765
        %2767 = vmatmul.f32.gmra.mxu0 %v2445
        %v2768 = vpop.f32.mrf.mxu0
        %v2769 = vadd.f32 0.0, %v2768
        %2770 = vmatmul.f32.gmra.mxu0 %v2446
        %v2771 = vpop.f32.mrf.mxu0
        %v2772 = vadd.f32 0.0, %v2771
        %2773 = vmatmul.f32.gmra.mxu0 %v2447
        %v2774 = vpop.f32.mrf.mxu0
        %v2775 = vadd.f32 0.0, %v2774
        %2776 = vmatmul.f32.gmra.mxu0 %v2448
        %v2777 = vpop.f32.mrf.mxu0
        %v2778 = vadd.f32 0.0, %v2777
        %2779 = vmatmul.f32.gmra.mxu0 %v2449
        %v2780 = vpop.f32.mrf.mxu0
        %v2781 = vadd.f32 0.0, %v2780
        %2782 = vmatmul.f32.gmra.mxu0 %v2450
        %v2783 = vpop.f32.mrf.mxu0
        %v2784 = vadd.f32 0.0, %v2783
        %2785 = vmatmul.f32.gmra.mxu0 %v2451
        %v2786 = vpop.f32.mrf.mxu0
        %v2787 = vadd.f32 0.0, %v2786
        %2788 = vmatmul.f32.gmra.mxu0 %v2452
        %v2789 = vpop.f32.mrf.mxu0
        %v2790 = vadd.f32 0.0, %v2789
        %2791 = vmatmul.f32.gmra.mxu0 %v2453
        %v2792 = vpop.f32.mrf.mxu0
        %v2793 = vadd.f32 0.0, %v2792
        %2794 = vmatmul.f32.gmra.mxu0 %v2454
        %v2795 = vpop.f32.mrf.mxu0
        %v2796 = vadd.f32 0.0, %v2795
        %2797 = vmatmul.f32.gmra.mxu0 %v2455
        %v2798 = vpop.f32.mrf.mxu0
        %v2799 = vadd.f32 0.0, %v2798
        %2800 = vmatmul.f32.gmra.mxu0 %v2456
        %v2801 = vpop.f32.mrf.mxu0
        %v2802 = vadd.f32 0.0, %v2801
        %2803 = vmatmul.f32.gmra.mxu0 %v2457
        %v2804 = vpop.f32.mrf.mxu0
        %v2805 = vadd.f32 0.0, %v2804
        %2806 = vmatmul.f32.gmra.mxu0 %v2458
        %v2807 = vpop.f32.mrf.mxu0
        %v2808 = vadd.f32 0.0, %v2807
        %2809 = vmatmul.f32.gmra.mxu0 %v2459
        %v2810 = vpop.f32.mrf.mxu0
        %v2811 = vadd.f32 0.0, %v2810
        %2812 = vmatmul.f32.gmra.mxu0 %v2460
        %v2813 = vpop.f32.mrf.mxu0
        %v2814 = vadd.f32 0.0, %v2813
        %2815 = vmatmul.f32.gmra.mxu0 %v2461
        %v2816 = vpop.f32.mrf.mxu0
        %v2817 = vadd.f32 0.0, %v2816
        %2818 = vmatmul.f32.gmra.mxu0 %v2462
        %v2819 = vpop.f32.mrf.mxu0
        %v2820 = vadd.f32 0.0, %v2819
        %2821 = vmatmul.f32.gmra.mxu0 %v2463
        %v2822 = vpop.f32.mrf.mxu0
        %v2823 = vadd.f32 0.0, %v2822
        %2824 = vmatmul.f32.gmra.mxu0 %v2464
        %v2825 = vpop.f32.mrf.mxu0
        %v2826 = vadd.f32 0.0, %v2825
        %2827 = vmatmul.f32.gmra.mxu0 %v2465
        %v2828 = vpop.f32.mrf.mxu0
        %v2829 = vadd.f32 0.0, %v2828
        %2830 = vmatmul.f32.gmra.mxu0 %v2466
        %v2831 = vpop.f32.mrf.mxu0
        %v2832 = vadd.f32 0.0, %v2831
        %2833 = vmatmul.f32.gmra.mxu0 %v2467
        %v2834 = vpop.f32.mrf.mxu0
        %v2835 = vadd.f32 0.0, %v2834
        %2836 = vmatmul.f32.gmra.mxu0 %v2468
        %v2837 = vpop.f32.mrf.mxu0
        %v2838 = vadd.f32 0.0, %v2837
        %2839 = vmatmul.f32.gmra.mxu0 %v2469
        %v2840 = vpop.f32.mrf.mxu0
        %v2841 = vadd.f32 0.0, %v2840
        %2842 = vmatmul.f32.gmra.mxu0 %v2470
        %v2843 = vpop.f32.mrf.mxu0
        %v2844 = vadd.f32 0.0, %v2843
        %2845 = vmatmul.f32.gmra.mxu0 %v2471
        %v2846 = vpop.f32.mrf.mxu0
        %v2847 = vadd.f32 0.0, %v2846
        %2848 = vmatmul.f32.gmra.mxu0 %v2472
        %v2849 = vpop.f32.mrf.mxu0
        %v2850 = vadd.f32 0.0, %v2849
        %2851 = vmatmul.f32.gmra.mxu0 %v2473
        %v2852 = vpop.f32.mrf.mxu0
        %v2853 = vadd.f32 0.0, %v2852
        %2854 = vmatmul.f32.gmra.mxu0 %v2474
        %v2855 = vpop.f32.mrf.mxu0
        %v2856 = vadd.f32 0.0, %v2855
        %2857 = vmatmul.f32.gmra.mxu0 %v2475
        %v2858 = vpop.f32.mrf.mxu0
        %v2859 = vadd.f32 0.0, %v2858
        %2860 = vmatmul.f32.gmra.mxu0 %v2476
        %v2861 = vpop.f32.mrf.mxu0
        %v2862 = vadd.f32 0.0, %v2861
        %2863 = vmatmul.f32.gmra.mxu0 %v2477
        %v2864 = vpop.f32.mrf.mxu0
        %v2865 = vadd.f32 0.0, %v2864
        %2866 = vmatmul.f32.gmra.mxu0 %v2478
        %v2867 = vpop.f32.mrf.mxu0
        %v2868 = vadd.f32 0.0, %v2867
        %2869 = vmatmul.f32.gmra.mxu0 %v2479
        %v2870 = vpop.f32.mrf.mxu0
        %v2871 = vadd.f32 0.0, %v2870
        %2872 = vmatmul.f32.gmra.mxu0 %v2480
        %v2873 = vpop.f32.mrf.mxu0
        %v2874 = vadd.f32 0.0, %v2873
        %2875 = vmatmul.f32.gmra.mxu0 %v2481
        %v2876 = vpop.f32.mrf.mxu0
        %v2877 = vadd.f32 0.0, %v2876
        %2878 = vmatmul.f32.gmra.mxu0 %v2482
        %v2879 = vpop.f32.mrf.mxu0
        %v2880 = vadd.f32 0.0, %v2879
        %2881 = vmatmul.f32.gmra.mxu0 %v2483
        %v2882 = vpop.f32.mrf.mxu0
        %v2883 = vadd.f32 0.0, %v2882
        %2884 = vdwg.mxu0
        %2885 = vst [vmem:[%s504] sm:$0xff] %v2502
        %2886 = vst [vmem:[%s504 + $0x8] sm:$0xff] %v2505
        %2887 = vst [vmem:[%s504 + $0x10] sm:$0xff] %v2508
        %2888 = vst [vmem:[%s504 + $0x18] sm:$0xff] %v2511
        %2889 = vst [vmem:[%s504 + $0x20] sm:$0xff] %v2514
        %2890 = vst [vmem:[%s504 + $0x28] sm:$0xff] %v2517
        %2891 = vst [vmem:[%s504 + $0x30] sm:$0xff] %v2520
        %2892 = vst [vmem:[%s504 + $0x38] sm:$0xff] %v2523
        %2893 = vst [vmem:[%s504 + $0x40] sm:$0xff] %v2526
        %2894 = vst [vmem:[%s504 + $0x48] sm:$0xff] %v2529
        %2895 = vst [vmem:[%s504 + $0x50] sm:$0xff] %v2532
        %2896 = vst [vmem:[%s504 + $0x58] sm:$0xff] %v2535
        %2897 = vst [vmem:[%s504 + $0x60] sm:$0xff] %v2538
        %2898 = vst [vmem:[%s504 + $0x68] sm:$0xff] %v2541
        %2899 = vst [vmem:[%s504 + $0x70] sm:$0xff] %v2544
        %2900 = vst [vmem:[%s504 + $0x78] sm:$0xff] %v2547
        %2901 = vst [vmem:[%s504 + $0x80] sm:$0xff] %v2550
        %2902 = vst [vmem:[%s504 + $0x88] sm:$0xff] %v2553
        %2903 = vst [vmem:[%s504 + $0x90] sm:$0xff] %v2556
        %2904 = vst [vmem:[%s504 + $0x98] sm:$0xff] %v2559
        %2905 = vst [vmem:[%s504 + $0xa0] sm:$0xff] %v2562
        %2906 = vst [vmem:[%s504 + $0xa8] sm:$0xff] %v2565
        %2907 = vst [vmem:[%s504 + $0xb0] sm:$0xff] %v2568
        %2908 = vst [vmem:[%s504 + $0xb8] sm:$0xff] %v2571
        %2909 = vst [vmem:[%s504 + $0xc0] sm:$0xff] %v2574
        %2910 = vst [vmem:[%s504 + $0xc8] sm:$0xff] %v2577
        %2911 = vst [vmem:[%s504 + $0xd0] sm:$0xff] %v2580
        %2912 = vst [vmem:[%s504 + $0xd8] sm:$0xff] %v2583
        %2913 = vst [vmem:[%s504 + $0xe0] sm:$0xff] %v2586
        %2914 = vst [vmem:[%s504 + $0xe8] sm:$0xff] %v2589
        %2915 = vst [vmem:[%s504 + $0xf0] sm:$0xff] %v2592
        %2916 = vst [vmem:[%s504 + $0xf8] sm:$0xff] %v2595
        %2917 = vst [vmem:[%s504 + $0x100] sm:$0xff] %v2598
        %2918 = vst [vmem:[%s504 + $0x108] sm:$0xff] %v2601
        %2919 = vst [vmem:[%s504 + $0x110] sm:$0xff] %v2604
        %2920 = vst [vmem:[%s504 + $0x118] sm:$0xff] %v2607
        %2921 = vst [vmem:[%s504 + $0x120] sm:$0xff] %v2610
        %2922 = vst [vmem:[%s504 + $0x128] sm:$0xff] %v2613
        %2923 = vst [vmem:[%s504 + $0x130] sm:$0xff] %v2616
        %2924 = vst [vmem:[%s504 + $0x138] sm:$0xff] %v2619
        %2925 = vst [vmem:[%s504 + $0x140] sm:$0xff] %v2622
        %2926 = vst [vmem:[%s504 + $0x148] sm:$0xff] %v2625
        %2927 = vst [vmem:[%s504 + $0x150] sm:$0xff] %v2628
        %2928 = vst [vmem:[%s504 + $0x158] sm:$0xff] %v2631
        %2929 = vst [vmem:[%s504 + $0x160] sm:$0xff] %v2634
        %2930 = vst [vmem:[%s504 + $0x168] sm:$0xff] %v2637
        %2931 = vst [vmem:[%s504 + $0x170] sm:$0xff] %v2640
        %2932 = vst [vmem:[%s504 + $0x178] sm:$0xff] %v2643
        %2933 = vst [vmem:[%s504 + $0x180] sm:$0xff] %v2646
        %2934 = vst [vmem:[%s504 + $0x188] sm:$0xff] %v2649
        %2935 = vst [vmem:[%s504 + $0x190] sm:$0xff] %v2652
        %2936 = vst [vmem:[%s504 + $0x198] sm:$0xff] %v2655
        %2937 = vst [vmem:[%s504 + $0x1a0] sm:$0xff] %v2658
        %2938 = vst [vmem:[%s504 + $0x1a8] sm:$0xff] %v2661
        %2939 = vst [vmem:[%s504 + $0x1b0] sm:$0xff] %v2664
        %2940 = vst [vmem:[%s504 + $0x1b8] sm:$0xff] %v2667
        %2941 = vst [vmem:[%s504 + $0x1c0] sm:$0xff] %v2670
        %2942 = vst [vmem:[%s504 + $0x1c8] sm:$0xff] %v2673
        %2943 = vst [vmem:[%s504 + $0x1d0] sm:$0xff] %v2676
        %2944 = vst [vmem:[%s504 + $0x1d8] sm:$0xff] %v2679
        %2945 = vst [vmem:[%s504 + $0x1e0] sm:$0xff] %v2682
        %2946 = vst [vmem:[%s504 + $0x1e8] sm:$0xff] %v2685
        %2947 = vst [vmem:[%s504 + $0x1f0] sm:$0xff] %v2688
        %2948 = vst [vmem:[%s504 + $0x1f8] sm:$0xff] %v2691
        %2949 = vst [vmem:[%s504 + $0x200] sm:$0xff] %v2694
        %2950 = vst [vmem:[%s504 + $0x208] sm:$0xff] %v2697
        %2951 = vst [vmem:[%s504 + $0x210] sm:$0xff] %v2700
        %2952 = vst [vmem:[%s504 + $0x218] sm:$0xff] %v2703
        %2953 = vst [vmem:[%s504 + $0x220] sm:$0xff] %v2706
        %2954 = vst [vmem:[%s504 + $0x228] sm:$0xff] %v2709
        %2955 = vst [vmem:[%s504 + $0x230] sm:$0xff] %v2712
        %2956 = vst [vmem:[%s504 + $0x238] sm:$0xff] %v2715
        %2957 = vst [vmem:[%s504 + $0x240] sm:$0xff] %v2718
        %2958 = vst [vmem:[%s504 + $0x248] sm:$0xff] %v2721
        %2959 = vst [vmem:[%s504 + $0x250] sm:$0xff] %v2724
        %2960 = vst [vmem:[%s504 + $0x258] sm:$0xff] %v2727
        %2961 = vst [vmem:[%s504 + $0x260] sm:$0xff] %v2730
        %2962 = vst [vmem:[%s504 + $0x268] sm:$0xff] %v2733
        %2963 = vst [vmem:[%s504 + $0x270] sm:$0xff] %v2736
        %2964 = vst [vmem:[%s504 + $0x278] sm:$0xff] %v2739
        %2965 = vst [vmem:[%s504 + $0x280] sm:$0xff] %v2742
        %2966 = vst [vmem:[%s504 + $0x288] sm:$0xff] %v2745
        %2967 = vst [vmem:[%s504 + $0x290] sm:$0xff] %v2748
        %2968 = vst [vmem:[%s504 + $0x298] sm:$0xff] %v2751
        %2969 = vst [vmem:[%s504 + $0x2a0] sm:$0xff] %v2754
        %2970 = vst [vmem:[%s504 + $0x2a8] sm:$0xff] %v2757
        %2971 = vst [vmem:[%s504 + $0x2b0] sm:$0xff] %v2760
        %2972 = vst [vmem:[%s504 + $0x2b8] sm:$0xff] %v2763
        %2973 = vst [vmem:[%s504 + $0x2c0] sm:$0xff] %v2766
        %2974 = vst [vmem:[%s504 + $0x2c8] sm:$0xff] %v2769
        %2975 = vst [vmem:[%s504 + $0x2d0] sm:$0xff] %v2772
        %2976 = vst [vmem:[%s504 + $0x2d8] sm:$0xff] %v2775
        %2977 = vst [vmem:[%s504 + $0x2e0] sm:$0xff] %v2778
        %2978 = vst [vmem:[%s504 + $0x2e8] sm:$0xff] %v2781
        %2979 = vst [vmem:[%s504 + $0x2f0] sm:$0xff] %v2784
        %2980 = vst [vmem:[%s504 + $0x2f8] sm:$0xff] %v2787
        %2981 = vst [vmem:[%s504 + $0x300] sm:$0xff] %v2790
        %2982 = vst [vmem:[%s504 + $0x308] sm:$0xff] %v2793
        %2983 = vst [vmem:[%s504 + $0x310] sm:$0xff] %v2796
        %2984 = vst [vmem:[%s504 + $0x318] sm:$0xff] %v2799
        %2985 = vst [vmem:[%s504 + $0x320] sm:$0xff] %v2802
        %2986 = vst [vmem:[%s504 + $0x328] sm:$0xff] %v2805
        %2987 = vst [vmem:[%s504 + $0x330] sm:$0xff] %v2808
        %2988 = vst [vmem:[%s504 + $0x338] sm:$0xff] %v2811
        %2989 = vst [vmem:[%s504 + $0x340] sm:$0xff] %v2814
        %2990 = vst [vmem:[%s504 + $0x348] sm:$0xff] %v2817
        %2991 = vst [vmem:[%s504 + $0x350] sm:$0xff] %v2820
        %2992 = vst [vmem:[%s504 + $0x358] sm:$0xff] %v2823
        %2993 = vst [vmem:[%s504 + $0x360] sm:$0xff] %v2826
        %2994 = vst [vmem:[%s504 + $0x368] sm:$0xff] %v2829
        %2995 = vst [vmem:[%s504 + $0x370] sm:$0xff] %v2832
        %2996 = vst [vmem:[%s504 + $0x378] sm:$0xff] %v2835
        %2997 = vst [vmem:[%s504 + $0x380] sm:$0xff] %v2838
        %2998 = vst [vmem:[%s504 + $0x388] sm:$0xff] %v2841
        %2999 = vst [vmem:[%s504 + $0x390] sm:$0xff] %v2844
        %3000 = vst [vmem:[%s504 + $0x398] sm:$0xff] %v2847
        %3001 = vst [vmem:[%s504 + $0x3a0] sm:$0xff] %v2850
        %3002 = vst [vmem:[%s504 + $0x3a8] sm:$0xff] %v2853
        %3003 = vst [vmem:[%s504 + $0x3b0] sm:$0xff] %v2856
        %3004 = vst [vmem:[%s504 + $0x3b8] sm:$0xff] %v2859
        %3005 = vst [vmem:[%s504 + $0x3c0] sm:$0xff] %v2862
        %3006 = vst [vmem:[%s504 + $0x3c8] sm:$0xff] %v2865
        %3007 = vst [vmem:[%s504 + $0x3d0] sm:$0xff] %v2868
        %3008 = vst [vmem:[%s504 + $0x3d8] sm:$0xff] %v2871
        %3009 = vst [vmem:[%s504 + $0x3e0] sm:$0xff] %v2874
        %3010 = vst [vmem:[%s504 + $0x3e8] sm:$0xff] %v2877
        %3011 = vst [vmem:[%s504 + $0x3f0] sm:$0xff] %v2880
        %3012 = vst [vmem:[%s504 + $0x3f8] sm:$0xff] %v2883
        %s3013 = sand.u32 %s278, 1
        %s3014 = scalar_lea.sflag [#allocation4], %s3013
        %s3015 = sand.u32 %s278, 1
        %s3016 = smul.addr %s3015, 1024
        %s3017 = scalar_lea.vmem [#allocation14], %s3016
        // Predicated region
        $region93: #{lednet_decoder_forward.1} parent=63 // pred_check
          %p3018 = pneg %p288
        $region94: #{lednet_decoder_forward.1} parent=63 // pred_check_branch
          %3020 = sbr.rel (%p3018) target = $region96
        $region95: #{lednet_decoder_forward.1} parent=63 // pred_region
          %3022 = vsyncadd %s3014, 0
          %s3023 = smul.addr %s29, 128
          %s3024 = smul.addr %s3023, 8
          %s3025 = scalar_lea.hbm %s11, %s3024
          %s3026 = sshll.u32 %s3017, 4
          %s3027 = int_to_ptr.vmem [resolvable:$true] %s3026
          %s3028 = sshll.u32 %s3025, 4
          %s3029 = int_to_ptr.hbm [resolvable:$true] %s3028
          %3034 = dma.vmem_to_hbm [thread:$0]  %s3027, 16384, %s3029, %s3014, 128, 128, 8
        $region96: #{lednet_decoder_forward.1} parent=63 // pred_fallthru
          _
      $region64: #{lednet_decoder_forward.1} parent=5 // pred_fallthru
        _
      %p3035 = scmp.le.s32.totalorder 2, %s24
      // Predicated region
      $region97: #{lednet_decoder_forward.1} parent=5 // pred_check
        %p3036 = pneg %p3035
      $region98: #{lednet_decoder_forward.1} parent=5 // pred_check_branch
        %3038 = sbr.rel (%p3036) target = $region100
      $region99: #{lednet_decoder_forward.1} parent=5 // pred_region
        %s3039 = ssub.s32 %s24, 2
        // Predicated region
        $region101: #{lednet_decoder_forward.1} parent=99 // pred_check
          %p3040 = pneg %p294
        $region102: #{lednet_decoder_forward.1} parent=99 // pred_check_branch
          %3042 = sbr.rel (%p3040) target = $region104
        $region103: #{lednet_decoder_forward.1} parent=99 // pred_region
          %s3043 = sand.u32 %s279, 1
          %s3044 = scalar_lea.sflag [#allocation4], %s3043
          %s3045 = sand.u32 %s279, 1
          %s3046 = smul.addr %s3045, 1024
          %s3047 = scalar_lea.vmem [#allocation14], %s3046
          %3049 = dma.done %s3044, 16384
        $region104: #{lednet_decoder_forward.1} parent=99 // pred_fallthru
          _
      $region100: #{lednet_decoder_forward.1} parent=5 // pred_fallthru
        _
    $region6: #{lednet_decoder_forward.1} parent=1 // loop_footer
      %s28 = sadd.s32 1, %s24
    $region7: #{lednet_decoder_forward.1} parent=1 // loop_footer_branch
      %23 = sbr.rel target = $region3
    $region8: #{lednet_decoder_forward.1} parent=1 // loop_exit
      _
    %3050 = vsyncpa [#allocation3], 1
    %s3051 = scalar_lea.sflag [#allocation3], 1
    %3052 = vsyncpa %s3051, 1
    %3053 = vsyncpa [#allocation6], 1
    %3054 = vsyncpa [#allocation9], 1
    %3055 = vsyncpa [#allocation12], 1
    %3056 = vsyncpa [#allocation4], 1
    %s3057 = scalar_lea.sflag [#allocation4], 1
    %3058 = vsyncpa %s3057, 1

</llo_original>
